<compile_context>
chip_gen: v5e
topology: v5e:2x2
jax: 0.10.0
libtpu: 0.0.40
codegen_flags: <defaults>
</compile_context>

<pallas_src>
import functools
import math

import jax
import jax.numpy as jnp
from jax.experimental import pallas as pl
from jax.experimental.pallas import tpu as pltpu


def _round_up(x, m):
    return ((x + m - 1) // m) * m


# ----------------------------------------------------------------------------
# 3x3 conv kernels (same padding) — 9 shifted matmuls, no HBM im2col
# ----------------------------------------------------------------------------
def _conv3x3_kernel(x_ref, w_ref, b_ref, o_ref, *, H, W, C, OC, relu):
    """x_ref: (1,H+2,W+2,C) bf16; w_ref: (9,C,OC) bf16; b_ref: (1,OC) f32;
    o_ref: (1,H*W,OC) bf16."""
    x = x_ref[0]                                        # (H+2, W+2, C)
    acc = jnp.zeros((H * W, OC), jnp.float32)
    for di in range(3):
        for dj in range(3):
            patch = x[di:di + H, dj:dj + W, :].reshape(H * W, C)
            acc = acc + jnp.dot(patch, w_ref[di * 3 + dj],
                                preferred_element_type=jnp.float32)
    acc = acc + b_ref[...]
    if relu:
        acc = jnp.maximum(acc, 0.0)
    o_ref[0] = acc.astype(o_ref.dtype)


def conv3x3_nhwc(x, w, b, *, relu):
    """3x3 same-pad conv. x: (B,H,W,Cin) -> (B, H*W, Cout) bf16."""
    B, H, W, C = x.shape
    OC = w.shape[-1]
    xp = jnp.pad(x.astype(jnp.bfloat16), ((0, 0), (1, 1), (1, 1), (0, 0)))
    kernel = functools.partial(_conv3x3_kernel, H=H, W=W, C=C, OC=OC, relu=relu)
    return pl.pallas_call(
        kernel,
        out_shape=jax.ShapeDtypeStruct((B, H * W, OC), jnp.bfloat16),
        grid_spec=pltpu.PrefetchScalarGridSpec(
            num_scalar_prefetch=0,
            grid=(B,),
            in_specs=[
                pl.BlockSpec((1, H + 2, W + 2, C), lambda bi: (bi, 0, 0, 0)),
                pl.BlockSpec((9, C, OC), lambda bi: (0, 0, 0)),
                pl.BlockSpec((1, OC), lambda bi: (0, 0)),
            ],
            out_specs=pl.BlockSpec((1, H * W, OC), lambda bi: (bi, 0, 0)),
        ),
        compiler_params=pltpu.CompilerParams(
            dimension_semantics=("parallel",)),
    )(xp, w.astype(jnp.bfloat16), b.reshape(1, OC).astype(jnp.float32))


def _conv3x3_chw_kernel(x_ref, wt_ref, b_ref, o_ref, *, H, W, C, OC):
    """Decoder conv emitting channel-major (lane-dense) output.

    x_ref: (1,H+2,W+2,C) bf16; wt_ref: (9,OC,C) bf16 (taps transposed);
    b_ref: (OC,1) f32; o_ref: (1,OC,H*W) f32.
    """
    x = x_ref[0]
    acc = jnp.zeros((OC, H * W), jnp.float32)
    for di in range(3):
        for dj in range(3):
            patch = x[di:di + H, dj:dj + W, :].reshape(H * W, C)   # (HW, C)
            acc = acc + jax.lax.dot_general(
                wt_ref[di * 3 + dj], patch,
                (((1,), (1,)), ((), ())),                           # (OC,C)x(HW,C)^T
                preferred_element_type=jnp.float32)                 # -> (OC, HW)
    acc = acc + b_ref[...]
    o_ref[0] = acc.astype(o_ref.dtype)


def conv3x3_to_nchw(x, w, b):
    """3x3 same-pad conv. x: (B,H,W,Cin) -> (B, Cout, H*W) f32 (NCHW-flat)."""
    B, H, W, C = x.shape
    OC = w.shape[-1]
    w_t = jnp.swapaxes(w, 1, 2)                        # (9, OC, C)
    xp = jnp.pad(x.astype(jnp.bfloat16), ((0, 0), (1, 1), (1, 1), (0, 0)))
    kernel = functools.partial(_conv3x3_chw_kernel, H=H, W=W, C=C, OC=OC)
    return pl.pallas_call(
        kernel,
        out_shape=jax.ShapeDtypeStruct((B, OC, H * W), jnp.float32),
        grid_spec=pltpu.PrefetchScalarGridSpec(
            num_scalar_prefetch=0,
            grid=(B,),
            in_specs=[
                pl.BlockSpec((1, H + 2, W + 2, C), lambda bi: (bi, 0, 0, 0)),
                pl.BlockSpec((9, OC, C), lambda bi: (0, 0, 0)),
                pl.BlockSpec((OC, 1), lambda bi: (0, 0)),
            ],
            out_specs=pl.BlockSpec((1, OC, H * W), lambda bi: (bi, 0, 0)),
        ),
        compiler_params=pltpu.CompilerParams(
            dimension_semantics=("parallel",)),
    )(xp, w_t.astype(jnp.bfloat16), b.reshape(OC, 1).astype(jnp.float32))


# ----------------------------------------------------------------------------
# Fused style-transfer block: Q/K/V projections + online-softmax cross
# attention + output projection + residual, all in one pallas_call.
# ----------------------------------------------------------------------------
def _transfer_kernel(c_ref, s_ref, wq_ref, bq_ref, wkv_ref, bkv_ref,
                     wo_ref, bo_ref, o_ref,
                     q_scr, m_scr, l_scr, acc_scr,
                     *, hidden, scale, tk, l_valid, needs_mask):
    ki = pl.program_id(2)

    @pl.when(ki == 0)
    def _():
        q = jnp.dot(c_ref[0], wq_ref[...],
                    preferred_element_type=jnp.float32) + bq_ref[...]
        q_scr[...] = (q * scale).astype(jnp.bfloat16)
        m_scr[...] = jnp.full_like(m_scr, -jnp.inf)
        l_scr[...] = jnp.zeros_like(l_scr)
        acc_scr[...] = jnp.zeros_like(acc_scr)

    # Fused K/V projection of the style tile (shared LHS, concatenated weights).
    kv = jnp.dot(s_ref[0], wkv_ref[...],
                 preferred_element_type=jnp.float32) + bkv_ref[...]
    k = kv[:, :hidden].astype(jnp.bfloat16)            # (tk, hidden)
    v = kv[:, hidden:].astype(jnp.bfloat16)            # (tk, hidden)

    # scores = (q * scale) @ k^T  — online softmax over the key axis.
    s = jax.lax.dot_general(q_scr[...], k, (((1,), (1,)), ((), ())),
                            preferred_element_type=jnp.float32)   # (tq, tk)
    if needs_mask:
        col = jax.lax.broadcasted_iota(jnp.int32, s.shape, 1) + ki * tk
        s = jnp.where(col < l_valid, s, -jnp.inf)

    m_prev = m_scr[...]
    m_new = jnp.maximum(m_prev, jnp.max(s, axis=-1, keepdims=True))
    alpha = jnp.exp(m_prev - m_new)
    p = jnp.exp(s - m_new)
    l_scr[...] = alpha * l_scr[...] + jnp.sum(p, axis=-1, keepdims=True)
    acc_scr[...] = alpha * acc_scr[...] + jnp.dot(
        p.astype(jnp.bfloat16), v, preferred_element_type=jnp.float32)
    m_scr[...] = m_new

    @pl.when(ki == pl.num_programs(2) - 1)
    def _():
        attn = acc_scr[...] * pl.reciprocal(l_scr[...], approx=True)
        out = jnp.dot(attn.astype(jnp.bfloat16), wo_ref[...],
                      preferred_element_type=jnp.float32) + bo_ref[...]
        out = out + c_ref[0].astype(jnp.float32)        # residual connection
        o_ref[0] = out.astype(o_ref.dtype)


def transfer_block(c_feat, s_feat, params, *, tq=128, tk=128):
    """c_feat/s_feat: (B, L, hidden) bf16 -> (B, L, hidden) bf16."""
    B, L, hidden = c_feat.shape
    scale = 1.0 / math.sqrt(hidden)

    lq_pad = _round_up(L, tq)
    lk_pad = _round_up(L, tk)
    if lq_pad != L:
        c_feat = jnp.pad(c_feat, ((0, 0), (0, lq_pad - L), (0, 0)))
    if lk_pad != L:
        s_feat = jnp.pad(s_feat, ((0, 0), (0, lk_pad - L), (0, 0)))
    nq, nk = lq_pad // tq, lk_pad // tk
    needs_mask = lk_pad != L

    kernel = functools.partial(_transfer_kernel, hidden=hidden, scale=scale,
                               tk=tk, l_valid=L, needs_mask=needs_mask)
    out = pl.pallas_call(
        kernel,
        out_shape=jax.ShapeDtypeStruct((B, lq_pad, hidden), jnp.bfloat16),
        grid_spec=pltpu.PrefetchScalarGridSpec(
            num_scalar_prefetch=0,
            grid=(B, nq, nk),
            in_specs=[
                pl.BlockSpec((1, tq, hidden), lambda b, qi, ki: (b, qi, 0)),
                pl.BlockSpec((1, tk, hidden), lambda b, qi, ki: (b, ki, 0)),
                pl.BlockSpec((hidden, hidden), lambda b, qi, ki: (0, 0)),
                pl.BlockSpec((1, hidden), lambda b, qi, ki: (0, 0)),
                pl.BlockSpec((hidden, 2 * hidden), lambda b, qi, ki: (0, 0)),
                pl.BlockSpec((1, 2 * hidden), lambda b, qi, ki: (0, 0)),
                pl.BlockSpec((hidden, hidden), lambda b, qi, ki: (0, 0)),
                pl.BlockSpec((1, hidden), lambda b, qi, ki: (0, 0)),
            ],
            out_specs=pl.BlockSpec((1, tq, hidden), lambda b, qi, ki: (b, qi, 0)),
            scratch_shapes=[
                pltpu.VMEM((tq, hidden), jnp.bfloat16),   # pre-scaled q
                pltpu.VMEM((tq, 1), jnp.float32),          # running max
                pltpu.VMEM((tq, 1), jnp.float32),          # running denom
                pltpu.VMEM((tq, hidden), jnp.float32),     # output accumulator
            ],
        ),
        compiler_params=pltpu.CompilerParams(
            dimension_semantics=("parallel", "parallel", "arbitrary")),
    )(
        c_feat.astype(jnp.bfloat16),
        s_feat.astype(jnp.bfloat16),
        params["wq"].astype(jnp.bfloat16),
        params["bq"].reshape(1, hidden).astype(jnp.float32),
        params["wkv"].astype(jnp.bfloat16),
        params["bkv"].reshape(1, 2 * hidden).astype(jnp.float32),
        params["wo"].astype(jnp.bfloat16),
        params["bo"].reshape(1, hidden).astype(jnp.float32),
    )
    if lq_pad != L:
        out = out[:, :L, :]
    return out


# ----------------------------------------------------------------------------
# Parameters and forward pass
# ----------------------------------------------------------------------------
def init_params(key, in_ch=3, hidden=32):
    """Deterministic synthetic parameters (checkpoint loading is untranslatable)."""
    ks = jax.random.split(key, 8)

    def w(k, shape, fan_in):
        return jax.random.normal(k, shape, jnp.float32) / math.sqrt(fan_in)

    return {
        # encoder 3x3 conv: in_ch -> hidden (taps stored as (9, Cin, Cout))
        "enc_w": w(ks[0], (9, in_ch, hidden), 9 * in_ch),
        "enc_b": jnp.zeros((hidden,), jnp.float32),
        # attention projections (wk/wv concatenated)
        "wq": w(ks[1], (hidden, hidden), hidden),
        "bq": jnp.zeros((hidden,), jnp.float32),
        "wkv": w(ks[2], (hidden, 2 * hidden), hidden),
        "bkv": jnp.zeros((2 * hidden,), jnp.float32),
        "wo": w(ks[3], (hidden, hidden), hidden),
        "bo": jnp.zeros((hidden,), jnp.float32),
        # decoder 3x3 conv: hidden -> in_ch
        "dec_w": w(ks[4], (9, hidden, in_ch), 9 * hidden),
        "dec_b": jnp.zeros((in_ch,), jnp.float32),
    }


def video_style_transfer_forward(params, content_frames, style_images,
                                 content_type="image", id_loss="transfer",
                                 tab=None):
    """Forward pass.  content_frames / style_images: NCHW float32."""
    del content_type, id_loss, tab   # control-flow flags only; no compute here
    B, C, H, W = content_frames.shape
    hidden = params["enc_w"].shape[-1]

    # NCHW -> NHWC for the conv encoder
    content = jnp.transpose(content_frames, (0, 2, 3, 1))
    style = jnp.transpose(style_images, (0, 2, 3, 1))

    # --- encoder (shared conv + ReLU), bf16 activations -----------------------
    c_feat = conv3x3_nhwc(content, params["enc_w"], params["enc_b"], relu=True)
    s_feat = conv3x3_nhwc(style, params["enc_w"], params["enc_b"], relu=True)

    # --- fused cross-attention style transfer block ----------------------------
    out_feat = transfer_block(c_feat, s_feat, params)        # (B, H*W, hidden)

    # --- decoder (channel-major lane-dense output == NCHW) ---------------------
    dec_in = out_feat.reshape(B, H, W, hidden)
    result = conv3x3_to_nchw(dec_in, params["dec_w"], params["dec_b"])
    return result.reshape(B, C, H, W)


# ----------------------------------------------------------------------------
# Demo
# ----------------------------------------------------------------------------
if __name__ == "__main__":
    key = jax.random.PRNGKey(0)
    k_param, k_content, k_style = jax.random.split(key, 3)

    B, C, H, W = 2, 3, 16, 16
    hidden = 32

    params = init_params(k_param, in_ch=C, hidden=hidden)
    content_frames = jax.random.uniform(k_content, (B, C, H, W), jnp.float32)
    style_images = jax.random.uniform(k_style, (B, C, H, W), jnp.float32)

    fwd = jax.jit(video_style_transfer_forward)
    out = jax.block_until_ready(fwd(params, content_frames, style_images))

    assert out.shape == (B, C, H, W), out.shape
    assert jnp.all(jnp.isfinite(out))
    print("KERNEL_OK")
</pallas_src>

<mosaic_0001>
module attributes {stable_mosaic.version = 11 : i64} {
  func.func @_conv3x3_kernel(%arg0: i32, %arg1: memref<1x18x18x3xbf16, #tpu.memory_space<vmem>>, %arg2: memref<9x3x32xbf16, #tpu.memory_space<vmem>>, %arg3: memref<1x32xf32, #tpu.memory_space<vmem>>, %arg4: memref<1x256x32xbf16, #tpu.memory_space<vmem>>) attributes {dimension_semantics = [#tpu.dimension_semantics<parallel>], iteration_bounds = array<i64: 2>, scalar_prefetch = 0 : i64, scratch_operands = 0 : i64, tpu.core_type = #tpu.core_type<tc>, window_params = [{transform_indices = @transform_0, window_bounds = array<i64: 1, 18, 18, 3>}, {pipeline_mode = #tpu.pipeline_mode<synchronous>, transform_indices = @transform_1, window_bounds = array<i64: 9, 3, 32>}, {pipeline_mode = #tpu.pipeline_mode<synchronous>, transform_indices = @transform_2, window_bounds = array<i64: 1, 32>}, {transform_indices = @transform_3, window_bounds = array<i64: 1, 256, 32>}]} {
    %c0 = arith.constant 0 : index
    %c0_0 = arith.constant 0 : index
    %c0_1 = arith.constant 0 : index
    %c0_2 = arith.constant 0 : index
    %0 = vector.load %arg1[%c0, %c0_0, %c0_1, %c0_2] : memref<1x18x18x3xbf16, #tpu.memory_space<vmem>>, vector<1x18x18x3xbf16>
    %1 = vector.shape_cast %0 : vector<1x18x18x3xbf16> to vector<18x18x3xbf16>
    %cst = arith.constant 0.000000e+00 : f32
    %2 = vector.broadcast %cst : f32 to vector<256x32xf32>
    %3 = vector.extract_strided_slice %1 {offsets = [0, 0, 0], sizes = [16, 16, 3], strides = [1, 1, 1]} : vector<18x18x3xbf16> to vector<16x16x3xbf16>
    %4 = vector.shape_cast %3 : vector<16x16x3xbf16> to vector<256x3xbf16>
    %c0_3 = arith.constant 0 : index
    %c0_4 = arith.constant 0 : index
    %c0_5 = arith.constant 0 : index
    %5 = vector.load %arg2[%c0_3, %c0_4, %c0_5] : memref<9x3x32xbf16, #tpu.memory_space<vmem>>, vector<1x3x32xbf16>
    %6 = vector.shape_cast %5 : vector<1x3x32xbf16> to vector<3x32xbf16>
    %cst_6 = arith.constant dense<0.000000e+00> : vector<256x32xf32>
    %7 = tpu.matmul %4, %6, %cst_6 {dimension_numbers = #tpu.dot_dimension_numbers<[1], [0], [0], [1], [0, 0, 1, 1], [], []>} : vector<256x3xbf16>, vector<3x32xbf16>, vector<256x32xf32> -> vector<256x32xf32>
    %8 = arith.addf %2, %7 : vector<256x32xf32>
    %9 = vector.extract_strided_slice %1 {offsets = [0, 1, 0], sizes = [16, 16, 3], strides = [1, 1, 1]} : vector<18x18x3xbf16> to vector<16x16x3xbf16>
    %10 = vector.shape_cast %9 : vector<16x16x3xbf16> to vector<256x3xbf16>
    %c1 = arith.constant 1 : index
    %c0_7 = arith.constant 0 : index
    %c0_8 = arith.constant 0 : index
    %11 = vector.load %arg2[%c1, %c0_7, %c0_8] : memref<9x3x32xbf16, #tpu.memory_space<vmem>>, vector<1x3x32xbf16>
    %12 = vector.shape_cast %11 : vector<1x3x32xbf16> to vector<3x32xbf16>
    %cst_9 = arith.constant dense<0.000000e+00> : vector<256x32xf32>
    %13 = tpu.matmul %10, %12, %cst_9 {dimension_numbers = #tpu.dot_dimension_numbers<[1], [0], [0], [1], [0, 0, 1, 1], [], []>} : vector<256x3xbf16>, vector<3x32xbf16>, vector<256x32xf32> -> vector<256x32xf32>
    %14 = arith.addf %8, %13 : vector<256x32xf32>
    %15 = vector.extract_strided_slice %1 {offsets = [0, 2, 0], sizes = [16, 16, 3], strides = [1, 1, 1]} : vector<18x18x3xbf16> to vector<16x16x3xbf16>
    %16 = vector.shape_cast %15 : vector<16x16x3xbf16> to vector<256x3xbf16>
    %c2 = arith.constant 2 : index
    %c0_10 = arith.constant 0 : index
    %c0_11 = arith.constant 0 : index
    %17 = vector.load %arg2[%c2, %c0_10, %c0_11] : memref<9x3x32xbf16, #tpu.memory_space<vmem>>, vector<1x3x32xbf16>
    %18 = vector.shape_cast %17 : vector<1x3x32xbf16> to vector<3x32xbf16>
    %cst_12 = arith.constant dense<0.000000e+00> : vector<256x32xf32>
    %19 = tpu.matmul %16, %18, %cst_12 {dimension_numbers = #tpu.dot_dimension_numbers<[1], [0], [0], [1], [0, 0, 1, 1], [], []>} : vector<256x3xbf16>, vector<3x32xbf16>, vector<256x32xf32> -> vector<256x32xf32>
    %20 = arith.addf %14, %19 : vector<256x32xf32>
    %21 = vector.extract_strided_slice %1 {offsets = [1, 0, 0], sizes = [16, 16, 3], strides = [1, 1, 1]} : vector<18x18x3xbf16> to vector<16x16x3xbf16>
    %22 = vector.shape_cast %21 : vector<16x16x3xbf16> to vector<256x3xbf16>
    %c3 = arith.constant 3 : index
    %c0_13 = arith.constant 0 : index
    %c0_14 = arith.constant 0 : index
    %23 = vector.load %arg2[%c3, %c0_13, %c0_14] : memref<9x3x32xbf16, #tpu.memory_space<vmem>>, vector<1x3x32xbf16>
    %24 = vector.shape_cast %23 : vector<1x3x32xbf16> to vector<3x32xbf16>
    %cst_15 = arith.constant dense<0.000000e+00> : vector<256x32xf32>
    %25 = tpu.matmul %22, %24, %cst_15 {dimension_numbers = #tpu.dot_dimension_numbers<[1], [0], [0], [1], [0, 0, 1, 1], [], []>} : vector<256x3xbf16>, vector<3x32xbf16>, vector<256x32xf32> -> vector<256x32xf32>
    %26 = arith.addf %20, %25 : vector<256x32xf32>
    %27 = vector.extract_strided_slice %1 {offsets = [1, 1, 0], sizes = [16, 16, 3], strides = [1, 1, 1]} : vector<18x18x3xbf16> to vector<16x16x3xbf16>
    %28 = vector.shape_cast %27 : vector<16x16x3xbf16> to vector<256x3xbf16>
    %c4 = arith.constant 4 : index
    %c0_16 = arith.constant 0 : index
    %c0_17 = arith.constant 0 : index
    %29 = vector.load %arg2[%c4, %c0_16, %c0_17] : memref<9x3x32xbf16, #tpu.memory_space<vmem>>, vector<1x3x32xbf16>
    %30 = vector.shape_cast %29 : vector<1x3x32xbf16> to vector<3x32xbf16>
    %cst_18 = arith.constant dense<0.000000e+00> : vector<256x32xf32>
    %31 = tpu.matmul %28, %30, %cst_18 {dimension_numbers = #tpu.dot_dimension_numbers<[1], [0], [0], [1], [0, 0, 1, 1], [], []>} : vector<256x3xbf16>, vector<3x32xbf16>, vector<256x32xf32> -> vector<256x32xf32>
    %32 = arith.addf %26, %31 : vector<256x32xf32>
    %33 = vector.extract_strided_slice %1 {offsets = [1, 2, 0], sizes = [16, 16, 3], strides = [1, 1, 1]} : vector<18x18x3xbf16> to vector<16x16x3xbf16>
    %34 = vector.shape_cast %33 : vector<16x16x3xbf16> to vector<256x3xbf16>
    %c5 = arith.constant 5 : index
    %c0_19 = arith.constant 0 : index
    %c0_20 = arith.constant 0 : index
    %35 = vector.load %arg2[%c5, %c0_19, %c0_20] : memref<9x3x32xbf16, #tpu.memory_space<vmem>>, vector<1x3x32xbf16>
    %36 = vector.shape_cast %35 : vector<1x3x32xbf16> to vector<3x32xbf16>
    %cst_21 = arith.constant dense<0.000000e+00> : vector<256x32xf32>
    %37 = tpu.matmul %34, %36, %cst_21 {dimension_numbers = #tpu.dot_dimension_numbers<[1], [0], [0], [1], [0, 0, 1, 1], [], []>} : vector<256x3xbf16>, vector<3x32xbf16>, vector<256x32xf32> -> vector<256x32xf32>
    %38 = arith.addf %32, %37 : vector<256x32xf32>
    %39 = vector.extract_strided_slice %1 {offsets = [2, 0, 0], sizes = [16, 16, 3], strides = [1, 1, 1]} : vector<18x18x3xbf16> to vector<16x16x3xbf16>
    %40 = vector.shape_cast %39 : vector<16x16x3xbf16> to vector<256x3xbf16>
    %c6 = arith.constant 6 : index
    %c0_22 = arith.constant 0 : index
    %c0_23 = arith.constant 0 : index
    %41 = vector.load %arg2[%c6, %c0_22, %c0_23] : memref<9x3x32xbf16, #tpu.memory_space<vmem>>, vector<1x3x32xbf16>
    %42 = vector.shape_cast %41 : vector<1x3x32xbf16> to vector<3x32xbf16>
    %cst_24 = arith.constant dense<0.000000e+00> : vector<256x32xf32>
    %43 = tpu.matmul %40, %42, %cst_24 {dimension_numbers = #tpu.dot_dimension_numbers<[1], [0], [0], [1], [0, 0, 1, 1], [], []>} : vector<256x3xbf16>, vector<3x32xbf16>, vector<256x32xf32> -> vector<256x32xf32>
    %44 = arith.addf %38, %43 : vector<256x32xf32>
    %45 = vector.extract_strided_slice %1 {offsets = [2, 1, 0], sizes = [16, 16, 3], strides = [1, 1, 1]} : vector<18x18x3xbf16> to vector<16x16x3xbf16>
    %46 = vector.shape_cast %45 : vector<16x16x3xbf16> to vector<256x3xbf16>
    %c7 = arith.constant 7 : index
    %c0_25 = arith.constant 0 : index
    %c0_26 = arith.constant 0 : index
    %47 = vector.load %arg2[%c7, %c0_25, %c0_26] : memref<9x3x32xbf16, #tpu.memory_space<vmem>>, vector<1x3x32xbf16>
    %48 = vector.shape_cast %47 : vector<1x3x32xbf16> to vector<3x32xbf16>
    %cst_27 = arith.constant dense<0.000000e+00> : vector<256x32xf32>
    %49 = tpu.matmul %46, %48, %cst_27 {dimension_numbers = #tpu.dot_dimension_numbers<[1], [0], [0], [1], [0, 0, 1, 1], [], []>} : vector<256x3xbf16>, vector<3x32xbf16>, vector<256x32xf32> -> vector<256x32xf32>
    %50 = arith.addf %44, %49 : vector<256x32xf32>
    %51 = vector.extract_strided_slice %1 {offsets = [2, 2, 0], sizes = [16, 16, 3], strides = [1, 1, 1]} : vector<18x18x3xbf16> to vector<16x16x3xbf16>
    %52 = vector.shape_cast %51 : vector<16x16x3xbf16> to vector<256x3xbf16>
    %c8 = arith.constant 8 : index
    %c0_28 = arith.constant 0 : index
    %c0_29 = arith.constant 0 : index
    %53 = vector.load %arg2[%c8, %c0_28, %c0_29] : memref<9x3x32xbf16, #tpu.memory_space<vmem>>, vector<1x3x32xbf16>
    %54 = vector.shape_cast %53 : vector<1x3x32xbf16> to vector<3x32xbf16>
    %cst_30 = arith.constant dense<0.000000e+00> : vector<256x32xf32>
    %55 = tpu.matmul %52, %54, %cst_30 {dimension_numbers = #tpu.dot_dimension_numbers<[1], [0], [0], [1], [0, 0, 1, 1], [], []>} : vector<256x3xbf16>, vector<3x32xbf16>, vector<256x32xf32> -> vector<256x32xf32>
    %56 = arith.addf %50, %55 : vector<256x32xf32>
    %c0_31 = arith.constant 0 : index
    %c0_32 = arith.constant 0 : index
    %57 = vector.load %arg3[%c0_31, %c0_32] : memref<1x32xf32, #tpu.memory_space<vmem>>, vector<1x32xf32>
    %58 = vector.broadcast %57 : vector<1x32xf32> to vector<256x32xf32>
    %59 = arith.addf %56, %58 : vector<256x32xf32>
    %cst_33 = arith.constant 0.000000e+00 : f32
    %60 = vector.broadcast %cst_33 : f32 to vector<256x32xf32>
    %61 = arith.maximumf %59, %60 : vector<256x32xf32>
    %62 = arith.truncf %61 : vector<256x32xf32> to vector<256x32xbf16>
    %c0_34 = arith.constant 0 : index
    %c0_35 = arith.constant 0 : index
    %c0_36 = arith.constant 0 : index
    %63 = vector.load %arg4[%c0_34, %c0_35, %c0_36] : memref<1x256x32xbf16, #tpu.memory_space<vmem>>, vector<1x256x32xbf16>
    %64 = vector.shape_cast %63 : vector<1x256x32xbf16> to vector<256x32xbf16>
    %65 = vector.shape_cast %62 : vector<256x32xbf16> to vector<1x256x32xbf16>
    tpu.vector_store %arg4[%c0_34, %c0_35, %c0_36], %65 {strides = array<i32>} : memref<1x256x32xbf16, #tpu.memory_space<vmem>>, vector<1x256x32xbf16>,
    return
  }
  func.func @transform_0(%arg0: i32) -> (i32, i32, i32, i32) {
    %c0_i32 = arith.constant 0 : i32
    %c0_i32_0 = arith.constant 0 : i32
    %c0_i32_1 = arith.constant 0 : i32
    %c0_i32_2 = arith.constant 0 : i32
    return %arg0, %c0_i32, %c0_i32_0, %c0_i32_1 : i32, i32, i32, i32
  }
  func.func @transform_1(%arg0: i32) -> (i32, i32, i32) {
    %c0_i32 = arith.constant 0 : i32
    %c0_i32_0 = arith.constant 0 : i32
    %c0_i32_1 = arith.constant 0 : i32
    %c0_i32_2 = arith.constant 0 : i32
    return %c0_i32, %c0_i32_0, %c0_i32_1 : i32, i32, i32
  }
  func.func @transform_2(%arg0: i32) -> (i32, i32) {
    %c0_i32 = arith.constant 0 : i32
    %c0_i32_0 = arith.constant 0 : i32
    %c0_i32_1 = arith.constant 0 : i32
    return %c0_i32, %c0_i32_0 : i32, i32
  }
  func.func @transform_3(%arg0: i32) -> (i32, i32, i32) {
    %c0_i32 = arith.constant 0 : i32
    %c0_i32_0 = arith.constant 0 : i32
    %c0_i32_1 = arith.constant 0 : i32
    return %arg0, %c0_i32, %c0_i32_0 : i32, i32, i32
  }
}

module attributes {stable_mosaic.version = 11 : i64} {
  func.func @_transfer_kernel(%arg0: i32, %arg1: i32, %arg2: i32, %arg3: memref<1x128x32xbf16, #tpu.memory_space<vmem>>, %arg4: memref<1x128x32xbf16, #tpu.memory_space<vmem>>, %arg5: memref<32x32xbf16, #tpu.memory_space<vmem>>, %arg6: memref<1x32xf32, #tpu.memory_space<vmem>>, %arg7: memref<32x64xbf16, #tpu.memory_space<vmem>>, %arg8: memref<1x64xf32, #tpu.memory_space<vmem>>, %arg9: memref<32x32xbf16, #tpu.memory_space<vmem>>, %arg10: memref<1x32xf32, #tpu.memory_space<vmem>>, %arg11: memref<1x128x32xbf16, #tpu.memory_space<vmem>>, %arg12: memref<128x32xbf16, #tpu.memory_space<vmem>>, %arg13: memref<128x1xf32, #tpu.memory_space<vmem>>, %arg14: memref<128x1xf32, #tpu.memory_space<vmem>>, %arg15: memref<128x32xf32, #tpu.memory_space<vmem>>) attributes {dimension_semantics = [#tpu.dimension_semantics<parallel>, #tpu.dimension_semantics<parallel>, #tpu.dimension_semantics<arbitrary>], iteration_bounds = array<i64: 2, 2, 2>, scalar_prefetch = 0 : i64, scratch_operands = 4 : i64, tpu.core_type = #tpu.core_type<tc>, window_params = [{transform_indices = @transform_0, window_bounds = array<i64: 1, 128, 32>}, {transform_indices = @transform_1, window_bounds = array<i64: 1, 128, 32>}, {pipeline_mode = #tpu.pipeline_mode<synchronous>, transform_indices = @transform_2, window_bounds = array<i64: 32, 32>}, {pipeline_mode = #tpu.pipeline_mode<synchronous>, transform_indices = @transform_3, window_bounds = array<i64: 1, 32>}, {pipeline_mode = #tpu.pipeline_mode<synchronous>, transform_indices = @transform_4, window_bounds = array<i64: 32, 64>}, {pipeline_mode = #tpu.pipeline_mode<synchronous>, transform_indices = @transform_5, window_bounds = array<i64: 1, 64>}, {pipeline_mode = #tpu.pipeline_mode<synchronous>, transform_indices = @transform_6, window_bounds = array<i64: 32, 32>}, {pipeline_mode = #tpu.pipeline_mode<synchronous>, transform_indices = @transform_7, window_bounds = array<i64: 1, 32>}, {transform_indices = @transform_8, window_bounds = array<i64: 1, 128, 32>}]} {
    %c0_i32 = arith.constant 0 : i32
    %0 = arith.cmpi eq, %arg2, %c0_i32 : i32
    %1 = arith.extui %0 : i1 to i32
    %c0_i32_0 = arith.constant 0 : i32
    %2 = arith.cmpi ne, %1, %c0_i32_0 : i32
    scf.if %2 {
      %c0_26 = arith.constant 0 : index
      %c0_27 = arith.constant 0 : index
      %c0_28 = arith.constant 0 : index
      %42 = vector.load %arg3[%c0_26, %c0_27, %c0_28] : memref<1x128x32xbf16, #tpu.memory_space<vmem>>, vector<1x128x32xbf16>
      %43 = vector.shape_cast %42 : vector<1x128x32xbf16> to vector<128x32xbf16>
      %c0_29 = arith.constant 0 : index
      %c0_30 = arith.constant 0 : index
      %44 = vector.load %arg5[%c0_29, %c0_30] : memref<32x32xbf16, #tpu.memory_space<vmem>>, vector<32x32xbf16>
      %cst_31 = arith.constant dense<0.000000e+00> : vector<128x32xf32>
      %45 = tpu.matmul %43, %44, %cst_31 {dimension_numbers = #tpu.dot_dimension_numbers<[1], [0], [0], [1], [0, 0, 1, 1], [], []>} : vector<128x32xbf16>, vector<32x32xbf16>, vector<128x32xf32> -> vector<128x32xf32>
      %c0_32 = arith.constant 0 : index
      %c0_33 = arith.constant 0 : index
      %46 = vector.load %arg6[%c0_32, %c0_33] : memref<1x32xf32, #tpu.memory_space<vmem>>, vector<1x32xf32>
      %47 = vector.broadcast %46 : vector<1x32xf32> to vector<128x32xf32>
      %48 = arith.addf %45, %47 : vector<128x32xf32>
      %cst_34 = arith.constant 0.176776692 : f32
      %49 = vector.broadcast %cst_34 : f32 to vector<128x32xf32>
      %50 = arith.mulf %48, %49 : vector<128x32xf32>
      %51 = arith.truncf %50 : vector<128x32xf32> to vector<128x32xbf16>
      %c0_35 = arith.constant 0 : index
      %c0_36 = arith.constant 0 : index
      %52 = vector.load %arg12[%c0_35, %c0_36] : memref<128x32xbf16, #tpu.memory_space<vmem>>, vector<128x32xbf16>
      tpu.vector_store %arg12[%c0_35, %c0_36], %51 {strides = array<i32>} : memref<128x32xbf16, #tpu.memory_space<vmem>>, vector<128x32xbf16>,
      %cst_37 = arith.constant 0xFF800000 : f32
      %53 = vector.broadcast %cst_37 : f32 to vector<128x1xf32>
      %c0_38 = arith.constant 0 : index
      %c0_39 = arith.constant 0 : index
      %54 = vector.load %arg13[%c0_38, %c0_39] : memref<128x1xf32, #tpu.memory_space<vmem>>, vector<128x1xf32>
      tpu.vector_store %arg13[%c0_38, %c0_39], %53 {strides = array<i32>} : memref<128x1xf32, #tpu.memory_space<vmem>>, vector<128x1xf32>,
      %cst_40 = arith.constant 0.000000e+00 : f32
      %55 = vector.broadcast %cst_40 : f32 to vector<128x1xf32>
      %c0_41 = arith.constant 0 : index
      %c0_42 = arith.constant 0 : index
      %56 = vector.load %arg14[%c0_41, %c0_42] : memref<128x1xf32, #tpu.memory_space<vmem>>, vector<128x1xf32>
      tpu.vector_store %arg14[%c0_41, %c0_42], %55 {strides = array<i32>} : memref<128x1xf32, #tpu.memory_space<vmem>>, vector<128x1xf32>,
      %cst_43 = arith.constant 0.000000e+00 : f32
      %57 = vector.broadcast %cst_43 : f32 to vector<128x32xf32>
      %c0_44 = arith.constant 0 : index
      %c0_45 = arith.constant 0 : index
      %58 = vector.load %arg15[%c0_44, %c0_45] : memref<128x32xf32, #tpu.memory_space<vmem>>, vector<128x32xf32>
      tpu.vector_store %arg15[%c0_44, %c0_45], %57 {strides = array<i32>} : memref<128x32xf32, #tpu.memory_space<vmem>>, vector<128x32xf32>,
    } else {
    }
    %c0 = arith.constant 0 : index
    %c0_1 = arith.constant 0 : index
    %c0_2 = arith.constant 0 : index
    %3 = vector.load %arg4[%c0, %c0_1, %c0_2] : memref<1x128x32xbf16, #tpu.memory_space<vmem>>, vector<1x128x32xbf16>
    %4 = vector.shape_cast %3 : vector<1x128x32xbf16> to vector<128x32xbf16>
    %c0_3 = arith.constant 0 : index
    %c0_4 = arith.constant 0 : index
    %5 = vector.load %arg7[%c0_3, %c0_4] : memref<32x64xbf16, #tpu.memory_space<vmem>>, vector<32x64xbf16>
    %cst = arith.constant dense<0.000000e+00> : vector<128x64xf32>
    %6 = tpu.matmul %4, %5, %cst {dimension_numbers = #tpu.dot_dimension_numbers<[1], [0], [0], [1], [0, 0, 1, 1], [], []>} : vector<128x32xbf16>, vector<32x64xbf16>, vector<128x64xf32> -> vector<128x64xf32>
    %c0_5 = arith.constant 0 : index
    %c0_6 = arith.constant 0 : index
    %7 = vector.load %arg8[%c0_5, %c0_6] : memref<1x64xf32, #tpu.memory_space<vmem>>, vector<1x64xf32>
    %8 = vector.broadcast %7 : vector<1x64xf32> to vector<128x64xf32>
    %9 = arith.addf %6, %8 : vector<128x64xf32>
    %10 = vector.extract_strided_slice %9 {offsets = [0, 0], sizes = [128, 32], strides = [1, 1]} : vector<128x64xf32> to vector<128x32xf32>
    %11 = arith.truncf %10 : vector<128x32xf32> to vector<128x32xbf16>
    %12 = vector.extract_strided_slice %9 {offsets = [0, 32], sizes = [128, 32], strides = [1, 1]} : vector<128x64xf32> to vector<128x32xf32>
    %13 = arith.truncf %12 : vector<128x32xf32> to vector<128x32xbf16>
    %c0_7 = arith.constant 0 : index
    %c0_8 = arith.constant 0 : index
    %14 = vector.load %arg12[%c0_7, %c0_8] : memref<128x32xbf16, #tpu.memory_space<vmem>>, vector<128x32xbf16>
    %cst_9 = arith.constant dense<0.000000e+00> : vector<128x128xf32>
    %15 = tpu.matmul %14, %11, %cst_9 {dimension_numbers = #tpu.dot_dimension_numbers<[1], [1], [0], [0], [0, 0, 1, 0], [], []>} : vector<128x32xbf16>, vector<128x32xbf16>, vector<128x128xf32> -> vector<128x128xf32>
    %c0_10 = arith.constant 0 : index
    %c0_11 = arith.constant 0 : index
    %16 = vector.load %arg13[%c0_10, %c0_11] : memref<128x1xf32, #tpu.memory_space<vmem>>, vector<128x1xf32>
    %cst_12 = arith.constant dense<0xFF800000> : vector<128xf32>
    %17 = vector.multi_reduction <maximumf>, %15, %cst_12 [1] : vector<128x128xf32> to vector<128xf32>
    %18 = vector.shape_cast %17 : vector<128xf32> to vector<128x1xf32>
    %19 = arith.maximumf %16, %18 : vector<128x1xf32>
    %20 = arith.subf %16, %19 : vector<128x1xf32>
    %21 = math.exp %20 : vector<128x1xf32>
    %22 = vector.broadcast %19 : vector<128x1xf32> to vector<128x128xf32>
    %23 = arith.subf %15, %22 : vector<128x128xf32>
    %24 = math.exp %23 : vector<128x128xf32>
    %c0_13 = arith.constant 0 : index
    %c0_14 = arith.constant 0 : index
    %25 = vector.load %arg14[%c0_13, %c0_14] : memref<128x1xf32, #tpu.memory_space<vmem>>, vector<128x1xf32>
    %26 = arith.mulf %21, %25 : vector<128x1xf32>
    %cst_15 = arith.constant dense<0.000000e+00> : vector<128xf32>
    %27 = vector.multi_reduction <add>, %24, %cst_15 [1] : vector<128x128xf32> to vector<128xf32>
    %28 = vector.shape_cast %27 : vector<128xf32> to vector<128x1xf32>
    %29 = arith.addf %26, %28 : vector<128x1xf32>
    %c0_16 = arith.constant 0 : index
    %c0_17 = arith.constant 0 : index
    %30 = vector.load %arg14[%c0_16, %c0_17] : memref<128x1xf32, #tpu.memory_space<vmem>>, vector<128x1xf32>
    tpu.vector_store %arg14[%c0_16, %c0_17], %29 {strides = array<i32>} : memref<128x1xf32, #tpu.memory_space<vmem>>, vector<128x1xf32>,
    %c0_18 = arith.constant 0 : index
    %c0_19 = arith.constant 0 : index
    %31 = vector.load %arg15[%c0_18, %c0_19] : memref<128x32xf32, #tpu.memory_space<vmem>>, vector<128x32xf32>
    %32 = vector.broadcast %21 : vector<128x1xf32> to vector<128x32xf32>
    %33 = arith.mulf %32, %31 : vector<128x32xf32>
    %34 = arith.truncf %24 : vector<128x128xf32> to vector<128x128xbf16>
    %cst_20 = arith.constant dense<0.000000e+00> : vector<128x32xf32>
    %35 = tpu.matmul %34, %13, %cst_20 {dimension_numbers = #tpu.dot_dimension_numbers<[1], [0], [0], [1], [0, 0, 1, 1], [], []>} : vector<128x128xbf16>, vector<128x32xbf16>, vector<128x32xf32> -> vector<128x32xf32>
    %36 = arith.addf %33, %35 : vector<128x32xf32>
    %c0_21 = arith.constant 0 : index
    %c0_22 = arith.constant 0 : index
    %37 = vector.load %arg15[%c0_21, %c0_22] : memref<128x32xf32, #tpu.memory_space<vmem>>, vector<128x32xf32>
    tpu.vector_store %arg15[%c0_21, %c0_22], %36 {strides = array<i32>} : memref<128x32xf32, #tpu.memory_space<vmem>>, vector<128x32xf32>,
    %c0_23 = arith.constant 0 : index
    %c0_24 = arith.constant 0 : index
    %38 = vector.load %arg13[%c0_23, %c0_24] : memref<128x1xf32, #tpu.memory_space<vmem>>, vector<128x1xf32>
    tpu.vector_store %arg13[%c0_23, %c0_24], %19 {strides = array<i32>} : memref<128x1xf32, #tpu.memory_space<vmem>>, vector<128x1xf32>,
    %c1_i32 = arith.constant 1 : i32
    %39 = arith.cmpi eq, %arg2, %c1_i32 : i32
    %40 = arith.extui %39 : i1 to i32
    %c0_i32_25 = arith.constant 0 : i32
    %41 = arith.cmpi ne, %40, %c0_i32_25 : i32
    scf.if %41 {
      %c0_26 = arith.constant 0 : index
      %c0_27 = arith.constant 0 : index
      %42 = vector.load %arg15[%c0_26, %c0_27] : memref<128x32xf32, #tpu.memory_space<vmem>>, vector<128x32xf32>
      %c0_28 = arith.constant 0 : index
      %c0_29 = arith.constant 0 : index
      %43 = vector.load %arg14[%c0_28, %c0_29] : memref<128x1xf32, #tpu.memory_space<vmem>>, vector<128x1xf32>
      %44 = tpu.reciprocal %43 {approx = true} : vector<128x1xf32> -> vector<128x1xf32>
      %45 = vector.broadcast %44 : vector<128x1xf32> to vector<128x32xf32>
      %46 = arith.mulf %42, %45 : vector<128x32xf32>
      %47 = arith.truncf %46 : vector<128x32xf32> to vector<128x32xbf16>
      %c0_30 = arith.constant 0 : index
      %c0_31 = arith.constant 0 : index
      %48 = vector.load %arg9[%c0_30, %c0_31] : memref<32x32xbf16, #tpu.memory_space<vmem>>, vector<32x32xbf16>
      %cst_32 = arith.constant dense<0.000000e+00> : vector<128x32xf32>
      %49 = tpu.matmul %47, %48, %cst_32 {dimension_numbers = #tpu.dot_dimension_numbers<[1], [0], [0], [1], [0, 0, 1, 1], [], []>} : vector<128x32xbf16>, vector<32x32xbf16>, vector<128x32xf32> -> vector<128x32xf32>
      %c0_33 = arith.constant 0 : index
      %c0_34 = arith.constant 0 : index
      %50 = vector.load %arg10[%c0_33, %c0_34] : memref<1x32xf32, #tpu.memory_space<vmem>>, vector<1x32xf32>
      %51 = vector.broadcast %50 : vector<1x32xf32> to vector<128x32xf32>
      %52 = arith.addf %49, %51 : vector<128x32xf32>
      %c0_35 = arith.constant 0 : index
      %c0_36 = arith.constant 0 : index
      %c0_37 = arith.constant 0 : index
      %53 = vector.load %arg3[%c0_35, %c0_36, %c0_37] : memref<1x128x32xbf16, #tpu.memory_space<vmem>>, vector<1x128x32xbf16>
      %54 = vector.shape_cast %53 : vector<1x128x32xbf16> to vector<128x32xbf16>
      %55 = arith.extf %54 : vector<128x32xbf16> to vector<128x32xf32>
      %56 = arith.addf %52, %55 : vector<128x32xf32>
      %57 = arith.truncf %56 : vector<128x32xf32> to vector<128x32xbf16>
      %c0_38 = arith.constant 0 : index
      %c0_39 = arith.constant 0 : index
      %c0_40 = arith.constant 0 : index
      %58 = vector.load %arg11[%c0_38, %c0_39, %c0_40] : memref<1x128x32xbf16, #tpu.memory_space<vmem>>, vector<1x128x32xbf16>
      %59 = vector.shape_cast %58 : vector<1x128x32xbf16> to vector<128x32xbf16>
      %60 = vector.shape_cast %57 : vector<128x32xbf16> to vector<1x128x32xbf16>
      tpu.vector_store %arg11[%c0_38, %c0_39, %c0_40], %60 {strides = array<i32>} : memref<1x128x32xbf16, #tpu.memory_space<vmem>>, vector<1x128x32xbf16>,
    } else {
    }
    return
  }
  func.func @transform_0(%arg0: i32, %arg1: i32, %arg2: i32) -> (i32, i32, i32) {
    %c0_i32 = arith.constant 0 : i32
    %c0_i32_0 = arith.constant 0 : i32
    return %arg0, %arg1, %c0_i32 : i32, i32, i32
  }
  func.func @transform_1(%arg0: i32, %arg1: i32, %arg2: i32) -> (i32, i32, i32) {
    %c0_i32 = arith.constant 0 : i32
    %c0_i32_0 = arith.constant 0 : i32
    return %arg0, %arg2, %c0_i32 : i32, i32, i32
  }
  func.func @transform_2(%arg0: i32, %arg1: i32, %arg2: i32) -> (i32, i32) {
    %c0_i32 = arith.constant 0 : i32
    %c0_i32_0 = arith.constant 0 : i32
    %c0_i32_1 = arith.constant 0 : i32
    return %c0_i32, %c0_i32_0 : i32, i32
  }
  func.func @transform_3(%arg0: i32, %arg1: i32, %arg2: i32) -> (i32, i32) {
    %c0_i32 = arith.constant 0 : i32
    %c0_i32_0 = arith.constant 0 : i32
    %c0_i32_1 = arith.constant 0 : i32
    return %c0_i32, %c0_i32_0 : i32, i32
  }
  func.func @transform_4(%arg0: i32, %arg1: i32, %arg2: i32) -> (i32, i32) {
    %c0_i32 = arith.constant 0 : i32
    %c0_i32_0 = arith.constant 0 : i32
    %c0_i32_1 = arith.constant 0 : i32
    return %c0_i32, %c0_i32_0 : i32, i32
  }
  func.func @transform_5(%arg0: i32, %arg1: i32, %arg2: i32) -> (i32, i32) {
    %c0_i32 = arith.constant 0 : i32
    %c0_i32_0 = arith.constant 0 : i32
    %c0_i32_1 = arith.constant 0 : i32
    return %c0_i32, %c0_i32_0 : i32, i32
  }
  func.func @transform_6(%arg0: i32, %arg1: i32, %arg2: i32) -> (i32, i32) {
    %c0_i32 = arith.constant 0 : i32
    %c0_i32_0 = arith.constant 0 : i32
    %c0_i32_1 = arith.constant 0 : i32
    return %c0_i32, %c0_i32_0 : i32, i32
  }
  func.func @transform_7(%arg0: i32, %arg1: i32, %arg2: i32) -> (i32, i32) {
    %c0_i32 = arith.constant 0 : i32
    %c0_i32_0 = arith.constant 0 : i32
    %c0_i32_1 = arith.constant 0 : i32
    return %c0_i32, %c0_i32_0 : i32, i32
  }
  func.func @transform_8(%arg0: i32, %arg1: i32, %arg2: i32) -> (i32, i32, i32) {
    %c0_i32 = arith.constant 0 : i32
    %c0_i32_0 = arith.constant 0 : i32
    return %arg0, %arg1, %c0_i32 : i32, i32, i32
  }
}

module attributes {stable_mosaic.version = 11 : i64} {
  func.func @_conv3x3_chw_kernel(%arg0: i32, %arg1: memref<1x18x18x32xbf16, #tpu.memory_space<vmem>>, %arg2: memref<9x3x32xbf16, #tpu.memory_space<vmem>>, %arg3: memref<3x1xf32, #tpu.memory_space<vmem>>, %arg4: memref<1x3x256xf32, #tpu.memory_space<vmem>>) attributes {dimension_semantics = [#tpu.dimension_semantics<parallel>], iteration_bounds = array<i64: 2>, scalar_prefetch = 0 : i64, scratch_operands = 0 : i64, tpu.core_type = #tpu.core_type<tc>, window_params = [{transform_indices = @transform_0, window_bounds = array<i64: 1, 18, 18, 32>}, {pipeline_mode = #tpu.pipeline_mode<synchronous>, transform_indices = @transform_1, window_bounds = array<i64: 9, 3, 32>}, {pipeline_mode = #tpu.pipeline_mode<synchronous>, transform_indices = @transform_2, window_bounds = array<i64: 3, 1>}, {transform_indices = @transform_3, window_bounds = array<i64: 1, 3, 256>}]} {
    %c0 = arith.constant 0 : index
    %c0_0 = arith.constant 0 : index
    %c0_1 = arith.constant 0 : index
    %c0_2 = arith.constant 0 : index
    %0 = vector.load %arg1[%c0, %c0_0, %c0_1, %c0_2] : memref<1x18x18x32xbf16, #tpu.memory_space<vmem>>, vector<1x18x18x32xbf16>
    %1 = vector.shape_cast %0 : vector<1x18x18x32xbf16> to vector<18x18x32xbf16>
    %cst = arith.constant 0.000000e+00 : f32
    %2 = vector.broadcast %cst : f32 to vector<3x256xf32>
    %3 = vector.extract_strided_slice %1 {offsets = [0, 0, 0], sizes = [16, 16, 32], strides = [1, 1, 1]} : vector<18x18x32xbf16> to vector<16x16x32xbf16>
    %4 = vector.shape_cast %3 : vector<16x16x32xbf16> to vector<256x32xbf16>
    %c0_3 = arith.constant 0 : index
    %c0_4 = arith.constant 0 : index
    %c0_5 = arith.constant 0 : index
    %5 = vector.load %arg2[%c0_3, %c0_4, %c0_5] : memref<9x3x32xbf16, #tpu.memory_space<vmem>>, vector<1x3x32xbf16>
    %6 = vector.shape_cast %5 : vector<1x3x32xbf16> to vector<3x32xbf16>
    %cst_6 = arith.constant dense<0.000000e+00> : vector<3x256xf32>
    %7 = tpu.matmul %6, %4, %cst_6 {dimension_numbers = #tpu.dot_dimension_numbers<[1], [1], [0], [0], [0, 0, 1, 0], [], []>} : vector<3x32xbf16>, vector<256x32xbf16>, vector<3x256xf32> -> vector<3x256xf32>
    %8 = arith.addf %2, %7 : vector<3x256xf32>
    %9 = vector.extract_strided_slice %1 {offsets = [0, 1, 0], sizes = [16, 16, 32], strides = [1, 1, 1]} : vector<18x18x32xbf16> to vector<16x16x32xbf16>
    %10 = vector.shape_cast %9 : vector<16x16x32xbf16> to vector<256x32xbf16>
    %c1 = arith.constant 1 : index
    %c0_7 = arith.constant 0 : index
    %c0_8 = arith.constant 0 : index
    %11 = vector.load %arg2[%c1, %c0_7, %c0_8] : memref<9x3x32xbf16, #tpu.memory_space<vmem>>, vector<1x3x32xbf16>
    %12 = vector.shape_cast %11 : vector<1x3x32xbf16> to vector<3x32xbf16>
    %cst_9 = arith.constant dense<0.000000e+00> : vector<3x256xf32>
    %13 = tpu.matmul %12, %10, %cst_9 {dimension_numbers = #tpu.dot_dimension_numbers<[1], [1], [0], [0], [0, 0, 1, 0], [], []>} : vector<3x32xbf16>, vector<256x32xbf16>, vector<3x256xf32> -> vector<3x256xf32>
    %14 = arith.addf %8, %13 : vector<3x256xf32>
    %15 = vector.extract_strided_slice %1 {offsets = [0, 2, 0], sizes = [16, 16, 32], strides = [1, 1, 1]} : vector<18x18x32xbf16> to vector<16x16x32xbf16>
    %16 = vector.shape_cast %15 : vector<16x16x32xbf16> to vector<256x32xbf16>
    %c2 = arith.constant 2 : index
    %c0_10 = arith.constant 0 : index
    %c0_11 = arith.constant 0 : index
    %17 = vector.load %arg2[%c2, %c0_10, %c0_11] : memref<9x3x32xbf16, #tpu.memory_space<vmem>>, vector<1x3x32xbf16>
    %18 = vector.shape_cast %17 : vector<1x3x32xbf16> to vector<3x32xbf16>
    %cst_12 = arith.constant dense<0.000000e+00> : vector<3x256xf32>
    %19 = tpu.matmul %18, %16, %cst_12 {dimension_numbers = #tpu.dot_dimension_numbers<[1], [1], [0], [0], [0, 0, 1, 0], [], []>} : vector<3x32xbf16>, vector<256x32xbf16>, vector<3x256xf32> -> vector<3x256xf32>
    %20 = arith.addf %14, %19 : vector<3x256xf32>
    %21 = vector.extract_strided_slice %1 {offsets = [1, 0, 0], sizes = [16, 16, 32], strides = [1, 1, 1]} : vector<18x18x32xbf16> to vector<16x16x32xbf16>
    %22 = vector.shape_cast %21 : vector<16x16x32xbf16> to vector<256x32xbf16>
    %c3 = arith.constant 3 : index
    %c0_13 = arith.constant 0 : index
    %c0_14 = arith.constant 0 : index
    %23 = vector.load %arg2[%c3, %c0_13, %c0_14] : memref<9x3x32xbf16, #tpu.memory_space<vmem>>, vector<1x3x32xbf16>
    %24 = vector.shape_cast %23 : vector<1x3x32xbf16> to vector<3x32xbf16>
    %cst_15 = arith.constant dense<0.000000e+00> : vector<3x256xf32>
    %25 = tpu.matmul %24, %22, %cst_15 {dimension_numbers = #tpu.dot_dimension_numbers<[1], [1], [0], [0], [0, 0, 1, 0], [], []>} : vector<3x32xbf16>, vector<256x32xbf16>, vector<3x256xf32> -> vector<3x256xf32>
    %26 = arith.addf %20, %25 : vector<3x256xf32>
    %27 = vector.extract_strided_slice %1 {offsets = [1, 1, 0], sizes = [16, 16, 32], strides = [1, 1, 1]} : vector<18x18x32xbf16> to vector<16x16x32xbf16>
    %28 = vector.shape_cast %27 : vector<16x16x32xbf16> to vector<256x32xbf16>
    %c4 = arith.constant 4 : index
    %c0_16 = arith.constant 0 : index
    %c0_17 = arith.constant 0 : index
    %29 = vector.load %arg2[%c4, %c0_16, %c0_17] : memref<9x3x32xbf16, #tpu.memory_space<vmem>>, vector<1x3x32xbf16>
    %30 = vector.shape_cast %29 : vector<1x3x32xbf16> to vector<3x32xbf16>
    %cst_18 = arith.constant dense<0.000000e+00> : vector<3x256xf32>
    %31 = tpu.matmul %30, %28, %cst_18 {dimension_numbers = #tpu.dot_dimension_numbers<[1], [1], [0], [0], [0, 0, 1, 0], [], []>} : vector<3x32xbf16>, vector<256x32xbf16>, vector<3x256xf32> -> vector<3x256xf32>
    %32 = arith.addf %26, %31 : vector<3x256xf32>
    %33 = vector.extract_strided_slice %1 {offsets = [1, 2, 0], sizes = [16, 16, 32], strides = [1, 1, 1]} : vector<18x18x32xbf16> to vector<16x16x32xbf16>
    %34 = vector.shape_cast %33 : vector<16x16x32xbf16> to vector<256x32xbf16>
    %c5 = arith.constant 5 : index
    %c0_19 = arith.constant 0 : index
    %c0_20 = arith.constant 0 : index
    %35 = vector.load %arg2[%c5, %c0_19, %c0_20] : memref<9x3x32xbf16, #tpu.memory_space<vmem>>, vector<1x3x32xbf16>
    %36 = vector.shape_cast %35 : vector<1x3x32xbf16> to vector<3x32xbf16>
    %cst_21 = arith.constant dense<0.000000e+00> : vector<3x256xf32>
    %37 = tpu.matmul %36, %34, %cst_21 {dimension_numbers = #tpu.dot_dimension_numbers<[1], [1], [0], [0], [0, 0, 1, 0], [], []>} : vector<3x32xbf16>, vector<256x32xbf16>, vector<3x256xf32> -> vector<3x256xf32>
    %38 = arith.addf %32, %37 : vector<3x256xf32>
    %39 = vector.extract_strided_slice %1 {offsets = [2, 0, 0], sizes = [16, 16, 32], strides = [1, 1, 1]} : vector<18x18x32xbf16> to vector<16x16x32xbf16>
    %40 = vector.shape_cast %39 : vector<16x16x32xbf16> to vector<256x32xbf16>
    %c6 = arith.constant 6 : index
    %c0_22 = arith.constant 0 : index
    %c0_23 = arith.constant 0 : index
    %41 = vector.load %arg2[%c6, %c0_22, %c0_23] : memref<9x3x32xbf16, #tpu.memory_space<vmem>>, vector<1x3x32xbf16>
    %42 = vector.shape_cast %41 : vector<1x3x32xbf16> to vector<3x32xbf16>
    %cst_24 = arith.constant dense<0.000000e+00> : vector<3x256xf32>
    %43 = tpu.matmul %42, %40, %cst_24 {dimension_numbers = #tpu.dot_dimension_numbers<[1], [1], [0], [0], [0, 0, 1, 0], [], []>} : vector<3x32xbf16>, vector<256x32xbf16>, vector<3x256xf32> -> vector<3x256xf32>
    %44 = arith.addf %38, %43 : vector<3x256xf32>
    %45 = vector.extract_strided_slice %1 {offsets = [2, 1, 0], sizes = [16, 16, 32], strides = [1, 1, 1]} : vector<18x18x32xbf16> to vector<16x16x32xbf16>
    %46 = vector.shape_cast %45 : vector<16x16x32xbf16> to vector<256x32xbf16>
    %c7 = arith.constant 7 : index
    %c0_25 = arith.constant 0 : index
    %c0_26 = arith.constant 0 : index
    %47 = vector.load %arg2[%c7, %c0_25, %c0_26] : memref<9x3x32xbf16, #tpu.memory_space<vmem>>, vector<1x3x32xbf16>
    %48 = vector.shape_cast %47 : vector<1x3x32xbf16> to vector<3x32xbf16>
    %cst_27 = arith.constant dense<0.000000e+00> : vector<3x256xf32>
    %49 = tpu.matmul %48, %46, %cst_27 {dimension_numbers = #tpu.dot_dimension_numbers<[1], [1], [0], [0], [0, 0, 1, 0], [], []>} : vector<3x32xbf16>, vector<256x32xbf16>, vector<3x256xf32> -> vector<3x256xf32>
    %50 = arith.addf %44, %49 : vector<3x256xf32>
    %51 = vector.extract_strided_slice %1 {offsets = [2, 2, 0], sizes = [16, 16, 32], strides = [1, 1, 1]} : vector<18x18x32xbf16> to vector<16x16x32xbf16>
    %52 = vector.shape_cast %51 : vector<16x16x32xbf16> to vector<256x32xbf16>
    %c8 = arith.constant 8 : index
    %c0_28 = arith.constant 0 : index
    %c0_29 = arith.constant 0 : index
    %53 = vector.load %arg2[%c8, %c0_28, %c0_29] : memref<9x3x32xbf16, #tpu.memory_space<vmem>>, vector<1x3x32xbf16>
    %54 = vector.shape_cast %53 : vector<1x3x32xbf16> to vector<3x32xbf16>
    %cst_30 = arith.constant dense<0.000000e+00> : vector<3x256xf32>
    %55 = tpu.matmul %54, %52, %cst_30 {dimension_numbers = #tpu.dot_dimension_numbers<[1], [1], [0], [0], [0, 0, 1, 0], [], []>} : vector<3x32xbf16>, vector<256x32xbf16>, vector<3x256xf32> -> vector<3x256xf32>
    %56 = arith.addf %50, %55 : vector<3x256xf32>
    %c0_31 = arith.constant 0 : index
    %c0_32 = arith.constant 0 : index
    %57 = vector.load %arg3[%c0_31, %c0_32] : memref<3x1xf32, #tpu.memory_space<vmem>>, vector<3x1xf32>
    %58 = vector.broadcast %57 : vector<3x1xf32> to vector<3x256xf32>
    %59 = arith.addf %56, %58 : vector<3x256xf32>
    %c0_33 = arith.constant 0 : index
    %c0_34 = arith.constant 0 : index
    %c0_35 = arith.constant 0 : index
    %60 = vector.load %arg4[%c0_33, %c0_34, %c0_35] : memref<1x3x256xf32, #tpu.memory_space<vmem>>, vector<1x3x256xf32>
    %61 = vector.shape_cast %60 : vector<1x3x256xf32> to vector<3x256xf32>
    %62 = vector.shape_cast %59 : vector<3x256xf32> to vector<1x3x256xf32>
    tpu.vector_store %arg4[%c0_33, %c0_34, %c0_35], %62 {strides = array<i32>} : memref<1x3x256xf32, #tpu.memory_space<vmem>>, vector<1x3x256xf32>,
    return
  }
  func.func @transform_0(%arg0: i32) -> (i32, i32, i32, i32) {
    %c0_i32 = arith.constant 0 : i32
    %c0_i32_0 = arith.constant 0 : i32
    %c0_i32_1 = arith.constant 0 : i32
    %c0_i32_2 = arith.constant 0 : i32
    return %arg0, %c0_i32, %c0_i32_0, %c0_i32_1 : i32, i32, i32, i32
  }
  func.func @transform_1(%arg0: i32) -> (i32, i32, i32) {
    %c0_i32 = arith.constant 0 : i32
    %c0_i32_0 = arith.constant 0 : i32
    %c0_i32_1 = arith.constant 0 : i32
    %c0_i32_2 = arith.constant 0 : i32
    return %c0_i32, %c0_i32_0, %c0_i32_1 : i32, i32, i32
  }
  func.func @transform_2(%arg0: i32) -> (i32, i32) {
    %c0_i32 = arith.constant 0 : i32
    %c0_i32_0 = arith.constant 0 : i32
    %c0_i32_1 = arith.constant 0 : i32
    return %c0_i32, %c0_i32_0 : i32, i32
  }
  func.func @transform_3(%arg0: i32) -> (i32, i32, i32) {
    %c0_i32 = arith.constant 0 : i32
    %c0_i32_0 = arith.constant 0 : i32
    %c0_i32_1 = arith.constant 0 : i32
    return %arg0, %c0_i32, %c0_i32_0 : i32, i32, i32
  }
}

</mosaic_0001>

<llo_original>
// kernel: video_style_transfer_forward.6
$region0: #{video_style_transfer_forward.6}
  #allocation0 [shape = 'u32[]', space=smem, size = 0x4, offset = 0x4, fixed_abs, tag = 'smem constant byte address 0x4 - core index']
  #allocation1 [shape = 'u32[72,128]{1,0:T(1,128)}', space=vmem, size = 0x9000, scoped, tag = 'internal scratch']
  #allocation2 [shape = 'bf16[128,32]{1,0:T(8,128)(2,1)}', space=vmem, size = 0x8000, scoped, tag = 'scratch operand']
  #allocation3 [shape = 'f32[128,1]{1,0:T(8,128)}', space=vmem, size = 0x10000, scoped, tag = 'scratch operand']
  #allocation4 [shape = 'f32[128,1]{1,0:T(8,128)}', space=vmem, size = 0x10000, scoped, tag = 'scratch operand']
  #allocation5 [shape = 'f32[128,32]{1,0:T(8,128)}', space=vmem, size = 0x10000, scoped, tag = 'scratch operand']
  %s0 = inlined_call_operand.vmem [shape: bf16[2,256,32], index: 0, kind: input, shape index: {}]
  %s1 = inlined_call_operand.vmem [shape: bf16[2,256,32], index: 1, kind: input, shape index: {}]
  %s2 = inlined_call_operand.vmem [shape: bf16[32,32], index: 2, kind: input, shape index: {}]
  %s3 = inlined_call_operand.vmem [shape: f32[1,32], index: 3, kind: input, shape index: {}]
  %s4 = inlined_call_operand.vmem [shape: bf16[32,64], index: 4, kind: input, shape index: {}]
  %s5 = inlined_call_operand.vmem [shape: f32[1,64], index: 5, kind: input, shape index: {}]
  %s6 = inlined_call_operand.vmem [shape: bf16[32,32], index: 6, kind: input, shape index: {}]
  %s7 = inlined_call_operand.vmem [shape: f32[1,32], index: 7, kind: input, shape index: {}]
  %s8 = inlined_call_operand.vmem [shape: bf16[2,256,32], index: 8, kind: output, shape index: {}]
  %s9 = sld [smem:[#allocation0]]
  $region73: #{video_style_transfer_forward.6} parent=0
    _
  %s11 = ssub.s32 1, %s9
  %s12 = scalar_select 0, %s11, %s9
  loop: start=0, step=1, limit=10
  $region2: #{video_style_transfer_forward.6} parent=0 // loop_pre_header
    _
  $region3: #{video_style_transfer_forward.6} parent=0 // loop_header
    %s14 = sphi 0, %s18
    %p15 = scmp.ge.s32.totalorder %s14, 10
    %s21 = sphi 0, %s40
    %s22 = sphi 0, %s36
    %s23 = sphi 0, %s32
    %s24 = sphi 0, %s21
    %s25 = sphi 0, %s22
    %s26 = sphi 0, %s23
    %s27 = sphi 0, %s24
    %s28 = sphi 0, %s25
    %s29 = sphi 0, %s26
    %s45 = sphi 0, %s47
    %s48 = sphi 0, %s45
    %s49 = sphi 0, %s48
    %s65 = sphi 0, %s49
    %s73 = sphi 0, %s75
    %s76 = sphi 0, %s73
    %s77 = sphi 0, %s76
    %s93 = sphi 0, %s77
    %s97 = sphi 0, %s97
    %s99 = sphi 0, %s97
    %s100 = sphi 0, %s99
    %s114 = sphi 0, %s100
    %s118 = sphi 0, %s118
    %s120 = sphi 0, %s118
    %s121 = sphi 0, %s120
    %s135 = sphi 0, %s121
    %s139 = sphi 0, %s139
    %s141 = sphi 0, %s139
    %s142 = sphi 0, %s141
    %s156 = sphi 0, %s142
    %s160 = sphi 0, %s160
    %s162 = sphi 0, %s160
    %s163 = sphi 0, %s162
    %s177 = sphi 0, %s163
    %s181 = sphi 0, %s181
    %s183 = sphi 0, %s181
    %s184 = sphi 0, %s183
    %s198 = sphi 0, %s184
    %s202 = sphi 0, %s202
    %s204 = sphi 0, %s202
    %s205 = sphi 0, %s204
    %s219 = sphi 0, %s205
    %s227 = sphi 0, %s229
    %s230 = sphi 0, %s227
    %s231 = sphi 0, %s230
    %s247 = sphi 0, %s231
  $region4: #{video_style_transfer_forward.6} parent=0 // loop_header_branch
    %17 = sbr.rel (%p15) target = $region8
  $region5: #{video_style_transfer_forward.6} parent=0 // loop_body
    %s19 = ssub.s32 %s14, 1
    %s20 = ssub.s32 %s14, 2
    %s30 = sadd.s32 1, %s23
    %p31 = scmp.ge.s32.totalorder %s30, 2
    %s32 = scalar_select %p31, 0, %s30
    %s33 = sadd.s32 1, %s22
    %s34 = scalar_select %p31, %s33, %s22
    %p35 = scmp.ge.s32.totalorder %s34, 2
    %s36 = scalar_select %p35, 0, %s34
    %s37 = sadd.s32 1, %s21
    %s38 = scalar_select %p35, %s37, %s21
    %p39 = scmp.ge.s32.totalorder %s38, 2
    %s40 = scalar_select %p39, 0, %s38
    %s41 = ssub.s32 %s21, %s40
    %s42 = ssub.s32 %s22, %s36
    %s43 = sor.u32 %s41, %s42
    %p44 = scmp.eq.s32.totalorder %s43, 0
    %s46 = sadd.s32 %s45, 1
    %s47 = scalar_select %p44, %s45, %s46
    %p50 = pneg %p44
    %p51 = scmp.eq.s32.totalorder %s14, 7
    %p52 = por %p50, %p51
    %p53 = scmp.ne.s32.totalorder %s45, %s48
    %p54 = scmp.eq.s32.totalorder %s14, 0
    %p55 = por %p53, %p54
    %p56 = scmp.ne.s32.totalorder %s45, %s48
    %p57 = scmp.eq.s32.totalorder %s19, 7
    %p58 = por %p56, %p57
    %p59 = scmp.ne.s32.totalorder %s48, %s49
    %p60 = scmp.eq.s32.totalorder %s19, 0
    %p61 = por %p59, %p60
    %p62 = scmp.ne.s32.totalorder %s48, %s49
    %p63 = scmp.eq.s32.totalorder %s20, 7
    %p64 = por %p62, %p63
    %p66 = scmp.ne.s32.totalorder %s49, %s65
    %p67 = scmp.eq.s32.totalorder %s20, 0
    %p68 = por %p66, %p67
    %s69 = ssub.s32 %s21, %s40
    %s70 = ssub.s32 %s23, %s32
    %s71 = sor.u32 %s69, %s70
    %p72 = scmp.eq.s32.totalorder %s71, 0
    %s74 = sadd.s32 %s73, 1
    %s75 = scalar_select %p72, %s73, %s74
    %p78 = pneg %p72
    %p79 = scmp.eq.s32.totalorder %s14, 7
    %p80 = por %p78, %p79
    %p81 = scmp.ne.s32.totalorder %s73, %s76
    %p82 = scmp.eq.s32.totalorder %s14, 0
    %p83 = por %p81, %p82
    %p84 = scmp.ne.s32.totalorder %s73, %s76
    %p85 = scmp.eq.s32.totalorder %s19, 7
    %p86 = por %p84, %p85
    %p87 = scmp.ne.s32.totalorder %s76, %s77
    %p88 = scmp.eq.s32.totalorder %s19, 0
    %p89 = por %p87, %p88
    %p90 = scmp.ne.s32.totalorder %s76, %s77
    %p91 = scmp.eq.s32.totalorder %s20, 7
    %p92 = por %p90, %p91
    %p94 = scmp.ne.s32.totalorder %s77, %s93
    %p95 = scmp.eq.s32.totalorder %s20, 0
    %p96 = por %p94, %p95
    %s98 = sadd.s32 %s97, 1
    %p101 = scmp.eq.s32.totalorder %s14, 7
    %p102 = scmp.ne.s32.totalorder %s97, %s99
    %p103 = scmp.eq.s32.totalorder %s14, 0
    %p104 = por %p102, %p103
    %p105 = scmp.ne.s32.totalorder %s97, %s99
    %p106 = scmp.eq.s32.totalorder %s19, 7
    %p107 = por %p105, %p106
    %p108 = scmp.ne.s32.totalorder %s99, %s100
    %p109 = scmp.eq.s32.totalorder %s19, 0
    %p110 = por %p108, %p109
    %p111 = scmp.ne.s32.totalorder %s99, %s100
    %p112 = scmp.eq.s32.totalorder %s20, 7
    %p113 = por %p111, %p112
    %p115 = scmp.ne.s32.totalorder %s100, %s114
    %p116 = scmp.eq.s32.totalorder %s20, 0
    %p117 = por %p115, %p116
    %s119 = sadd.s32 %s118, 1
    %p122 = scmp.eq.s32.totalorder %s14, 7
    %p123 = scmp.ne.s32.totalorder %s118, %s120
    %p124 = scmp.eq.s32.totalorder %s14, 0
    %p125 = por %p123, %p124
    %p126 = scmp.ne.s32.totalorder %s118, %s120
    %p127 = scmp.eq.s32.totalorder %s19, 7
    %p128 = por %p126, %p127
    %p129 = scmp.ne.s32.totalorder %s120, %s121
    %p130 = scmp.eq.s32.totalorder %s19, 0
    %p131 = por %p129, %p130
    %p132 = scmp.ne.s32.totalorder %s120, %s121
    %p133 = scmp.eq.s32.totalorder %s20, 7
    %p134 = por %p132, %p133
    %p136 = scmp.ne.s32.totalorder %s121, %s135
    %p137 = scmp.eq.s32.totalorder %s20, 0
    %p138 = por %p136, %p137
    %s140 = sadd.s32 %s139, 1
    %p143 = scmp.eq.s32.totalorder %s14, 7
    %p144 = scmp.ne.s32.totalorder %s139, %s141
    %p145 = scmp.eq.s32.totalorder %s14, 0
    %p146 = por %p144, %p145
    %p147 = scmp.ne.s32.totalorder %s139, %s141
    %p148 = scmp.eq.s32.totalorder %s19, 7
    %p149 = por %p147, %p148
    %p150 = scmp.ne.s32.totalorder %s141, %s142
    %p151 = scmp.eq.s32.totalorder %s19, 0
    %p152 = por %p150, %p151
    %p153 = scmp.ne.s32.totalorder %s141, %s142
    %p154 = scmp.eq.s32.totalorder %s20, 7
    %p155 = por %p153, %p154
    %p157 = scmp.ne.s32.totalorder %s142, %s156
    %p158 = scmp.eq.s32.totalorder %s20, 0
    %p159 = por %p157, %p158
    %s161 = sadd.s32 %s160, 1
    %p164 = scmp.eq.s32.totalorder %s14, 7
    %p165 = scmp.ne.s32.totalorder %s160, %s162
    %p166 = scmp.eq.s32.totalorder %s14, 0
    %p167 = por %p165, %p166
    %p168 = scmp.ne.s32.totalorder %s160, %s162
    %p169 = scmp.eq.s32.totalorder %s19, 7
    %p170 = por %p168, %p169
    %p171 = scmp.ne.s32.totalorder %s162, %s163
    %p172 = scmp.eq.s32.totalorder %s19, 0
    %p173 = por %p171, %p172
    %p174 = scmp.ne.s32.totalorder %s162, %s163
    %p175 = scmp.eq.s32.totalorder %s20, 7
    %p176 = por %p174, %p175
    %p178 = scmp.ne.s32.totalorder %s163, %s177
    %p179 = scmp.eq.s32.totalorder %s20, 0
    %p180 = por %p178, %p179
    %s182 = sadd.s32 %s181, 1
    %p185 = scmp.eq.s32.totalorder %s14, 7
    %p186 = scmp.ne.s32.totalorder %s181, %s183
    %p187 = scmp.eq.s32.totalorder %s14, 0
    %p188 = por %p186, %p187
    %p189 = scmp.ne.s32.totalorder %s181, %s183
    %p190 = scmp.eq.s32.totalorder %s19, 7
    %p191 = por %p189, %p190
    %p192 = scmp.ne.s32.totalorder %s183, %s184
    %p193 = scmp.eq.s32.totalorder %s19, 0
    %p194 = por %p192, %p193
    %p195 = scmp.ne.s32.totalorder %s183, %s184
    %p196 = scmp.eq.s32.totalorder %s20, 7
    %p197 = por %p195, %p196
    %p199 = scmp.ne.s32.totalorder %s184, %s198
    %p200 = scmp.eq.s32.totalorder %s20, 0
    %p201 = por %p199, %p200
    %s203 = sadd.s32 %s202, 1
    %p206 = scmp.eq.s32.totalorder %s14, 7
    %p207 = scmp.ne.s32.totalorder %s202, %s204
    %p208 = scmp.eq.s32.totalorder %s14, 0
    %p209 = por %p207, %p208
    %p210 = scmp.ne.s32.totalorder %s202, %s204
    %p211 = scmp.eq.s32.totalorder %s19, 7
    %p212 = por %p210, %p211
    %p213 = scmp.ne.s32.totalorder %s204, %s205
    %p214 = scmp.eq.s32.totalorder %s19, 0
    %p215 = por %p213, %p214
    %p216 = scmp.ne.s32.totalorder %s204, %s205
    %p217 = scmp.eq.s32.totalorder %s20, 7
    %p218 = por %p216, %p217
    %p220 = scmp.ne.s32.totalorder %s205, %s219
    %p221 = scmp.eq.s32.totalorder %s20, 0
    %p222 = por %p220, %p221
    %s223 = ssub.s32 %s21, %s40
    %s224 = ssub.s32 %s22, %s36
    %s225 = sor.u32 %s223, %s224
    %p226 = scmp.eq.s32.totalorder %s225, 0
    %s228 = sadd.s32 %s227, 1
    %s229 = scalar_select %p226, %s227, %s228
    %p232 = pneg %p226
    %p233 = scmp.eq.s32.totalorder %s14, 7
    %p234 = por %p232, %p233
    %p235 = scmp.ne.s32.totalorder %s227, %s230
    %p236 = scmp.eq.s32.totalorder %s14, 0
    %p237 = por %p235, %p236
    %p238 = scmp.ne.s32.totalorder %s227, %s230
    %p239 = scmp.eq.s32.totalorder %s19, 7
    %p240 = por %p238, %p239
    %p241 = scmp.ne.s32.totalorder %s230, %s231
    %p242 = scmp.eq.s32.totalorder %s19, 0
    %p243 = por %p241, %p242
    %p244 = scmp.ne.s32.totalorder %s230, %s231
    %p245 = scmp.eq.s32.totalorder %s20, 7
    %p246 = por %p244, %p245
    %p248 = scmp.ne.s32.totalorder %s231, %s247
    %p249 = scmp.eq.s32.totalorder %s20, 0
    %p250 = por %p248, %p249
    %p251 = scmp.le.s32.totalorder 1, %s14
    %p252 = scmp.lt.s32.totalorder %s14, 9
    %p253 = pnand %p251, %p252
    %p254 = pneg %p253
    // Predicated region
    $region9: #{video_style_transfer_forward.6} parent=5 // pred_check
      _
    $region10: #{video_style_transfer_forward.6} parent=5 // pred_check_branch
      %256 = sbr.rel (%p253) target = $region12
    $region11: #{video_style_transfer_forward.6} parent=5 // pred_region
      %s257 = ssub.s32 %s14, 1
      // Predicated region
      $region13: #{video_style_transfer_forward.6} parent=11 // pred_check
        %p258 = pneg %p110
      $region14: #{video_style_transfer_forward.6} parent=11 // pred_check_branch
        %260 = sbr.rel (%p258) target = $region16
      $region15: #{video_style_transfer_forward.6} parent=11 // pred_region
        _
      $region16: #{video_style_transfer_forward.6} parent=11 // pred_fallthru
        _
      // Predicated region
      $region17: #{video_style_transfer_forward.6} parent=11 // pred_check
        %p261 = pneg %p131
      $region18: #{video_style_transfer_forward.6} parent=11 // pred_check_branch
        %263 = sbr.rel (%p261) target = $region20
      $region19: #{video_style_transfer_forward.6} parent=11 // pred_region
        _
      $region20: #{video_style_transfer_forward.6} parent=11 // pred_fallthru
        _
      // Predicated region
      $region21: #{video_style_transfer_forward.6} parent=11 // pred_check
        %p264 = pneg %p152
      $region22: #{video_style_transfer_forward.6} parent=11 // pred_check_branch
        %266 = sbr.rel (%p264) target = $region24
      $region23: #{video_style_transfer_forward.6} parent=11 // pred_region
        _
      $region24: #{video_style_transfer_forward.6} parent=11 // pred_fallthru
        _
      // Predicated region
      $region25: #{video_style_transfer_forward.6} parent=11 // pred_check
        %p267 = pneg %p173
      $region26: #{video_style_transfer_forward.6} parent=11 // pred_check_branch
        %269 = sbr.rel (%p267) target = $region28
      $region27: #{video_style_transfer_forward.6} parent=11 // pred_region
        _
      $region28: #{video_style_transfer_forward.6} parent=11 // pred_fallthru
        _
      // Predicated region
      $region29: #{video_style_transfer_forward.6} parent=11 // pred_check
        %p270 = pneg %p194
      $region30: #{video_style_transfer_forward.6} parent=11 // pred_check_branch
        %272 = sbr.rel (%p270) target = $region32
      $region31: #{video_style_transfer_forward.6} parent=11 // pred_region
        _
      $region32: #{video_style_transfer_forward.6} parent=11 // pred_fallthru
        _
      // Predicated region
      $region33: #{video_style_transfer_forward.6} parent=11 // pred_check
        %p273 = pneg %p215
      $region34: #{video_style_transfer_forward.6} parent=11 // pred_check_branch
        %275 = sbr.rel (%p273) target = $region36
      $region35: #{video_style_transfer_forward.6} parent=11 // pred_region
        _
      $region36: #{video_style_transfer_forward.6} parent=11 // pred_fallthru
        _
    $region12: #{video_style_transfer_forward.6} parent=5 // pred_fallthru
      _
    %p276 = scmp.lt.s32.totalorder %s14, 8
    // Predicated region
    $region37: #{video_style_transfer_forward.6} parent=5 // pred_check
      %p277 = pneg %p276
    $region38: #{video_style_transfer_forward.6} parent=5 // pred_check_branch
      %279 = sbr.rel (%p277) target = $region40
    $region39: #{video_style_transfer_forward.6} parent=5 // pred_region
      // Predicated region
      $region41: #{video_style_transfer_forward.6} parent=39 // pred_check
        %p280 = pneg %p55
      $region42: #{video_style_transfer_forward.6} parent=39 // pred_check_branch
        %282 = sbr.rel (%p280) target = $region44
      $region43: #{video_style_transfer_forward.6} parent=39 // pred_region
        %s283 = smul.u32 16, %s22
        %p284 = scmp.lt.s32.totalorder %s21, 1
        %s285 = scalar_select %p284, %s21, 1
        %p286 = scmp.lt.s32.totalorder %s283, 31
        %s287 = scalar_select %p286, %s283, 31
        %s288 = smul.addr %s285, 32
        %s289 = sadd.s32 %s287, %s288
        %s290 = smul.addr %s289, 4
        %s291 = scalar_lea.vmem %s0, %s290
        %s292 = smul.u32 16, %s22
      $region44: #{video_style_transfer_forward.6} parent=39 // pred_fallthru
        _
      // Predicated region
      $region45: #{video_style_transfer_forward.6} parent=39 // pred_check
        %p293 = pneg %p83
      $region46: #{video_style_transfer_forward.6} parent=39 // pred_check_branch
        %295 = sbr.rel (%p293) target = $region48
      $region47: #{video_style_transfer_forward.6} parent=39 // pred_region
        %s296 = smul.u32 16, %s23
        %p297 = scmp.lt.s32.totalorder %s21, 1
        %s298 = scalar_select %p297, %s21, 1
        %p299 = scmp.lt.s32.totalorder %s296, 31
        %s300 = scalar_select %p299, %s296, 31
        %s301 = smul.addr %s298, 32
        %s302 = sadd.s32 %s300, %s301
        %s303 = smul.addr %s302, 4
        %s304 = scalar_lea.vmem %s1, %s303
        %s305 = smul.u32 16, %s23
      $region48: #{video_style_transfer_forward.6} parent=39 // pred_fallthru
        _
    $region40: #{video_style_transfer_forward.6} parent=5 // pred_fallthru
      _
    %p306 = scmp.le.s32.totalorder 1, %s14
    %p307 = scmp.lt.s32.totalorder %s14, 9
    %p308 = pnand %p306, %p307
    %p309 = pneg %p308
    // Predicated region
    $region49: #{video_style_transfer_forward.6} parent=5 // pred_check
      _
    $region50: #{video_style_transfer_forward.6} parent=5 // pred_check_branch
      %311 = sbr.rel (%p308) target = $region52
    $region51: #{video_style_transfer_forward.6} parent=5 // pred_region
      %s312 = ssub.s32 %s14, 1
      %s313 = smul.u32 16, %s25
      %p314 = scmp.lt.s32.totalorder %s24, 1
      %s315 = scalar_select %p314, %s24, 1
      %p316 = scmp.lt.s32.totalorder %s313, 31
      %s317 = scalar_select %p316, %s313, 31
      %s318 = smul.addr %s315, 32
      %s319 = sadd.s32 %s317, %s318
      %s320 = smul.addr %s319, 4
      %s321 = scalar_lea.vmem %s0, %s320
      %p322 = pneg %p61
      %p323 = pneg %p58
      %s324 = smul.u32 16, %s26
      %p325 = scmp.lt.s32.totalorder %s24, 1
      %s326 = scalar_select %p325, %s24, 1
      %p327 = scmp.lt.s32.totalorder %s324, 31
      %s328 = scalar_select %p327, %s324, 31
      %s329 = smul.addr %s326, 32
      %s330 = sadd.s32 %s328, %s329
      %s331 = smul.addr %s330, 4
      %s332 = scalar_lea.vmem %s1, %s331
      %p333 = pneg %p89
      %p334 = pneg %p86
      %p335 = pneg %p110
      %p336 = pneg %p107
      %p337 = pneg %p131
      %p338 = pneg %p128
      %p339 = pneg %p152
      %p340 = pneg %p149
      %p341 = pneg %p173
      %p342 = pneg %p170
      %p343 = pneg %p194
      %p344 = pneg %p191
      %p345 = pneg %p215
      %p346 = pneg %p212
      %p347 = pneg %p243
      %p348 = pneg %p240
      %s349 = smul.u32 16, %s25
      %p350 = scmp.lt.s32.totalorder %s24, 1
      %s351 = scalar_select %p350, %s24, 1
      %p352 = scmp.lt.s32.totalorder %s349, 31
      %s353 = scalar_select %p352, %s349, 31
      %s354 = smul.addr %s351, 32
      %s355 = sadd.s32 %s353, %s354
      %s356 = smul.addr %s355, 4
      %s357 = scalar_lea.vmem %s8, %s356
      %s358 = smul.u32 16, %s25
      %p359 = scmp.lt.s32.totalorder %s24, 1
      %s360 = scalar_select %p359, %s24, 1
      %p361 = scmp.lt.s32.totalorder %s358, 31
      %s362 = scalar_select %p361, %s358, 31
      %s363 = smul.addr %s360, 32
      %s364 = sadd.s32 %s362, %s363
      %s365 = smul.addr %s364, 4
      %s366 = scalar_lea.vmem %s0, %s365
      %s367 = smul.u32 16, %s25
      %s368 = smul.u32 16, %s26
      %p369 = scmp.lt.s32.totalorder %s24, 1
      %s370 = scalar_select %p369, %s24, 1
      %p371 = scmp.lt.s32.totalorder %s368, 31
      %s372 = scalar_select %p371, %s368, 31
      %s373 = smul.addr %s370, 32
      %s374 = sadd.s32 %s372, %s373
      %s375 = smul.addr %s374, 4
      %s376 = scalar_lea.vmem %s1, %s375
      %s377 = smul.u32 16, %s26
      %s378 = smul.u32 16, %s25
      %p379 = scmp.lt.s32.totalorder %s24, 1
      %s380 = scalar_select %p379, %s24, 1
      %p381 = scmp.lt.s32.totalorder %s378, 31
      %s382 = scalar_select %p381, %s378, 31
      %s383 = smul.addr %s380, 32
      %s384 = sadd.s32 %s382, %s383
      %s385 = smul.addr %s384, 4
      %s386 = scalar_lea.vmem %s8, %s385
      %s387 = smul.u32 16, %s25
      %p389 = scmp.eq.s32.totalorder %s26, 0
      // Predicated region
      $region53: #{video_style_transfer_forward.6} parent=51 // pred_check
        %p390 = pneg %p389
      $region54: #{video_style_transfer_forward.6} parent=51 // pred_check_branch
        %392 = sbr.rel (%p390) target = $region56
      $region55: #{video_style_transfer_forward.6} parent=51 // pred_region
        %v393 = vld [vmem:[%s366] sm:$0xf]
        %v394 = vld [vmem:[%s366 + $0x4] sm:$0xf]
        %v395 = vld [vmem:[%s366 + $0x8] sm:$0xf]
        %v396 = vld [vmem:[%s366 + $0xc] sm:$0xf]
        %v397 = vld [vmem:[%s366 + $0x10] sm:$0xf]
        %v398 = vld [vmem:[%s366 + $0x14] sm:$0xf]
        %v399 = vld [vmem:[%s366 + $0x18] sm:$0xf]
        %v400 = vld [vmem:[%s366 + $0x1c] sm:$0xf]
        %v401 = vld [vmem:[%s366 + $0x20] sm:$0xf]
        %v402 = vld [vmem:[%s366 + $0x24] sm:$0xf]
        %v403 = vld [vmem:[%s366 + $0x28] sm:$0xf]
        %v404 = vld [vmem:[%s366 + $0x2c] sm:$0xf]
        %v405 = vld [vmem:[%s366 + $0x30] sm:$0xf]
        %v406 = vld [vmem:[%s366 + $0x34] sm:$0xf]
        %v407 = vld [vmem:[%s366 + $0x38] sm:$0xf]
        %v408 = vld [vmem:[%s366 + $0x3c] sm:$0xf]
        %v409 = vld [vmem:[%s2] sm:$0xf]
        %v410 = vld [vmem:[%s2 + $0x4] sm:$0xf]
        %v411 = vld [vmem:[%s2 + $0x8] sm:$0xf]
        %v412 = vld [vmem:[%s2 + $0xc] sm:$0xf]
        %v413 = vld [vmem:[%s3] sm:$0x1]
        %v415 = vperm.slane %v413, 0
        %v433 = vunpack.c.l.b16 %v393
        %v434 = vunpack.c.l.b16 %v394
        %v435 = vunpack.c.l.b16 %v395
        %v436 = vunpack.c.l.b16 %v396
        %v437 = vunpack.c.l.b16 %v397
        %v438 = vunpack.c.l.b16 %v398
        %v439 = vunpack.c.l.b16 %v399
        %v440 = vunpack.c.l.b16 %v400
        %v441 = vunpack.c.l.b16 %v401
        %v442 = vunpack.c.l.b16 %v402
        %v443 = vunpack.c.l.b16 %v403
        %v444 = vunpack.c.l.b16 %v404
        %v445 = vunpack.c.l.b16 %v405
        %v446 = vunpack.c.l.b16 %v406
        %v447 = vunpack.c.l.b16 %v407
        %v448 = vunpack.c.l.b16 %v408
        %v449 = vpack.c.b16 %v434, %v433
        %v450 = vpack.c.b16 %v436, %v435
        %v451 = vpack.c.b16 %v438, %v437
        %v452 = vpack.c.b16 %v440, %v439
        %v453 = vpack.c.b16 %v442, %v441
        %v454 = vpack.c.b16 %v444, %v443
        %v455 = vpack.c.b16 %v446, %v445
        %v456 = vpack.c.b16 %v448, %v447
        %v461 = vunpack.c.l.b16 %v409
        %v462 = vunpack.c.l.b16 %v410
        %v463 = vunpack.c.l.b16 %v411
        %v464 = vunpack.c.l.b16 %v412
        %v465 = vpack.c.b16 %v462, %v461
        %v466 = vpack.c.b16 %v464, %v463
        %vm469 = vcmask 261120
        %v471 = vsel %vm469, %v449, 0
        %v474 = vsel %vm469, %v450, 0
        %v477 = vsel %vm469, %v451, 0
        %v480 = vsel %vm469, %v452, 0
        %v483 = vsel %vm469, %v453, 0
        %v486 = vsel %vm469, %v454, 0
        %v489 = vsel %vm469, %v455, 0
        %v492 = vsel %vm469, %v456, 0
        %494 = vmatpush.bf16.msra.mxu0 0
        %495 = vmatpush.bf16.msra.mxu0 0
        %496 = vmatpush.bf16.msra.mxu0 0
        %497 = vmatpush.bf16.msra.mxu0 0
        %498 = vmatpush.bf16.msra.mxu0 0
        %499 = vmatpush.bf16.msra.mxu0 0
        %500 = vmatpush.bf16.msra.mxu0 %v466
        %501 = vmatpush.bf16.msra.mxu0 %v465
        %502 = vmatmul.bf16.gmra.mxu0 %v471
        %v503 = vpop.f32.mrf.mxu0
        %v504 = vadd.f32 %v415, %v503
        %v505 = vpop.f32.mrf.mxu0
        %v506 = vadd.f32 %v415, %v505
        %507 = vmatmul.bf16.gmra.mxu0 %v474
        %v508 = vpop.f32.mrf.mxu0
        %v509 = vadd.f32 %v415, %v508
        %v510 = vpop.f32.mrf.mxu0
        %v511 = vadd.f32 %v415, %v510
        %512 = vmatmul.bf16.gmra.mxu0 %v477
        %v513 = vpop.f32.mrf.mxu0
        %v514 = vadd.f32 %v415, %v513
        %v515 = vpop.f32.mrf.mxu0
        %v516 = vadd.f32 %v415, %v515
        %517 = vmatmul.bf16.gmra.mxu0 %v480
        %v518 = vpop.f32.mrf.mxu0
        %v519 = vadd.f32 %v415, %v518
        %v520 = vpop.f32.mrf.mxu0
        %v521 = vadd.f32 %v415, %v520
        %522 = vmatmul.bf16.gmra.mxu0 %v483
        %v523 = vpop.f32.mrf.mxu0
        %v524 = vadd.f32 %v415, %v523
        %v525 = vpop.f32.mrf.mxu0
        %v526 = vadd.f32 %v415, %v525
        %527 = vmatmul.bf16.gmra.mxu0 %v486
        %v528 = vpop.f32.mrf.mxu0
        %v529 = vadd.f32 %v415, %v528
        %v530 = vpop.f32.mrf.mxu0
        %v531 = vadd.f32 %v415, %v530
        %532 = vmatmul.bf16.gmra.mxu0 %v489
        %v533 = vpop.f32.mrf.mxu0
        %v534 = vadd.f32 %v415, %v533
        %v535 = vpop.f32.mrf.mxu0
        %v536 = vadd.f32 %v415, %v535
        %537 = vmatmul.bf16.gmra.mxu0 %v492
        %v538 = vpop.f32.mrf.mxu0
        %v539 = vadd.f32 %v415, %v538
        %v540 = vpop.f32.mrf.mxu0
        %v541 = vadd.f32 %v415, %v540
        %542 = vdwg.mxu0
        %v543 = vmul.f32 %v504, 0.17677669
        %v544 = vmul.f32 %v506, 0.17677669
        %v545 = vmul.f32 %v509, 0.17677669
        %v546 = vmul.f32 %v511, 0.17677669
        %v547 = vmul.f32 %v514, 0.17677669
        %v548 = vmul.f32 %v516, 0.17677669
        %v549 = vmul.f32 %v519, 0.17677669
        %v550 = vmul.f32 %v521, 0.17677669
        %v551 = vmul.f32 %v524, 0.17677669
        %v552 = vmul.f32 %v526, 0.17677669
        %v553 = vmul.f32 %v529, 0.17677669
        %v554 = vmul.f32 %v531, 0.17677669
        %v555 = vmul.f32 %v534, 0.17677669
        %v556 = vmul.f32 %v536, 0.17677669
        %v557 = vmul.f32 %v539, 0.17677669
        %v558 = vmul.f32 %v541, 0.17677669
        %v559 = vpack.c.bf16 %v543, %v543
        %v560 = vpack.c.bf16 %v544, %v544
        %v561 = vpack.c.bf16 %v545, %v545
        %v562 = vpack.c.bf16 %v546, %v546
        %v563 = vpack.c.bf16 %v547, %v547
        %v564 = vpack.c.bf16 %v548, %v548
        %v565 = vpack.c.bf16 %v549, %v549
        %v566 = vpack.c.bf16 %v550, %v550
        %v567 = vpack.c.bf16 %v551, %v551
        %v568 = vpack.c.bf16 %v552, %v552
        %v569 = vpack.c.bf16 %v553, %v553
        %v570 = vpack.c.bf16 %v554, %v554
        %v571 = vpack.c.bf16 %v555, %v555
        %v572 = vpack.c.bf16 %v556, %v556
        %v573 = vpack.c.bf16 %v557, %v557
        %v574 = vpack.c.bf16 %v558, %v558
        %vm575 = vcmask 257024
        %576 = vst.msk [vmem:[#allocation2] sm:$0xf] %vm575, %v559
        %577 = vst.msk [vmem:[#allocation2 + $0x4] sm:$0xf] %vm575, %v560
        %578 = vst.msk [vmem:[#allocation2 + $0x8] sm:$0xf] %vm575, %v561
        %579 = vst.msk [vmem:[#allocation2 + $0xc] sm:$0xf] %vm575, %v562
        %580 = vst.msk [vmem:[#allocation2 + $0x10] sm:$0xf] %vm575, %v563
        %581 = vst.msk [vmem:[#allocation2 + $0x14] sm:$0xf] %vm575, %v564
        %582 = vst.msk [vmem:[#allocation2 + $0x18] sm:$0xf] %vm575, %v565
        %583 = vst.msk [vmem:[#allocation2 + $0x1c] sm:$0xf] %vm575, %v566
        %584 = vst.msk [vmem:[#allocation2 + $0x20] sm:$0xf] %vm575, %v567
        %585 = vst.msk [vmem:[#allocation2 + $0x24] sm:$0xf] %vm575, %v568
        %586 = vst.msk [vmem:[#allocation2 + $0x28] sm:$0xf] %vm575, %v569
        %587 = vst.msk [vmem:[#allocation2 + $0x2c] sm:$0xf] %vm575, %v570
        %588 = vst.msk [vmem:[#allocation2 + $0x30] sm:$0xf] %vm575, %v571
        %589 = vst.msk [vmem:[#allocation2 + $0x34] sm:$0xf] %vm575, %v572
        %590 = vst.msk [vmem:[#allocation2 + $0x38] sm:$0xf] %vm575, %v573
        %591 = vst.msk [vmem:[#allocation2 + $0x3c] sm:$0xf] %vm575, %v574
        %vm592 = vcmask 7168
        %593 = vst.msk [vmem:[#allocation3] sm:$0xff] %vm592, -inf
        %594 = vst.msk [vmem:[#allocation3 + $0x8] sm:$0xff] %vm592, -inf
        %595 = vst.msk [vmem:[#allocation3 + $0x10] sm:$0xff] %vm592, -inf
        %596 = vst.msk [vmem:[#allocation3 + $0x18] sm:$0xff] %vm592, -inf
        %597 = vst.msk [vmem:[#allocation3 + $0x20] sm:$0xff] %vm592, -inf
        %598 = vst.msk [vmem:[#allocation3 + $0x28] sm:$0xff] %vm592, -inf
        %599 = vst.msk [vmem:[#allocation3 + $0x30] sm:$0xff] %vm592, -inf
        %600 = vst.msk [vmem:[#allocation3 + $0x38] sm:$0xff] %vm592, -inf
        %601 = vst.msk [vmem:[#allocation3 + $0x40] sm:$0xff] %vm592, -inf
        %602 = vst.msk [vmem:[#allocation3 + $0x48] sm:$0xff] %vm592, -inf
        %603 = vst.msk [vmem:[#allocation3 + $0x50] sm:$0xff] %vm592, -inf
        %604 = vst.msk [vmem:[#allocation3 + $0x58] sm:$0xff] %vm592, -inf
        %605 = vst.msk [vmem:[#allocation3 + $0x60] sm:$0xff] %vm592, -inf
        %606 = vst.msk [vmem:[#allocation3 + $0x68] sm:$0xff] %vm592, -inf
        %607 = vst.msk [vmem:[#allocation3 + $0x70] sm:$0xff] %vm592, -inf
        %608 = vst.msk [vmem:[#allocation3 + $0x78] sm:$0xff] %vm592, -inf
        %609 = vst.msk [vmem:[#allocation4] sm:$0xff] %vm592, 0.0
        %610 = vst.msk [vmem:[#allocation4 + $0x8] sm:$0xff] %vm592, 0.0
        %611 = vst.msk [vmem:[#allocation4 + $0x10] sm:$0xff] %vm592, 0.0
        %612 = vst.msk [vmem:[#allocation4 + $0x18] sm:$0xff] %vm592, 0.0
        %613 = vst.msk [vmem:[#allocation4 + $0x20] sm:$0xff] %vm592, 0.0
        %614 = vst.msk [vmem:[#allocation4 + $0x28] sm:$0xff] %vm592, 0.0
        %615 = vst.msk [vmem:[#allocation4 + $0x30] sm:$0xff] %vm592, 0.0
        %616 = vst.msk [vmem:[#allocation4 + $0x38] sm:$0xff] %vm592, 0.0
        %617 = vst.msk [vmem:[#allocation4 + $0x40] sm:$0xff] %vm592, 0.0
        %618 = vst.msk [vmem:[#allocation4 + $0x48] sm:$0xff] %vm592, 0.0
        %619 = vst.msk [vmem:[#allocation4 + $0x50] sm:$0xff] %vm592, 0.0
        %620 = vst.msk [vmem:[#allocation4 + $0x58] sm:$0xff] %vm592, 0.0
        %621 = vst.msk [vmem:[#allocation4 + $0x60] sm:$0xff] %vm592, 0.0
        %622 = vst.msk [vmem:[#allocation4 + $0x68] sm:$0xff] %vm592, 0.0
        %623 = vst.msk [vmem:[#allocation4 + $0x70] sm:$0xff] %vm592, 0.0
        %624 = vst.msk [vmem:[#allocation4 + $0x78] sm:$0xff] %vm592, 0.0
        %625 = vst.msk [vmem:[#allocation5] sm:$0xff] %vm469, 0.0
        %626 = vst.msk [vmem:[#allocation5 + $0x8] sm:$0xff] %vm469, 0.0
        %627 = vst.msk [vmem:[#allocation5 + $0x10] sm:$0xff] %vm469, 0.0
        %628 = vst.msk [vmem:[#allocation5 + $0x18] sm:$0xff] %vm469, 0.0
        %629 = vst.msk [vmem:[#allocation5 + $0x20] sm:$0xff] %vm469, 0.0
        %630 = vst.msk [vmem:[#allocation5 + $0x28] sm:$0xff] %vm469, 0.0
        %631 = vst.msk [vmem:[#allocation5 + $0x30] sm:$0xff] %vm469, 0.0
        %632 = vst.msk [vmem:[#allocation5 + $0x38] sm:$0xff] %vm469, 0.0
        %633 = vst.msk [vmem:[#allocation5 + $0x40] sm:$0xff] %vm469, 0.0
        %634 = vst.msk [vmem:[#allocation5 + $0x48] sm:$0xff] %vm469, 0.0
        %635 = vst.msk [vmem:[#allocation5 + $0x50] sm:$0xff] %vm469, 0.0
        %636 = vst.msk [vmem:[#allocation5 + $0x58] sm:$0xff] %vm469, 0.0
        %637 = vst.msk [vmem:[#allocation5 + $0x60] sm:$0xff] %vm469, 0.0
        %638 = vst.msk [vmem:[#allocation5 + $0x68] sm:$0xff] %vm469, 0.0
        %639 = vst.msk [vmem:[#allocation5 + $0x70] sm:$0xff] %vm469, 0.0
        %640 = vst.msk [vmem:[#allocation5 + $0x78] sm:$0xff] %vm469, 0.0
      $region56: #{video_style_transfer_forward.6} parent=51 // pred_fallthru
        _
      %v641 = vld [vmem:[%s376] sm:$0xf]
      %v642 = vld [vmem:[%s376 + $0x4] sm:$0xf]
      %v643 = vld [vmem:[%s376 + $0x8] sm:$0xf]
      %v644 = vld [vmem:[%s376 + $0xc] sm:$0xf]
      %v645 = vld [vmem:[%s376 + $0x10] sm:$0xf]
      %v646 = vld [vmem:[%s376 + $0x14] sm:$0xf]
      %v647 = vld [vmem:[%s376 + $0x18] sm:$0xf]
      %v648 = vld [vmem:[%s376 + $0x1c] sm:$0xf]
      %v649 = vld [vmem:[%s376 + $0x20] sm:$0xf]
      %v650 = vld [vmem:[%s376 + $0x24] sm:$0xf]
      %v651 = vld [vmem:[%s376 + $0x28] sm:$0xf]
      %v652 = vld [vmem:[%s376 + $0x2c] sm:$0xf]
      %v653 = vld [vmem:[%s376 + $0x30] sm:$0xf]
      %v654 = vld [vmem:[%s376 + $0x34] sm:$0xf]
      %v655 = vld [vmem:[%s376 + $0x38] sm:$0xf]
      %v656 = vld [vmem:[%s376 + $0x3c] sm:$0xf]
      %v657 = vld [vmem:[%s4] sm:$0xf]
      %v658 = vld [vmem:[%s4 + $0x4] sm:$0xf]
      %v659 = vld [vmem:[%s4 + $0x8] sm:$0xf]
      %v660 = vld [vmem:[%s4 + $0xc] sm:$0xf]
      %v661 = vld [vmem:[%s5] sm:$0x1]
      %v663 = vperm.slane %v661, 0
      %v681 = vunpack.c.l.b16 %v641
      %v682 = vunpack.c.l.b16 %v642
      %v683 = vunpack.c.l.b16 %v643
      %v684 = vunpack.c.l.b16 %v644
      %v685 = vunpack.c.l.b16 %v645
      %v686 = vunpack.c.l.b16 %v646
      %v687 = vunpack.c.l.b16 %v647
      %v688 = vunpack.c.l.b16 %v648
      %v689 = vunpack.c.l.b16 %v649
      %v690 = vunpack.c.l.b16 %v650
      %v691 = vunpack.c.l.b16 %v651
      %v692 = vunpack.c.l.b16 %v652
      %v693 = vunpack.c.l.b16 %v653
      %v694 = vunpack.c.l.b16 %v654
      %v695 = vunpack.c.l.b16 %v655
      %v696 = vunpack.c.l.b16 %v656
      %v697 = vpack.c.b16 %v682, %v681
      %v698 = vpack.c.b16 %v684, %v683
      %v699 = vpack.c.b16 %v686, %v685
      %v700 = vpack.c.b16 %v688, %v687
      %v701 = vpack.c.b16 %v690, %v689
      %v702 = vpack.c.b16 %v692, %v691
      %v703 = vpack.c.b16 %v694, %v693
      %v704 = vpack.c.b16 %v696, %v695
      %v709 = vunpack.c.l.b16 %v657
      %v710 = vunpack.c.l.b16 %v658
      %v711 = vunpack.c.l.b16 %v659
      %v712 = vunpack.c.l.b16 %v660
      %v713 = vpack.c.b16 %v710, %v709
      %v714 = vpack.c.b16 %v712, %v711
      %vm717 = vcmask 261120
      %v719 = vsel %vm717, %v697, 0
      %v722 = vsel %vm717, %v698, 0
      %v725 = vsel %vm717, %v699, 0
      %v728 = vsel %vm717, %v700, 0
      %v731 = vsel %vm717, %v701, 0
      %v734 = vsel %vm717, %v702, 0
      %v737 = vsel %vm717, %v703, 0
      %v740 = vsel %vm717, %v704, 0
      %742 = vmatpush.bf16.msra.mxu0 0
      %743 = vmatpush.bf16.msra.mxu0 0
      %744 = vmatpush.bf16.msra.mxu0 0
      %745 = vmatpush.bf16.msra.mxu0 0
      %746 = vmatpush.bf16.msra.mxu0 0
      %747 = vmatpush.bf16.msra.mxu0 0
      %748 = vmatpush.bf16.msra.mxu0 %v714
      %749 = vmatpush.bf16.msra.mxu0 %v713
      %750 = vmatmul.bf16.gmra.mxu0 %v719
      %v751 = vpop.f32.mrf.mxu0
      %v752 = vadd.f32 %v663, %v751
      %v753 = vpop.f32.mrf.mxu0
      %v754 = vadd.f32 %v663, %v753
      %755 = vmatmul.bf16.gmra.mxu0 %v722
      %v756 = vpop.f32.mrf.mxu0
      %v757 = vadd.f32 %v663, %v756
      %v758 = vpop.f32.mrf.mxu0
      %v759 = vadd.f32 %v663, %v758
      %760 = vmatmul.bf16.gmra.mxu0 %v725
      %v761 = vpop.f32.mrf.mxu0
      %v762 = vadd.f32 %v663, %v761
      %v763 = vpop.f32.mrf.mxu0
      %v764 = vadd.f32 %v663, %v763
      %765 = vmatmul.bf16.gmra.mxu0 %v728
      %v766 = vpop.f32.mrf.mxu0
      %v767 = vadd.f32 %v663, %v766
      %v768 = vpop.f32.mrf.mxu0
      %v769 = vadd.f32 %v663, %v768
      %770 = vmatmul.bf16.gmra.mxu0 %v731
      %v771 = vpop.f32.mrf.mxu0
      %v772 = vadd.f32 %v663, %v771
      %v773 = vpop.f32.mrf.mxu0
      %v774 = vadd.f32 %v663, %v773
      %775 = vmatmul.bf16.gmra.mxu0 %v734
      %v776 = vpop.f32.mrf.mxu0
      %v777 = vadd.f32 %v663, %v776
      %v778 = vpop.f32.mrf.mxu0
      %v779 = vadd.f32 %v663, %v778
      %780 = vmatmul.bf16.gmra.mxu0 %v737
      %v781 = vpop.f32.mrf.mxu0
      %v782 = vadd.f32 %v663, %v781
      %v783 = vpop.f32.mrf.mxu0
      %v784 = vadd.f32 %v663, %v783
      %785 = vmatmul.bf16.gmra.mxu0 %v740
      %v786 = vpop.f32.mrf.mxu0
      %v787 = vadd.f32 %v663, %v786
      %v788 = vpop.f32.mrf.mxu0
      %v789 = vadd.f32 %v663, %v788
      %790 = vdwg.mxu0
      %v791 = vpack.c.bf16 %v754, %v752
      %v792 = vpack.c.bf16 %v759, %v757
      %v793 = vpack.c.bf16 %v764, %v762
      %v794 = vpack.c.bf16 %v769, %v767
      %v795 = vpack.c.bf16 %v774, %v772
      %v796 = vpack.c.bf16 %v779, %v777
      %v797 = vpack.c.bf16 %v784, %v782
      %v798 = vpack.c.bf16 %v789, %v787
      %v799 = vld [vmem:[#allocation2] sm:$0xf]
      %v800 = vld [vmem:[#allocation2 + $0x4] sm:$0xf]
      %v801 = vld [vmem:[#allocation2 + $0x8] sm:$0xf]
      %v802 = vld [vmem:[#allocation2 + $0xc] sm:$0xf]
      %v803 = vld [vmem:[#allocation2 + $0x10] sm:$0xf]
      %v804 = vld [vmem:[#allocation2 + $0x14] sm:$0xf]
      %v805 = vld [vmem:[#allocation2 + $0x18] sm:$0xf]
      %v806 = vld [vmem:[#allocation2 + $0x1c] sm:$0xf]
      %v807 = vld [vmem:[#allocation2 + $0x20] sm:$0xf]
      %v808 = vld [vmem:[#allocation2 + $0x24] sm:$0xf]
      %v809 = vld [vmem:[#allocation2 + $0x28] sm:$0xf]
      %v810 = vld [vmem:[#allocation2 + $0x2c] sm:$0xf]
      %v811 = vld [vmem:[#allocation2 + $0x30] sm:$0xf]
      %v812 = vld [vmem:[#allocation2 + $0x34] sm:$0xf]
      %v813 = vld [vmem:[#allocation2 + $0x38] sm:$0xf]
      %v814 = vld [vmem:[#allocation2 + $0x3c] sm:$0xf]
      %v831 = vunpack.c.l.b16 %v799
      %v832 = vunpack.c.l.b16 %v800
      %v833 = vunpack.c.l.b16 %v801
      %v834 = vunpack.c.l.b16 %v802
      %v835 = vunpack.c.l.b16 %v803
      %v836 = vunpack.c.l.b16 %v804
      %v837 = vunpack.c.l.b16 %v805
      %v838 = vunpack.c.l.b16 %v806
      %v839 = vunpack.c.l.b16 %v807
      %v840 = vunpack.c.l.b16 %v808
      %v841 = vunpack.c.l.b16 %v809
      %v842 = vunpack.c.l.b16 %v810
      %v843 = vunpack.c.l.b16 %v811
      %v844 = vunpack.c.l.b16 %v812
      %v845 = vunpack.c.l.b16 %v813
      %v846 = vunpack.c.l.b16 %v814
      %v847 = vpack.c.b16 %v832, %v831
      %v848 = vpack.c.b16 %v834, %v833
      %v849 = vpack.c.b16 %v836, %v835
      %v850 = vpack.c.b16 %v838, %v837
      %v851 = vpack.c.b16 %v840, %v839
      %v852 = vpack.c.b16 %v842, %v841
      %v853 = vpack.c.b16 %v844, %v843
      %v854 = vpack.c.b16 %v846, %v845
      %v856 = vsel %vm717, %v847, 0
      %v859 = vsel %vm717, %v848, 0
      %v862 = vsel %vm717, %v849, 0
      %v865 = vsel %vm717, %v850, 0
      %v868 = vsel %vm717, %v851, 0
      %v871 = vsel %vm717, %v852, 0
      %v874 = vsel %vm717, %v853, 0
      %v877 = vsel %vm717, %v854, 0
      %v880 = vsel %vm717, %v791, 0
      %v883 = vsel %vm717, %v792, 0
      %v886 = vsel %vm717, %v793, 0
      %v889 = vsel %vm717, %v794, 0
      %v892 = vsel %vm717, %v795, 0
      %v895 = vsel %vm717, %v796, 0
      %v898 = vsel %vm717, %v797, 0
      %v901 = vsel %vm717, %v798, 0
      %903 = vmatpush.bf16.xpose.msra.mxu0 %v901
      %904 = vmatpush.bf16.xpose.msra.mxu0 %v898
      %905 = vmatpush.bf16.xpose.msra.mxu0 %v895
      %906 = vmatpush.bf16.xpose.msra.mxu0 %v892
      %907 = vmatpush.bf16.xpose.msra.mxu0 %v889
      %908 = vmatpush.bf16.xpose.msra.mxu0 %v886
      %909 = vmatpush.bf16.xpose.msra.mxu0 %v883
      %910 = vmatpush.bf16.xpose.msra.mxu0 %v880
      %911 = vmatmul.bf16.gmra.mxu0 %v856
      %v912 = vpop.f32.mrf.mxu0
      %v913 = vadd.f32 0.0, %v912
      %v914 = vpop.f32.mrf.mxu0
      %v915 = vadd.f32 0.0, %v914
      %916 = vmatmul.bf16.gmra.mxu0 %v859
      %v917 = vpop.f32.mrf.mxu0
      %v918 = vadd.f32 0.0, %v917
      %v919 = vpop.f32.mrf.mxu0
      %v920 = vadd.f32 0.0, %v919
      %921 = vmatmul.bf16.gmra.mxu0 %v862
      %v922 = vpop.f32.mrf.mxu0
      %v923 = vadd.f32 0.0, %v922
      %v924 = vpop.f32.mrf.mxu0
      %v925 = vadd.f32 0.0, %v924
      %926 = vmatmul.bf16.gmra.mxu0 %v865
      %v927 = vpop.f32.mrf.mxu0
      %v928 = vadd.f32 0.0, %v927
      %v929 = vpop.f32.mrf.mxu0
      %v930 = vadd.f32 0.0, %v929
      %931 = vmatmul.bf16.gmra.mxu0 %v868
      %v932 = vpop.f32.mrf.mxu0
      %v933 = vadd.f32 0.0, %v932
      %v934 = vpop.f32.mrf.mxu0
      %v935 = vadd.f32 0.0, %v934
      %936 = vmatmul.bf16.gmra.mxu0 %v871
      %v937 = vpop.f32.mrf.mxu0
      %v938 = vadd.f32 0.0, %v937
      %v939 = vpop.f32.mrf.mxu0
      %v940 = vadd.f32 0.0, %v939
      %941 = vmatmul.bf16.gmra.mxu0 %v874
      %v942 = vpop.f32.mrf.mxu0
      %v943 = vadd.f32 0.0, %v942
      %v944 = vpop.f32.mrf.mxu0
      %v945 = vadd.f32 0.0, %v944
      %946 = vmatmul.bf16.gmra.mxu0 %v877
      %v947 = vpop.f32.mrf.mxu0
      %v948 = vadd.f32 0.0, %v947
      %v949 = vpop.f32.mrf.mxu0
      %v950 = vadd.f32 0.0, %v949
      %951 = vdwg.mxu0
      %v952 = vld [vmem:[#allocation3] sm:$0xff]
      %v953 = vld [vmem:[#allocation3 + $0x8] sm:$0xff]
      %v954 = vld [vmem:[#allocation3 + $0x10] sm:$0xff]
      %v955 = vld [vmem:[#allocation3 + $0x18] sm:$0xff]
      %v956 = vld [vmem:[#allocation3 + $0x20] sm:$0xff]
      %v957 = vld [vmem:[#allocation3 + $0x28] sm:$0xff]
      %v958 = vld [vmem:[#allocation3 + $0x30] sm:$0xff]
      %v959 = vld [vmem:[#allocation3 + $0x38] sm:$0xff]
      %v960 = vld [vmem:[#allocation3 + $0x40] sm:$0xff]
      %v961 = vld [vmem:[#allocation3 + $0x48] sm:$0xff]
      %v962 = vld [vmem:[#allocation3 + $0x50] sm:$0xff]
      %v963 = vld [vmem:[#allocation3 + $0x58] sm:$0xff]
      %v964 = vld [vmem:[#allocation3 + $0x60] sm:$0xff]
      %v965 = vld [vmem:[#allocation3 + $0x68] sm:$0xff]
      %v966 = vld [vmem:[#allocation3 + $0x70] sm:$0xff]
      %v967 = vld [vmem:[#allocation3 + $0x78] sm:$0xff]
      %968 = vmax.xlane.f32.xlu0 %v913
      %v969 = vpop.xlane.xlu0 %968
      %970 = vmax.xlane.f32.xlu0 %v915
      %v971 = vpop.xlane.xlu0 %970
      %972 = vmax.xlane.f32.xlu0 %v918
      %v973 = vpop.xlane.xlu0 %972
      %974 = vmax.xlane.f32.xlu0 %v920
      %v975 = vpop.xlane.xlu0 %974
      %976 = vmax.xlane.f32.xlu0 %v923
      %v977 = vpop.xlane.xlu0 %976
      %978 = vmax.xlane.f32.xlu0 %v925
      %v979 = vpop.xlane.xlu0 %978
      %980 = vmax.xlane.f32.xlu0 %v928
      %v981 = vpop.xlane.xlu0 %980
      %982 = vmax.xlane.f32.xlu0 %v930
      %v983 = vpop.xlane.xlu0 %982
      %984 = vmax.xlane.f32.xlu0 %v933
      %v985 = vpop.xlane.xlu0 %984
      %986 = vmax.xlane.f32.xlu0 %v935
      %v987 = vpop.xlane.xlu0 %986
      %988 = vmax.xlane.f32.xlu0 %v938
      %v989 = vpop.xlane.xlu0 %988
      %990 = vmax.xlane.f32.xlu0 %v940
      %v991 = vpop.xlane.xlu0 %990
      %992 = vmax.xlane.f32.xlu0 %v943
      %v993 = vpop.xlane.xlu0 %992
      %994 = vmax.xlane.f32.xlu0 %v945
      %v995 = vpop.xlane.xlu0 %994
      %996 = vmax.xlane.f32.xlu0 %v948
      %v997 = vpop.xlane.xlu0 %996
      %998 = vmax.xlane.f32.xlu0 %v950
      %v999 = vpop.xlane.xlu0 %998
      %v1000 = vmax.f32 %v952, %v969
      %v1001 = vmax.f32 %v953, %v971
      %v1002 = vmax.f32 %v954, %v973
      %v1003 = vmax.f32 %v955, %v975
      %v1004 = vmax.f32 %v956, %v977
      %v1005 = vmax.f32 %v957, %v979
      %v1006 = vmax.f32 %v958, %v981
      %v1007 = vmax.f32 %v959, %v983
      %v1008 = vmax.f32 %v960, %v985
      %v1009 = vmax.f32 %v961, %v987
      %v1010 = vmax.f32 %v962, %v989
      %v1011 = vmax.f32 %v963, %v991
      %v1012 = vmax.f32 %v964, %v993
      %v1013 = vmax.f32 %v965, %v995
      %v1014 = vmax.f32 %v966, %v997
      %v1015 = vmax.f32 %v967, %v999
      %v1016 = vsub.f32 %v952, %v1000
      %v1017 = vsub.f32 %v953, %v1001
      %v1018 = vsub.f32 %v954, %v1002
      %v1019 = vsub.f32 %v955, %v1003
      %v1020 = vsub.f32 %v956, %v1004
      %v1021 = vsub.f32 %v957, %v1005
      %v1022 = vsub.f32 %v958, %v1006
      %v1023 = vsub.f32 %v959, %v1007
      %v1024 = vsub.f32 %v960, %v1008
      %v1025 = vsub.f32 %v961, %v1009
      %v1026 = vsub.f32 %v962, %v1010
      %v1027 = vsub.f32 %v963, %v1011
      %v1028 = vsub.f32 %v964, %v1012
      %v1029 = vsub.f32 %v965, %v1013
      %v1030 = vsub.f32 %v966, %v1014
      %v1031 = vsub.f32 %v967, %v1015
      %v1032 = vmul.f32 %v1016, 1.442695
      %v1033 = vpow.pop %v1032
      %v1034 = vmul.f32 %v1017, 1.442695
      %v1035 = vpow.pop %v1034
      %v1036 = vmul.f32 %v1018, 1.442695
      %v1037 = vpow.pop %v1036
      %v1038 = vmul.f32 %v1019, 1.442695
      %v1039 = vpow.pop %v1038
      %v1040 = vmul.f32 %v1020, 1.442695
      %v1041 = vpow.pop %v1040
      %v1042 = vmul.f32 %v1021, 1.442695
      %v1043 = vpow.pop %v1042
      %v1044 = vmul.f32 %v1022, 1.442695
      %v1045 = vpow.pop %v1044
      %v1046 = vmul.f32 %v1023, 1.442695
      %v1047 = vpow.pop %v1046
      %v1048 = vmul.f32 %v1024, 1.442695
      %v1049 = vpow.pop %v1048
      %v1050 = vmul.f32 %v1025, 1.442695
      %v1051 = vpow.pop %v1050
      %v1052 = vmul.f32 %v1026, 1.442695
      %v1053 = vpow.pop %v1052
      %v1054 = vmul.f32 %v1027, 1.442695
      %v1055 = vpow.pop %v1054
      %v1056 = vmul.f32 %v1028, 1.442695
      %v1057 = vpow.pop %v1056
      %v1058 = vmul.f32 %v1029, 1.442695
      %v1059 = vpow.pop %v1058
      %v1060 = vmul.f32 %v1030, 1.442695
      %v1061 = vpow.pop %v1060
      %v1062 = vmul.f32 %v1031, 1.442695
      %v1063 = vpow.pop %v1062
      %1065 = vset.pattern.permute.xlu0 0
      %1066 = vperm.xlu0 %1065, %v1000
      %v1067 = vpop.permute.xlu0 %1066
      %1070 = vset.pattern.permute.xlu0 0
      %1071 = vperm.xlu0 %1070, %v1001
      %v1072 = vpop.permute.xlu0 %1071
      %1075 = vset.pattern.permute.xlu0 0
      %1076 = vperm.xlu0 %1075, %v1002
      %v1077 = vpop.permute.xlu0 %1076
      %1080 = vset.pattern.permute.xlu0 0
      %1081 = vperm.xlu0 %1080, %v1003
      %v1082 = vpop.permute.xlu0 %1081
      %1085 = vset.pattern.permute.xlu0 0
      %1086 = vperm.xlu0 %1085, %v1004
      %v1087 = vpop.permute.xlu0 %1086
      %1090 = vset.pattern.permute.xlu0 0
      %1091 = vperm.xlu0 %1090, %v1005
      %v1092 = vpop.permute.xlu0 %1091
      %1095 = vset.pattern.permute.xlu0 0
      %1096 = vperm.xlu0 %1095, %v1006
      %v1097 = vpop.permute.xlu0 %1096
      %1100 = vset.pattern.permute.xlu0 0
      %1101 = vperm.xlu0 %1100, %v1007
      %v1102 = vpop.permute.xlu0 %1101
      %1105 = vset.pattern.permute.xlu0 0
      %1106 = vperm.xlu0 %1105, %v1008
      %v1107 = vpop.permute.xlu0 %1106
      %1110 = vset.pattern.permute.xlu0 0
      %1111 = vperm.xlu0 %1110, %v1009
      %v1112 = vpop.permute.xlu0 %1111
      %1115 = vset.pattern.permute.xlu0 0
      %1116 = vperm.xlu0 %1115, %v1010
      %v1117 = vpop.permute.xlu0 %1116
      %1120 = vset.pattern.permute.xlu0 0
      %1121 = vperm.xlu0 %1120, %v1011
      %v1122 = vpop.permute.xlu0 %1121
      %1125 = vset.pattern.permute.xlu0 0
      %1126 = vperm.xlu0 %1125, %v1012
      %v1127 = vpop.permute.xlu0 %1126
      %1130 = vset.pattern.permute.xlu0 0
      %1131 = vperm.xlu0 %1130, %v1013
      %v1132 = vpop.permute.xlu0 %1131
      %1135 = vset.pattern.permute.xlu0 0
      %1136 = vperm.xlu0 %1135, %v1014
      %v1137 = vpop.permute.xlu0 %1136
      %1140 = vset.pattern.permute.xlu0 0
      %1141 = vperm.xlu0 %1140, %v1015
      %v1142 = vpop.permute.xlu0 %1141
      %v1144 = vsub.f32 %v913, %v1067
      %v1145 = vsub.f32 %v915, %v1072
      %v1146 = vsub.f32 %v918, %v1077
      %v1147 = vsub.f32 %v920, %v1082
      %v1148 = vsub.f32 %v923, %v1087
      %v1149 = vsub.f32 %v925, %v1092
      %v1150 = vsub.f32 %v928, %v1097
      %v1151 = vsub.f32 %v930, %v1102
      %v1152 = vsub.f32 %v933, %v1107
      %v1153 = vsub.f32 %v935, %v1112
      %v1154 = vsub.f32 %v938, %v1117
      %v1155 = vsub.f32 %v940, %v1122
      %v1156 = vsub.f32 %v943, %v1127
      %v1157 = vsub.f32 %v945, %v1132
      %v1158 = vsub.f32 %v948, %v1137
      %v1159 = vsub.f32 %v950, %v1142
      %v1160 = vmul.f32 %v1144, 1.442695
      %v1161 = vpow.pop %v1160
      %v1162 = vmul.f32 %v1145, 1.442695
      %v1163 = vpow.pop %v1162
      %v1164 = vmul.f32 %v1146, 1.442695
      %v1165 = vpow.pop %v1164
      %v1166 = vmul.f32 %v1147, 1.442695
      %v1167 = vpow.pop %v1166
      %v1168 = vmul.f32 %v1148, 1.442695
      %v1169 = vpow.pop %v1168
      %v1170 = vmul.f32 %v1149, 1.442695
      %v1171 = vpow.pop %v1170
      %v1172 = vmul.f32 %v1150, 1.442695
      %v1173 = vpow.pop %v1172
      %v1174 = vmul.f32 %v1151, 1.442695
      %v1175 = vpow.pop %v1174
      %v1176 = vmul.f32 %v1152, 1.442695
      %v1177 = vpow.pop %v1176
      %v1178 = vmul.f32 %v1153, 1.442695
      %v1179 = vpow.pop %v1178
      %v1180 = vmul.f32 %v1154, 1.442695
      %v1181 = vpow.pop %v1180
      %v1182 = vmul.f32 %v1155, 1.442695
      %v1183 = vpow.pop %v1182
      %v1184 = vmul.f32 %v1156, 1.442695
      %v1185 = vpow.pop %v1184
      %v1186 = vmul.f32 %v1157, 1.442695
      %v1187 = vpow.pop %v1186
      %v1188 = vmul.f32 %v1158, 1.442695
      %v1189 = vpow.pop %v1188
      %v1190 = vmul.f32 %v1159, 1.442695
      %v1191 = vpow.pop %v1190
      %v1192 = vld [vmem:[#allocation4] sm:$0xff]
      %v1193 = vld [vmem:[#allocation4 + $0x8] sm:$0xff]
      %v1194 = vld [vmem:[#allocation4 + $0x10] sm:$0xff]
      %v1195 = vld [vmem:[#allocation4 + $0x18] sm:$0xff]
      %v1196 = vld [vmem:[#allocation4 + $0x20] sm:$0xff]
      %v1197 = vld [vmem:[#allocation4 + $0x28] sm:$0xff]
      %v1198 = vld [vmem:[#allocation4 + $0x30] sm:$0xff]
      %v1199 = vld [vmem:[#allocation4 + $0x38] sm:$0xff]
      %v1200 = vld [vmem:[#allocation4 + $0x40] sm:$0xff]
      %v1201 = vld [vmem:[#allocation4 + $0x48] sm:$0xff]
      %v1202 = vld [vmem:[#allocation4 + $0x50] sm:$0xff]
      %v1203 = vld [vmem:[#allocation4 + $0x58] sm:$0xff]
      %v1204 = vld [vmem:[#allocation4 + $0x60] sm:$0xff]
      %v1205 = vld [vmem:[#allocation4 + $0x68] sm:$0xff]
      %v1206 = vld [vmem:[#allocation4 + $0x70] sm:$0xff]
      %v1207 = vld [vmem:[#allocation4 + $0x78] sm:$0xff]
      %v1208 = vmul.f32 %v1033, %v1192
      %v1209 = vmul.f32 %v1035, %v1193
      %v1210 = vmul.f32 %v1037, %v1194
      %v1211 = vmul.f32 %v1039, %v1195
      %v1212 = vmul.f32 %v1041, %v1196
      %v1213 = vmul.f32 %v1043, %v1197
      %v1214 = vmul.f32 %v1045, %v1198
      %v1215 = vmul.f32 %v1047, %v1199
      %v1216 = vmul.f32 %v1049, %v1200
      %v1217 = vmul.f32 %v1051, %v1201
      %v1218 = vmul.f32 %v1053, %v1202
      %v1219 = vmul.f32 %v1055, %v1203
      %v1220 = vmul.f32 %v1057, %v1204
      %v1221 = vmul.f32 %v1059, %v1205
      %v1222 = vmul.f32 %v1061, %v1206
      %v1223 = vmul.f32 %v1063, %v1207
      %1224 = vadd.xlane.f32.xlu0 %v1161
      %v1225 = vpop.xlane.xlu0 %1224
      %1226 = vadd.xlane.f32.xlu0 %v1163
      %v1227 = vpop.xlane.xlu0 %1226
      %1228 = vadd.xlane.f32.xlu0 %v1165
      %v1229 = vpop.xlane.xlu0 %1228
      %1230 = vadd.xlane.f32.xlu0 %v1167
      %v1231 = vpop.xlane.xlu0 %1230
      %1232 = vadd.xlane.f32.xlu0 %v1169
      %v1233 = vpop.xlane.xlu0 %1232
      %1234 = vadd.xlane.f32.xlu0 %v1171
      %v1235 = vpop.xlane.xlu0 %1234
      %1236 = vadd.xlane.f32.xlu0 %v1173
      %v1237 = vpop.xlane.xlu0 %1236
      %1238 = vadd.xlane.f32.xlu0 %v1175
      %v1239 = vpop.xlane.xlu0 %1238
      %1240 = vadd.xlane.f32.xlu0 %v1177
      %v1241 = vpop.xlane.xlu0 %1240
      %1242 = vadd.xlane.f32.xlu0 %v1179
      %v1243 = vpop.xlane.xlu0 %1242
      %1244 = vadd.xlane.f32.xlu0 %v1181
      %v1245 = vpop.xlane.xlu0 %1244
      %1246 = vadd.xlane.f32.xlu0 %v1183
      %v1247 = vpop.xlane.xlu0 %1246
      %1248 = vadd.xlane.f32.xlu0 %v1185
      %v1249 = vpop.xlane.xlu0 %1248
      %1250 = vadd.xlane.f32.xlu0 %v1187
      %v1251 = vpop.xlane.xlu0 %1250
      %1252 = vadd.xlane.f32.xlu0 %v1189
      %v1253 = vpop.xlane.xlu0 %1252
      %1254 = vadd.xlane.f32.xlu0 %v1191
      %v1255 = vpop.xlane.xlu0 %1254
      %v1256 = vadd.f32 %v1208, %v1225
      %v1257 = vadd.f32 %v1209, %v1227
      %v1258 = vadd.f32 %v1210, %v1229
      %v1259 = vadd.f32 %v1211, %v1231
      %v1260 = vadd.f32 %v1212, %v1233
      %v1261 = vadd.f32 %v1213, %v1235
      %v1262 = vadd.f32 %v1214, %v1237
      %v1263 = vadd.f32 %v1215, %v1239
      %v1264 = vadd.f32 %v1216, %v1241
      %v1265 = vadd.f32 %v1217, %v1243
      %v1266 = vadd.f32 %v1218, %v1245
      %v1267 = vadd.f32 %v1219, %v1247
      %v1268 = vadd.f32 %v1220, %v1249
      %v1269 = vadd.f32 %v1221, %v1251
      %v1270 = vadd.f32 %v1222, %v1253
      %v1271 = vadd.f32 %v1223, %v1255
      %vm1272 = vcmask 7168
      %1273 = vst.msk [vmem:[#allocation4] sm:$0xff] %vm1272, %v1256
      %1274 = vst.msk [vmem:[#allocation4 + $0x8] sm:$0xff] %vm1272, %v1257
      %1275 = vst.msk [vmem:[#allocation4 + $0x10] sm:$0xff] %vm1272, %v1258
      %1276 = vst.msk [vmem:[#allocation4 + $0x18] sm:$0xff] %vm1272, %v1259
      %1277 = vst.msk [vmem:[#allocation4 + $0x20] sm:$0xff] %vm1272, %v1260
      %1278 = vst.msk [vmem:[#allocation4 + $0x28] sm:$0xff] %vm1272, %v1261
      %1279 = vst.msk [vmem:[#allocation4 + $0x30] sm:$0xff] %vm1272, %v1262
      %1280 = vst.msk [vmem:[#allocation4 + $0x38] sm:$0xff] %vm1272, %v1263
      %1281 = vst.msk [vmem:[#allocation4 + $0x40] sm:$0xff] %vm1272, %v1264
      %1282 = vst.msk [vmem:[#allocation4 + $0x48] sm:$0xff] %vm1272, %v1265
      %1283 = vst.msk [vmem:[#allocation4 + $0x50] sm:$0xff] %vm1272, %v1266
      %1284 = vst.msk [vmem:[#allocation4 + $0x58] sm:$0xff] %vm1272, %v1267
      %1285 = vst.msk [vmem:[#allocation4 + $0x60] sm:$0xff] %vm1272, %v1268
      %1286 = vst.msk [vmem:[#allocation4 + $0x68] sm:$0xff] %vm1272, %v1269
      %1287 = vst.msk [vmem:[#allocation4 + $0x70] sm:$0xff] %vm1272, %v1270
      %1288 = vst.msk [vmem:[#allocation4 + $0x78] sm:$0xff] %vm1272, %v1271
      %v1289 = vld [vmem:[#allocation5] sm:$0xff]
      %v1290 = vld [vmem:[#allocation5 + $0x8] sm:$0xff]
      %v1291 = vld [vmem:[#allocation5 + $0x10] sm:$0xff]
      %v1292 = vld [vmem:[#allocation5 + $0x18] sm:$0xff]
      %v1293 = vld [vmem:[#allocation5 + $0x20] sm:$0xff]
      %v1294 = vld [vmem:[#allocation5 + $0x28] sm:$0xff]
      %v1295 = vld [vmem:[#allocation5 + $0x30] sm:$0xff]
      %v1296 = vld [vmem:[#allocation5 + $0x38] sm:$0xff]
      %v1297 = vld [vmem:[#allocation5 + $0x40] sm:$0xff]
      %v1298 = vld [vmem:[#allocation5 + $0x48] sm:$0xff]
      %v1299 = vld [vmem:[#allocation5 + $0x50] sm:$0xff]
      %v1300 = vld [vmem:[#allocation5 + $0x58] sm:$0xff]
      %v1301 = vld [vmem:[#allocation5 + $0x60] sm:$0xff]
      %v1302 = vld [vmem:[#allocation5 + $0x68] sm:$0xff]
      %v1303 = vld [vmem:[#allocation5 + $0x70] sm:$0xff]
      %v1304 = vld [vmem:[#allocation5 + $0x78] sm:$0xff]
      %1306 = vset.pattern.permute.xlu0 0
      %1307 = vperm.xlu0 %1306, %v1033
      %v1308 = vpop.permute.xlu0 %1307
      %1311 = vset.pattern.permute.xlu0 0
      %1312 = vperm.xlu0 %1311, %v1035
      %v1313 = vpop.permute.xlu0 %1312
      %1316 = vset.pattern.permute.xlu0 0
      %1317 = vperm.xlu0 %1316, %v1037
      %v1318 = vpop.permute.xlu0 %1317
      %1321 = vset.pattern.permute.xlu0 0
      %1322 = vperm.xlu0 %1321, %v1039
      %v1323 = vpop.permute.xlu0 %1322
      %1326 = vset.pattern.permute.xlu0 0
      %1327 = vperm.xlu0 %1326, %v1041
      %v1328 = vpop.permute.xlu0 %1327
      %1331 = vset.pattern.permute.xlu0 0
      %1332 = vperm.xlu0 %1331, %v1043
      %v1333 = vpop.permute.xlu0 %1332
      %1336 = vset.pattern.permute.xlu0 0
      %1337 = vperm.xlu0 %1336, %v1045
      %v1338 = vpop.permute.xlu0 %1337
      %1341 = vset.pattern.permute.xlu0 0
      %1342 = vperm.xlu0 %1341, %v1047
      %v1343 = vpop.permute.xlu0 %1342
      %1346 = vset.pattern.permute.xlu0 0
      %1347 = vperm.xlu0 %1346, %v1049
      %v1348 = vpop.permute.xlu0 %1347
      %1351 = vset.pattern.permute.xlu0 0
      %1352 = vperm.xlu0 %1351, %v1051
      %v1353 = vpop.permute.xlu0 %1352
      %1356 = vset.pattern.permute.xlu0 0
      %1357 = vperm.xlu0 %1356, %v1053
      %v1358 = vpop.permute.xlu0 %1357
      %1361 = vset.pattern.permute.xlu0 0
      %1362 = vperm.xlu0 %1361, %v1055
      %v1363 = vpop.permute.xlu0 %1362
      %1366 = vset.pattern.permute.xlu0 0
      %1367 = vperm.xlu0 %1366, %v1057
      %v1368 = vpop.permute.xlu0 %1367
      %1371 = vset.pattern.permute.xlu0 0
      %1372 = vperm.xlu0 %1371, %v1059
      %v1373 = vpop.permute.xlu0 %1372
      %1376 = vset.pattern.permute.xlu0 0
      %1377 = vperm.xlu0 %1376, %v1061
      %v1378 = vpop.permute.xlu0 %1377
      %1381 = vset.pattern.permute.xlu0 0
      %1382 = vperm.xlu0 %1381, %v1063
      %v1383 = vpop.permute.xlu0 %1382
      %v1385 = vmul.f32 %v1308, %v1289
      %v1386 = vmul.f32 %v1313, %v1290
      %v1387 = vmul.f32 %v1318, %v1291
      %v1388 = vmul.f32 %v1323, %v1292
      %v1389 = vmul.f32 %v1328, %v1293
      %v1390 = vmul.f32 %v1333, %v1294
      %v1391 = vmul.f32 %v1338, %v1295
      %v1392 = vmul.f32 %v1343, %v1296
      %v1393 = vmul.f32 %v1348, %v1297
      %v1394 = vmul.f32 %v1353, %v1298
      %v1395 = vmul.f32 %v1358, %v1299
      %v1396 = vmul.f32 %v1363, %v1300
      %v1397 = vmul.f32 %v1368, %v1301
      %v1398 = vmul.f32 %v1373, %v1302
      %v1399 = vmul.f32 %v1378, %v1303
      %v1400 = vmul.f32 %v1383, %v1304
      %v1401 = vpack.c.bf16 %v1163, %v1161
      %v1402 = vpack.c.bf16 %v1167, %v1165
      %v1403 = vpack.c.bf16 %v1171, %v1169
      %v1404 = vpack.c.bf16 %v1175, %v1173
      %v1405 = vpack.c.bf16 %v1179, %v1177
      %v1406 = vpack.c.bf16 %v1183, %v1181
      %v1407 = vpack.c.bf16 %v1187, %v1185
      %v1408 = vpack.c.bf16 %v1191, %v1189
      %1417 = vrot.lane.b32.xlu0 %v791, 96
      %v1418 = vpop.permute.xlu0 %1417
      %1419 = vrot.lane.b32.xlu0 %v792, 96
      %v1420 = vpop.permute.xlu0 %1419
      %1421 = vrot.lane.b32.xlu0 %v793, 96
      %v1422 = vpop.permute.xlu0 %1421
      %1423 = vrot.lane.b32.xlu0 %v794, 96
      %v1424 = vpop.permute.xlu0 %1423
      %1425 = vrot.lane.b32.xlu0 %v795, 96
      %v1426 = vpop.permute.xlu0 %1425
      %1427 = vrot.lane.b32.xlu0 %v796, 96
      %v1428 = vpop.permute.xlu0 %1427
      %1429 = vrot.lane.b32.xlu0 %v797, 96
      %v1430 = vpop.permute.xlu0 %1429
      %1431 = vrot.lane.b32.xlu0 %v798, 96
      %v1432 = vpop.permute.xlu0 %1431
      %1441 = vmatpush.bf16.msra.mxu0 %v1432
      %1442 = vmatpush.bf16.msra.mxu0 %v1430
      %1443 = vmatpush.bf16.msra.mxu0 %v1428
      %1444 = vmatpush.bf16.msra.mxu0 %v1426
      %1445 = vmatpush.bf16.msra.mxu0 %v1424
      %1446 = vmatpush.bf16.msra.mxu0 %v1422
      %1447 = vmatpush.bf16.msra.mxu0 %v1420
      %1448 = vmatpush.bf16.msra.mxu0 %v1418
      %1449 = vmatmul.bf16.gmra.mxu0 %v1401
      %v1450 = vpop.f32.mrf.mxu0
      %v1451 = vadd.f32 0.0, %v1450
      %v1452 = vpop.f32.mrf.mxu0
      %v1453 = vadd.f32 0.0, %v1452
      %1454 = vmatmul.bf16.gmra.mxu0 %v1402
      %v1455 = vpop.f32.mrf.mxu0
      %v1456 = vadd.f32 0.0, %v1455
      %v1457 = vpop.f32.mrf.mxu0
      %v1458 = vadd.f32 0.0, %v1457
      %1459 = vmatmul.bf16.gmra.mxu0 %v1403
      %v1460 = vpop.f32.mrf.mxu0
      %v1461 = vadd.f32 0.0, %v1460
      %v1462 = vpop.f32.mrf.mxu0
      %v1463 = vadd.f32 0.0, %v1462
      %1464 = vmatmul.bf16.gmra.mxu0 %v1404
      %v1465 = vpop.f32.mrf.mxu0
      %v1466 = vadd.f32 0.0, %v1465
      %v1467 = vpop.f32.mrf.mxu0
      %v1468 = vadd.f32 0.0, %v1467
      %1469 = vmatmul.bf16.gmra.mxu0 %v1405
      %v1470 = vpop.f32.mrf.mxu0
      %v1471 = vadd.f32 0.0, %v1470
      %v1472 = vpop.f32.mrf.mxu0
      %v1473 = vadd.f32 0.0, %v1472
      %1474 = vmatmul.bf16.gmra.mxu0 %v1406
      %v1475 = vpop.f32.mrf.mxu0
      %v1476 = vadd.f32 0.0, %v1475
      %v1477 = vpop.f32.mrf.mxu0
      %v1478 = vadd.f32 0.0, %v1477
      %1479 = vmatmul.bf16.gmra.mxu0 %v1407
      %v1480 = vpop.f32.mrf.mxu0
      %v1481 = vadd.f32 0.0, %v1480
      %v1482 = vpop.f32.mrf.mxu0
      %v1483 = vadd.f32 0.0, %v1482
      %1484 = vmatmul.bf16.gmra.mxu0 %v1408
      %v1485 = vpop.f32.mrf.mxu0
      %v1486 = vadd.f32 0.0, %v1485
      %v1487 = vpop.f32.mrf.mxu0
      %v1488 = vadd.f32 0.0, %v1487
      %1489 = vdwg.mxu0
      %v1490 = vadd.f32 %v1385, %v1451
      %v1491 = vadd.f32 %v1386, %v1453
      %v1492 = vadd.f32 %v1387, %v1456
      %v1493 = vadd.f32 %v1388, %v1458
      %v1494 = vadd.f32 %v1389, %v1461
      %v1495 = vadd.f32 %v1390, %v1463
      %v1496 = vadd.f32 %v1391, %v1466
      %v1497 = vadd.f32 %v1392, %v1468
      %v1498 = vadd.f32 %v1393, %v1471
      %v1499 = vadd.f32 %v1394, %v1473
      %v1500 = vadd.f32 %v1395, %v1476
      %v1501 = vadd.f32 %v1396, %v1478
      %v1502 = vadd.f32 %v1397, %v1481
      %v1503 = vadd.f32 %v1398, %v1483
      %v1504 = vadd.f32 %v1399, %v1486
      %v1505 = vadd.f32 %v1400, %v1488
      %1506 = vst.msk [vmem:[#allocation5] sm:$0xff] %vm717, %v1490
      %1507 = vst.msk [vmem:[#allocation5 + $0x8] sm:$0xff] %vm717, %v1491
      %1508 = vst.msk [vmem:[#allocation5 + $0x10] sm:$0xff] %vm717, %v1492
      %1509 = vst.msk [vmem:[#allocation5 + $0x18] sm:$0xff] %vm717, %v1493
      %1510 = vst.msk [vmem:[#allocation5 + $0x20] sm:$0xff] %vm717, %v1494
      %1511 = vst.msk [vmem:[#allocation5 + $0x28] sm:$0xff] %vm717, %v1495
      %1512 = vst.msk [vmem:[#allocation5 + $0x30] sm:$0xff] %vm717, %v1496
      %1513 = vst.msk [vmem:[#allocation5 + $0x38] sm:$0xff] %vm717, %v1497
      %1514 = vst.msk [vmem:[#allocation5 + $0x40] sm:$0xff] %vm717, %v1498
      %1515 = vst.msk [vmem:[#allocation5 + $0x48] sm:$0xff] %vm717, %v1499
      %1516 = vst.msk [vmem:[#allocation5 + $0x50] sm:$0xff] %vm717, %v1500
      %1517 = vst.msk [vmem:[#allocation5 + $0x58] sm:$0xff] %vm717, %v1501
      %1518 = vst.msk [vmem:[#allocation5 + $0x60] sm:$0xff] %vm717, %v1502
      %1519 = vst.msk [vmem:[#allocation5 + $0x68] sm:$0xff] %vm717, %v1503
      %1520 = vst.msk [vmem:[#allocation5 + $0x70] sm:$0xff] %vm717, %v1504
      %1521 = vst.msk [vmem:[#allocation5 + $0x78] sm:$0xff] %vm717, %v1505
      %1522 = vst.msk [vmem:[#allocation3] sm:$0xff] %vm1272, %v1000
      %1523 = vst.msk [vmem:[#allocation3 + $0x8] sm:$0xff] %vm1272, %v1001
      %1524 = vst.msk [vmem:[#allocation3 + $0x10] sm:$0xff] %vm1272, %v1002
      %1525 = vst.msk [vmem:[#allocation3 + $0x18] sm:$0xff] %vm1272, %v1003
      %1526 = vst.msk [vmem:[#allocation3 + $0x20] sm:$0xff] %vm1272, %v1004
      %1527 = vst.msk [vmem:[#allocation3 + $0x28] sm:$0xff] %vm1272, %v1005
      %1528 = vst.msk [vmem:[#allocation3 + $0x30] sm:$0xff] %vm1272, %v1006
      %1529 = vst.msk [vmem:[#allocation3 + $0x38] sm:$0xff] %vm1272, %v1007
      %1530 = vst.msk [vmem:[#allocation3 + $0x40] sm:$0xff] %vm1272, %v1008
      %1531 = vst.msk [vmem:[#allocation3 + $0x48] sm:$0xff] %vm1272, %v1009
      %1532 = vst.msk [vmem:[#allocation3 + $0x50] sm:$0xff] %vm1272, %v1010
      %1533 = vst.msk [vmem:[#allocation3 + $0x58] sm:$0xff] %vm1272, %v1011
      %1534 = vst.msk [vmem:[#allocation3 + $0x60] sm:$0xff] %vm1272, %v1012
      %1535 = vst.msk [vmem:[#allocation3 + $0x68] sm:$0xff] %vm1272, %v1013
      %1536 = vst.msk [vmem:[#allocation3 + $0x70] sm:$0xff] %vm1272, %v1014
      %1537 = vst.msk [vmem:[#allocation3 + $0x78] sm:$0xff] %vm1272, %v1015
      %p1538 = scmp.eq.s32.totalorder %s26, 1
      // Predicated region
      $region57: #{video_style_transfer_forward.6} parent=51 // pred_check
        %p1539 = pneg %p1538
      $region58: #{video_style_transfer_forward.6} parent=51 // pred_check_branch
        %1541 = sbr.rel (%p1539) target = $region60
      $region59: #{video_style_transfer_forward.6} parent=51 // pred_region
        %v1542 = vld [vmem:[#allocation5] sm:$0xff]
        %v1543 = vld [vmem:[#allocation5 + $0x8] sm:$0xff]
        %v1544 = vld [vmem:[#allocation5 + $0x10] sm:$0xff]
        %v1545 = vld [vmem:[#allocation5 + $0x18] sm:$0xff]
        %v1546 = vld [vmem:[#allocation5 + $0x20] sm:$0xff]
        %v1547 = vld [vmem:[#allocation5 + $0x28] sm:$0xff]
        %v1548 = vld [vmem:[#allocation5 + $0x30] sm:$0xff]
        %v1549 = vld [vmem:[#allocation5 + $0x38] sm:$0xff]
        %v1550 = vld [vmem:[#allocation5 + $0x40] sm:$0xff]
        %v1551 = vld [vmem:[#allocation5 + $0x48] sm:$0xff]
        %v1552 = vld [vmem:[#allocation5 + $0x50] sm:$0xff]
        %v1553 = vld [vmem:[#allocation5 + $0x58] sm:$0xff]
        %v1554 = vld [vmem:[#allocation5 + $0x60] sm:$0xff]
        %v1555 = vld [vmem:[#allocation5 + $0x68] sm:$0xff]
        %v1556 = vld [vmem:[#allocation5 + $0x70] sm:$0xff]
        %v1557 = vld [vmem:[#allocation5 + $0x78] sm:$0xff]
        %v1558 = vld [vmem:[#allocation4] sm:$0xff]
        %v1559 = vld [vmem:[#allocation4 + $0x8] sm:$0xff]
        %v1560 = vld [vmem:[#allocation4 + $0x10] sm:$0xff]
        %v1561 = vld [vmem:[#allocation4 + $0x18] sm:$0xff]
        %v1562 = vld [vmem:[#allocation4 + $0x20] sm:$0xff]
        %v1563 = vld [vmem:[#allocation4 + $0x28] sm:$0xff]
        %v1564 = vld [vmem:[#allocation4 + $0x30] sm:$0xff]
        %v1565 = vld [vmem:[#allocation4 + $0x38] sm:$0xff]
        %v1566 = vld [vmem:[#allocation4 + $0x40] sm:$0xff]
        %v1567 = vld [vmem:[#allocation4 + $0x48] sm:$0xff]
        %v1568 = vld [vmem:[#allocation4 + $0x50] sm:$0xff]
        %v1569 = vld [vmem:[#allocation4 + $0x58] sm:$0xff]
        %v1570 = vld [vmem:[#allocation4 + $0x60] sm:$0xff]
        %v1571 = vld [vmem:[#allocation4 + $0x68] sm:$0xff]
        %v1572 = vld [vmem:[#allocation4 + $0x70] sm:$0xff]
        %v1573 = vld [vmem:[#allocation4 + $0x78] sm:$0xff]
        %v1574 = vrcp.pop %v1558
        %v1575 = vrcp.pop %v1559
        %v1576 = vrcp.pop %v1560
        %v1577 = vrcp.pop %v1561
        %v1578 = vrcp.pop %v1562
        %v1579 = vrcp.pop %v1563
        %v1580 = vrcp.pop %v1564
        %v1581 = vrcp.pop %v1565
        %v1582 = vrcp.pop %v1566
        %v1583 = vrcp.pop %v1567
        %v1584 = vrcp.pop %v1568
        %v1585 = vrcp.pop %v1569
        %v1586 = vrcp.pop %v1570
        %v1587 = vrcp.pop %v1571
        %v1588 = vrcp.pop %v1572
        %v1589 = vrcp.pop %v1573
        %1591 = vset.pattern.permute.xlu0 0
        %1592 = vperm.xlu0 %1591, %v1574
        %v1593 = vpop.permute.xlu0 %1592
        %1596 = vset.pattern.permute.xlu0 0
        %1597 = vperm.xlu0 %1596, %v1575
        %v1598 = vpop.permute.xlu0 %1597
        %1601 = vset.pattern.permute.xlu0 0
        %1602 = vperm.xlu0 %1601, %v1576
        %v1603 = vpop.permute.xlu0 %1602
        %1606 = vset.pattern.permute.xlu0 0
        %1607 = vperm.xlu0 %1606, %v1577
        %v1608 = vpop.permute.xlu0 %1607
        %1611 = vset.pattern.permute.xlu0 0
        %1612 = vperm.xlu0 %1611, %v1578
        %v1613 = vpop.permute.xlu0 %1612
        %1616 = vset.pattern.permute.xlu0 0
        %1617 = vperm.xlu0 %1616, %v1579
        %v1618 = vpop.permute.xlu0 %1617
        %1621 = vset.pattern.permute.xlu0 0
        %1622 = vperm.xlu0 %1621, %v1580
        %v1623 = vpop.permute.xlu0 %1622
        %1626 = vset.pattern.permute.xlu0 0
        %1627 = vperm.xlu0 %1626, %v1581
        %v1628 = vpop.permute.xlu0 %1627
        %1631 = vset.pattern.permute.xlu0 0
        %1632 = vperm.xlu0 %1631, %v1582
        %v1633 = vpop.permute.xlu0 %1632
        %1636 = vset.pattern.permute.xlu0 0
        %1637 = vperm.xlu0 %1636, %v1583
        %v1638 = vpop.permute.xlu0 %1637
        %1641 = vset.pattern.permute.xlu0 0
        %1642 = vperm.xlu0 %1641, %v1584
        %v1643 = vpop.permute.xlu0 %1642
        %1646 = vset.pattern.permute.xlu0 0
        %1647 = vperm.xlu0 %1646, %v1585
        %v1648 = vpop.permute.xlu0 %1647
        %1651 = vset.pattern.permute.xlu0 0
        %1652 = vperm.xlu0 %1651, %v1586
        %v1653 = vpop.permute.xlu0 %1652
        %1656 = vset.pattern.permute.xlu0 0
        %1657 = vperm.xlu0 %1656, %v1587
        %v1658 = vpop.permute.xlu0 %1657
        %1661 = vset.pattern.permute.xlu0 0
        %1662 = vperm.xlu0 %1661, %v1588
        %v1663 = vpop.permute.xlu0 %1662
        %1666 = vset.pattern.permute.xlu0 0
        %1667 = vperm.xlu0 %1666, %v1589
        %v1668 = vpop.permute.xlu0 %1667
        %v1670 = vmul.f32 %v1542, %v1593
        %v1671 = vmul.f32 %v1543, %v1598
        %v1672 = vmul.f32 %v1544, %v1603
        %v1673 = vmul.f32 %v1545, %v1608
        %v1674 = vmul.f32 %v1546, %v1613
        %v1675 = vmul.f32 %v1547, %v1618
        %v1676 = vmul.f32 %v1548, %v1623
        %v1677 = vmul.f32 %v1549, %v1628
        %v1678 = vmul.f32 %v1550, %v1633
        %v1679 = vmul.f32 %v1551, %v1638
        %v1680 = vmul.f32 %v1552, %v1643
        %v1681 = vmul.f32 %v1553, %v1648
        %v1682 = vmul.f32 %v1554, %v1653
        %v1683 = vmul.f32 %v1555, %v1658
        %v1684 = vmul.f32 %v1556, %v1663
        %v1685 = vmul.f32 %v1557, %v1668
        %v1686 = vpack.c.bf16 %v1671, %v1670
        %v1687 = vpack.c.bf16 %v1673, %v1672
        %v1688 = vpack.c.bf16 %v1675, %v1674
        %v1689 = vpack.c.bf16 %v1677, %v1676
        %v1690 = vpack.c.bf16 %v1679, %v1678
        %v1691 = vpack.c.bf16 %v1681, %v1680
        %v1692 = vpack.c.bf16 %v1683, %v1682
        %v1693 = vpack.c.bf16 %v1685, %v1684
        %v1694 = vld [vmem:[%s6] sm:$0xf]
        %v1695 = vld [vmem:[%s6 + $0x4] sm:$0xf]
        %v1696 = vld [vmem:[%s6 + $0x8] sm:$0xf]
        %v1697 = vld [vmem:[%s6 + $0xc] sm:$0xf]
        %v1698 = vld [vmem:[%s7] sm:$0x1]
        %v1700 = vperm.slane %v1698, 0
        %v1706 = vunpack.c.l.b16 %v1694
        %v1707 = vunpack.c.l.b16 %v1695
        %v1708 = vunpack.c.l.b16 %v1696
        %v1709 = vunpack.c.l.b16 %v1697
        %v1710 = vpack.c.b16 %v1707, %v1706
        %v1711 = vpack.c.b16 %v1709, %v1708
        %v1715 = vsel %vm717, %v1686, 0
        %v1718 = vsel %vm717, %v1687, 0
        %v1721 = vsel %vm717, %v1688, 0
        %v1724 = vsel %vm717, %v1689, 0
        %v1727 = vsel %vm717, %v1690, 0
        %v1730 = vsel %vm717, %v1691, 0
        %v1733 = vsel %vm717, %v1692, 0
        %v1736 = vsel %vm717, %v1693, 0
        %1738 = vmatpush.bf16.msra.mxu0 0
        %1739 = vmatpush.bf16.msra.mxu0 0
        %1740 = vmatpush.bf16.msra.mxu0 0
        %1741 = vmatpush.bf16.msra.mxu0 0
        %1742 = vmatpush.bf16.msra.mxu0 0
        %1743 = vmatpush.bf16.msra.mxu0 0
        %1744 = vmatpush.bf16.msra.mxu0 %v1711
        %1745 = vmatpush.bf16.msra.mxu0 %v1710
        %1746 = vmatmul.bf16.gmra.mxu0 %v1715
        %v1747 = vpop.f32.mrf.mxu0
        %v1748 = vadd.f32 %v1700, %v1747
        %v1749 = vpop.f32.mrf.mxu0
        %v1750 = vadd.f32 %v1700, %v1749
        %1751 = vmatmul.bf16.gmra.mxu0 %v1718
        %v1752 = vpop.f32.mrf.mxu0
        %v1753 = vadd.f32 %v1700, %v1752
        %v1754 = vpop.f32.mrf.mxu0
        %v1755 = vadd.f32 %v1700, %v1754
        %1756 = vmatmul.bf16.gmra.mxu0 %v1721
        %v1757 = vpop.f32.mrf.mxu0
        %v1758 = vadd.f32 %v1700, %v1757
        %v1759 = vpop.f32.mrf.mxu0
        %v1760 = vadd.f32 %v1700, %v1759
        %1761 = vmatmul.bf16.gmra.mxu0 %v1724
        %v1762 = vpop.f32.mrf.mxu0
        %v1763 = vadd.f32 %v1700, %v1762
        %v1764 = vpop.f32.mrf.mxu0
        %v1765 = vadd.f32 %v1700, %v1764
        %1766 = vmatmul.bf16.gmra.mxu0 %v1727
        %v1767 = vpop.f32.mrf.mxu0
        %v1768 = vadd.f32 %v1700, %v1767
        %v1769 = vpop.f32.mrf.mxu0
        %v1770 = vadd.f32 %v1700, %v1769
        %1771 = vmatmul.bf16.gmra.mxu0 %v1730
        %v1772 = vpop.f32.mrf.mxu0
        %v1773 = vadd.f32 %v1700, %v1772
        %v1774 = vpop.f32.mrf.mxu0
        %v1775 = vadd.f32 %v1700, %v1774
        %1776 = vmatmul.bf16.gmra.mxu0 %v1733
        %v1777 = vpop.f32.mrf.mxu0
        %v1778 = vadd.f32 %v1700, %v1777
        %v1779 = vpop.f32.mrf.mxu0
        %v1780 = vadd.f32 %v1700, %v1779
        %1781 = vmatmul.bf16.gmra.mxu0 %v1736
        %v1782 = vpop.f32.mrf.mxu0
        %v1783 = vadd.f32 %v1700, %v1782
        %v1784 = vpop.f32.mrf.mxu0
        %v1785 = vadd.f32 %v1700, %v1784
        %1786 = vdwg.mxu0
        %v1787 = vld [vmem:[%s366] sm:$0xf]
        %v1788 = vld [vmem:[%s366 + $0x4] sm:$0xf]
        %v1789 = vld [vmem:[%s366 + $0x8] sm:$0xf]
        %v1790 = vld [vmem:[%s366 + $0xc] sm:$0xf]
        %v1791 = vld [vmem:[%s366 + $0x10] sm:$0xf]
        %v1792 = vld [vmem:[%s366 + $0x14] sm:$0xf]
        %v1793 = vld [vmem:[%s366 + $0x18] sm:$0xf]
        %v1794 = vld [vmem:[%s366 + $0x1c] sm:$0xf]
        %v1795 = vld [vmem:[%s366 + $0x20] sm:$0xf]
        %v1796 = vld [vmem:[%s366 + $0x24] sm:$0xf]
        %v1797 = vld [vmem:[%s366 + $0x28] sm:$0xf]
        %v1798 = vld [vmem:[%s366 + $0x2c] sm:$0xf]
        %v1799 = vld [vmem:[%s366 + $0x30] sm:$0xf]
        %v1800 = vld [vmem:[%s366 + $0x34] sm:$0xf]
        %v1801 = vld [vmem:[%s366 + $0x38] sm:$0xf]
        %v1802 = vld [vmem:[%s366 + $0x3c] sm:$0xf]
        %v1803 = vunpack.c.l.bf16 %v1787
        %v1804 = vunpack.c.l.bf16 %v1788
        %v1805 = vunpack.c.l.bf16 %v1789
        %v1806 = vunpack.c.l.bf16 %v1790
        %v1807 = vunpack.c.l.bf16 %v1791
        %v1808 = vunpack.c.l.bf16 %v1792
        %v1809 = vunpack.c.l.bf16 %v1793
        %v1810 = vunpack.c.l.bf16 %v1794
        %v1811 = vunpack.c.l.bf16 %v1795
        %v1812 = vunpack.c.l.bf16 %v1796
        %v1813 = vunpack.c.l.bf16 %v1797
        %v1814 = vunpack.c.l.bf16 %v1798
        %v1815 = vunpack.c.l.bf16 %v1799
        %v1816 = vunpack.c.l.bf16 %v1800
        %v1817 = vunpack.c.l.bf16 %v1801
        %v1818 = vunpack.c.l.bf16 %v1802
        %v1819 = vadd.f32 %v1748, %v1803
        %v1820 = vadd.f32 %v1750, %v1804
        %v1821 = vadd.f32 %v1753, %v1805
        %v1822 = vadd.f32 %v1755, %v1806
        %v1823 = vadd.f32 %v1758, %v1807
        %v1824 = vadd.f32 %v1760, %v1808
        %v1825 = vadd.f32 %v1763, %v1809
        %v1826 = vadd.f32 %v1765, %v1810
        %v1827 = vadd.f32 %v1768, %v1811
        %v1828 = vadd.f32 %v1770, %v1812
        %v1829 = vadd.f32 %v1773, %v1813
        %v1830 = vadd.f32 %v1775, %v1814
        %v1831 = vadd.f32 %v1778, %v1815
        %v1832 = vadd.f32 %v1780, %v1816
        %v1833 = vadd.f32 %v1783, %v1817
        %v1834 = vadd.f32 %v1785, %v1818
        %v1835 = vpack.c.bf16 %v1819, %v1819
        %v1836 = vpack.c.bf16 %v1820, %v1820
        %v1837 = vpack.c.bf16 %v1821, %v1821
        %v1838 = vpack.c.bf16 %v1822, %v1822
        %v1839 = vpack.c.bf16 %v1823, %v1823
        %v1840 = vpack.c.bf16 %v1824, %v1824
        %v1841 = vpack.c.bf16 %v1825, %v1825
        %v1842 = vpack.c.bf16 %v1826, %v1826
        %v1843 = vpack.c.bf16 %v1827, %v1827
        %v1844 = vpack.c.bf16 %v1828, %v1828
        %v1845 = vpack.c.bf16 %v1829, %v1829
        %v1846 = vpack.c.bf16 %v1830, %v1830
        %v1847 = vpack.c.bf16 %v1831, %v1831
        %v1848 = vpack.c.bf16 %v1832, %v1832
        %v1849 = vpack.c.bf16 %v1833, %v1833
        %v1850 = vpack.c.bf16 %v1834, %v1834
        %vm1851 = vcmask 257024
        %1852 = vst.msk [vmem:[%s386] sm:$0xf] %vm1851, %v1835
        %1853 = vst.msk [vmem:[%s386 + $0x4] sm:$0xf] %vm1851, %v1836
        %1854 = vst.msk [vmem:[%s386 + $0x8] sm:$0xf] %vm1851, %v1837
        %1855 = vst.msk [vmem:[%s386 + $0xc] sm:$0xf] %vm1851, %v1838
        %1856 = vst.msk [vmem:[%s386 + $0x10] sm:$0xf] %vm1851, %v1839
        %1857 = vst.msk [vmem:[%s386 + $0x14] sm:$0xf] %vm1851, %v1840
        %1858 = vst.msk [vmem:[%s386 + $0x18] sm:$0xf] %vm1851, %v1841
        %1859 = vst.msk [vmem:[%s386 + $0x1c] sm:$0xf] %vm1851, %v1842
        %1860 = vst.msk [vmem:[%s386 + $0x20] sm:$0xf] %vm1851, %v1843
        %1861 = vst.msk [vmem:[%s386 + $0x24] sm:$0xf] %vm1851, %v1844
        %1862 = vst.msk [vmem:[%s386 + $0x28] sm:$0xf] %vm1851, %v1845
        %1863 = vst.msk [vmem:[%s386 + $0x2c] sm:$0xf] %vm1851, %v1846
        %1864 = vst.msk [vmem:[%s386 + $0x30] sm:$0xf] %vm1851, %v1847
        %1865 = vst.msk [vmem:[%s386 + $0x34] sm:$0xf] %vm1851, %v1848
        %1866 = vst.msk [vmem:[%s386 + $0x38] sm:$0xf] %vm1851, %v1849
        %1867 = vst.msk [vmem:[%s386 + $0x3c] sm:$0xf] %vm1851, %v1850
      $region60: #{video_style_transfer_forward.6} parent=51 // pred_fallthru
        _
      %s1868 = smul.u32 16, %s25
      %p1869 = scmp.lt.s32.totalorder %s24, 1
      %s1870 = scalar_select %p1869, %s24, 1
      %p1871 = scmp.lt.s32.totalorder %s1868, 31
      %s1872 = scalar_select %p1871, %s1868, 31
      %s1873 = smul.addr %s1870, 32
      %s1874 = sadd.s32 %s1872, %s1873
      %s1875 = smul.addr %s1874, 4
      %s1876 = scalar_lea.vmem %s8, %s1875
      // Predicated region
      $region61: #{video_style_transfer_forward.6} parent=51 // pred_check
        %p1877 = pneg %p240
      $region62: #{video_style_transfer_forward.6} parent=51 // pred_check_branch
        %1879 = sbr.rel (%p1877) target = $region64
      $region63: #{video_style_transfer_forward.6} parent=51 // pred_region
        %s1880 = smul.u32 16, %s25
      $region64: #{video_style_transfer_forward.6} parent=51 // pred_fallthru
        _
    $region52: #{video_style_transfer_forward.6} parent=5 // pred_fallthru
      _
    %p1881 = scmp.le.s32.totalorder 2, %s14
    // Predicated region
    $region65: #{video_style_transfer_forward.6} parent=5 // pred_check
      %p1882 = pneg %p1881
    $region66: #{video_style_transfer_forward.6} parent=5 // pred_check_branch
      %1884 = sbr.rel (%p1882) target = $region68
    $region67: #{video_style_transfer_forward.6} parent=5 // pred_region
      %s1885 = ssub.s32 %s14, 2
      // Predicated region
      $region69: #{video_style_transfer_forward.6} parent=67 // pred_check
        %p1886 = pneg %p246
      $region70: #{video_style_transfer_forward.6} parent=67 // pred_check_branch
        %1888 = sbr.rel (%p1886) target = $region72
      $region71: #{video_style_transfer_forward.6} parent=67 // pred_region
        %s1889 = smul.u32 16, %s28
        %p1890 = scmp.lt.s32.totalorder %s27, 1
        %s1891 = scalar_select %p1890, %s27, 1
        %p1892 = scmp.lt.s32.totalorder %s1889, 31
        %s1893 = scalar_select %p1892, %s1889, 31
        %s1894 = smul.addr %s1891, 32
        %s1895 = sadd.s32 %s1893, %s1894
        %s1896 = smul.addr %s1895, 4
        %s1897 = scalar_lea.vmem %s8, %s1896
      $region72: #{video_style_transfer_forward.6} parent=67 // pred_fallthru
        _
    $region68: #{video_style_transfer_forward.6} parent=5 // pred_fallthru
      _
  $region6: #{video_style_transfer_forward.6} parent=0 // loop_footer
    %s18 = sadd.s32 1, %s14
  $region7: #{video_style_transfer_forward.6} parent=0 // loop_footer_branch
    %13 = sbr.rel target = $region3
  $region8: #{video_style_transfer_forward.6} parent=0 // loop_exit
    _

// kernel: video_style_transfer_forward.4
$region0: #{video_style_transfer_forward.4}
  #allocation0 [shape = 'u32[]', space=smem, size = 0x4, offset = 0x4, fixed_abs, tag = 'smem constant byte address 0x4 - core index']
  #allocation1 [shape = 'u32[72,128]{1,0:T(1,128)}', space=vmem, size = 0x9000, scoped, tag = 'internal scratch']
  %s0 = inlined_call_operand.vmem [shape: bf16[2,18,18,3], index: 0, kind: input, shape index: {}]
  %s1 = inlined_call_operand.vmem [shape: bf16[9,3,32], index: 1, kind: input, shape index: {}]
  %s2 = inlined_call_operand.vmem [shape: f32[1,32], index: 2, kind: input, shape index: {}]
  %s3 = inlined_call_operand.vmem [shape: bf16[2,256,32], index: 3, kind: output, shape index: {}]
  %s4 = sld [smem:[#allocation0]]
  $region45: #{video_style_transfer_forward.4} parent=0
    _
  %s6 = ssub.s32 1, %s4
  %s7 = scalar_select 0, %s6, %s4
  loop: start=0, step=1, limit=4
  $region2: #{video_style_transfer_forward.4} parent=0 // loop_pre_header
    _
  $region3: #{video_style_transfer_forward.4} parent=0 // loop_header
    %s9 = sphi 0, %s13
    %p10 = scmp.ge.s32.totalorder %s9, 4
    %s19 = sphi 0, %s21
    %s22 = sphi 0, %s19
    %s23 = sphi 0, %s22
    %s39 = sphi 0, %s23
    %s43 = sphi 0, %s43
    %s45 = sphi 0, %s43
    %s46 = sphi 0, %s45
    %s60 = sphi 0, %s46
    %s64 = sphi 0, %s64
    %s66 = sphi 0, %s64
    %s67 = sphi 0, %s66
    %s81 = sphi 0, %s67
    %s87 = sphi 0, %s89
    %s90 = sphi 0, %s87
    %s91 = sphi 0, %s90
    %s107 = sphi 0, %s91
  $region4: #{video_style_transfer_forward.4} parent=0 // loop_header_branch
    %12 = sbr.rel (%p10) target = $region8
  $region5: #{video_style_transfer_forward.4} parent=0 // loop_body
    %s14 = ssub.s32 %s9, 1
    %s15 = ssub.s32 %s9, 2
    %s16 = sadd.s32 %s9, 1
    %s17 = ssub.s32 %s9, %s16
    %p18 = scmp.eq.s32.totalorder %s17, 0
    %s20 = sadd.s32 %s19, 1
    %s21 = scalar_select %p18, %s19, %s20
    %p24 = pneg %p18
    %p25 = scmp.eq.s32.totalorder %s9, 1
    %p26 = por %p24, %p25
    %p27 = scmp.ne.s32.totalorder %s19, %s22
    %p28 = scmp.eq.s32.totalorder %s9, 0
    %p29 = por %p27, %p28
    %p30 = scmp.ne.s32.totalorder %s19, %s22
    %p31 = scmp.eq.s32.totalorder %s14, 1
    %p32 = por %p30, %p31
    %p33 = scmp.ne.s32.totalorder %s22, %s23
    %p34 = scmp.eq.s32.totalorder %s14, 0
    %p35 = por %p33, %p34
    %p36 = scmp.ne.s32.totalorder %s22, %s23
    %p37 = scmp.eq.s32.totalorder %s15, 1
    %p38 = por %p36, %p37
    %p40 = scmp.ne.s32.totalorder %s23, %s39
    %p41 = scmp.eq.s32.totalorder %s15, 0
    %p42 = por %p40, %p41
    %s44 = sadd.s32 %s43, 1
    %p47 = scmp.eq.s32.totalorder %s9, 1
    %p48 = scmp.ne.s32.totalorder %s43, %s45
    %p49 = scmp.eq.s32.totalorder %s9, 0
    %p50 = por %p48, %p49
    %p51 = scmp.ne.s32.totalorder %s43, %s45
    %p52 = scmp.eq.s32.totalorder %s14, 1
    %p53 = por %p51, %p52
    %p54 = scmp.ne.s32.totalorder %s45, %s46
    %p55 = scmp.eq.s32.totalorder %s14, 0
    %p56 = por %p54, %p55
    %p57 = scmp.ne.s32.totalorder %s45, %s46
    %p58 = scmp.eq.s32.totalorder %s15, 1
    %p59 = por %p57, %p58
    %p61 = scmp.ne.s32.totalorder %s46, %s60
    %p62 = scmp.eq.s32.totalorder %s15, 0
    %p63 = por %p61, %p62
    %s65 = sadd.s32 %s64, 1
    %p68 = scmp.eq.s32.totalorder %s9, 1
    %p69 = scmp.ne.s32.totalorder %s64, %s66
    %p70 = scmp.eq.s32.totalorder %s9, 0
    %p71 = por %p69, %p70
    %p72 = scmp.ne.s32.totalorder %s64, %s66
    %p73 = scmp.eq.s32.totalorder %s14, 1
    %p74 = por %p72, %p73
    %p75 = scmp.ne.s32.totalorder %s66, %s67
    %p76 = scmp.eq.s32.totalorder %s14, 0
    %p77 = por %p75, %p76
    %p78 = scmp.ne.s32.totalorder %s66, %s67
    %p79 = scmp.eq.s32.totalorder %s15, 1
    %p80 = por %p78, %p79
    %p82 = scmp.ne.s32.totalorder %s67, %s81
    %p83 = scmp.eq.s32.totalorder %s15, 0
    %p84 = por %p82, %p83
    %s85 = ssub.s32 %s9, %s16
    %p86 = scmp.eq.s32.totalorder %s85, 0
    %s88 = sadd.s32 %s87, 1
    %s89 = scalar_select %p86, %s87, %s88
    %p92 = pneg %p86
    %p93 = scmp.eq.s32.totalorder %s9, 1
    %p94 = por %p92, %p93
    %p95 = scmp.ne.s32.totalorder %s87, %s90
    %p96 = scmp.eq.s32.totalorder %s9, 0
    %p97 = por %p95, %p96
    %p98 = scmp.ne.s32.totalorder %s87, %s90
    %p99 = scmp.eq.s32.totalorder %s14, 1
    %p100 = por %p98, %p99
    %p101 = scmp.ne.s32.totalorder %s90, %s91
    %p102 = scmp.eq.s32.totalorder %s14, 0
    %p103 = por %p101, %p102
    %p104 = scmp.ne.s32.totalorder %s90, %s91
    %p105 = scmp.eq.s32.totalorder %s15, 1
    %p106 = por %p104, %p105
    %p108 = scmp.ne.s32.totalorder %s91, %s107
    %p109 = scmp.eq.s32.totalorder %s15, 0
    %p110 = por %p108, %p109
    %p111 = scmp.le.s32.totalorder 1, %s9
    %p112 = scmp.lt.s32.totalorder %s9, 3
    %p113 = pnand %p111, %p112
    %p114 = pneg %p113
    // Predicated region
    $region9: #{video_style_transfer_forward.4} parent=5 // pred_check
      _
    $region10: #{video_style_transfer_forward.4} parent=5 // pred_check_branch
      %116 = sbr.rel (%p113) target = $region12
    $region11: #{video_style_transfer_forward.4} parent=5 // pred_region
      %s117 = ssub.s32 %s9, 1
      // Predicated region
      $region13: #{video_style_transfer_forward.4} parent=11 // pred_check
        %p118 = pneg %p56
      $region14: #{video_style_transfer_forward.4} parent=11 // pred_check_branch
        %120 = sbr.rel (%p118) target = $region16
      $region15: #{video_style_transfer_forward.4} parent=11 // pred_region
        _
      $region16: #{video_style_transfer_forward.4} parent=11 // pred_fallthru
        _
      // Predicated region
      $region17: #{video_style_transfer_forward.4} parent=11 // pred_check
        %p121 = pneg %p77
      $region18: #{video_style_transfer_forward.4} parent=11 // pred_check_branch
        %123 = sbr.rel (%p121) target = $region20
      $region19: #{video_style_transfer_forward.4} parent=11 // pred_region
        _
      $region20: #{video_style_transfer_forward.4} parent=11 // pred_fallthru
        _
    $region12: #{video_style_transfer_forward.4} parent=5 // pred_fallthru
      _
    %p124 = scmp.lt.s32.totalorder %s9, 2
    // Predicated region
    $region21: #{video_style_transfer_forward.4} parent=5 // pred_check
      %p125 = pneg %p124
    $region22: #{video_style_transfer_forward.4} parent=5 // pred_check_branch
      %127 = sbr.rel (%p125) target = $region24
    $region23: #{video_style_transfer_forward.4} parent=5 // pred_region
      // Predicated region
      $region25: #{video_style_transfer_forward.4} parent=23 // pred_check
        %p128 = pneg %p29
      $region26: #{video_style_transfer_forward.4} parent=23 // pred_check_branch
        %130 = sbr.rel (%p128) target = $region28
      $region27: #{video_style_transfer_forward.4} parent=23 // pred_region
        %p131 = scmp.lt.s32.totalorder %s9, 1
        %s132 = scalar_select %p131, %s9, 1
        %s133 = smul.addr %s132, 54
        %s134 = smul.addr %s133, 4
        %s135 = scalar_lea.vmem %s0, %s134
      $region28: #{video_style_transfer_forward.4} parent=23 // pred_fallthru
        _
    $region24: #{video_style_transfer_forward.4} parent=5 // pred_fallthru
      _
    %p136 = scmp.le.s32.totalorder 1, %s9
    %p137 = scmp.lt.s32.totalorder %s9, 3
    %p138 = pnand %p136, %p137
    %p139 = pneg %p138
    // Predicated region
    $region29: #{video_style_transfer_forward.4} parent=5 // pred_check
      _
    $region30: #{video_style_transfer_forward.4} parent=5 // pred_check_branch
      %141 = sbr.rel (%p138) target = $region32
    $region31: #{video_style_transfer_forward.4} parent=5 // pred_region
      %s142 = ssub.s32 %s9, 1
      %p143 = scmp.lt.s32.totalorder %s14, 1
      %s144 = scalar_select %p143, %s14, 1
      %s145 = smul.addr %s144, 54
      %s146 = smul.addr %s145, 4
      %s147 = scalar_lea.vmem %s0, %s146
      %p148 = pneg %p35
      %p149 = pneg %p32
      %p150 = pneg %p56
      %p151 = pneg %p53
      %p152 = pneg %p77
      %p153 = pneg %p74
      %p154 = pneg %p103
      %p155 = pneg %p100
      %p156 = scmp.lt.s32.totalorder %s14, 1
      %s157 = scalar_select %p156, %s14, 1
      %s158 = smul.addr %s157, 32
      %s159 = smul.addr %s158, 4
      %s160 = scalar_lea.vmem %s3, %s159
      %p161 = scmp.lt.s32.totalorder %s14, 1
      %s162 = scalar_select %p161, %s14, 1
      %s163 = smul.addr %s162, 54
      %s164 = smul.addr %s163, 4
      %s165 = scalar_lea.vmem %s0, %s164
      %p166 = scmp.lt.s32.totalorder %s14, 1
      %s167 = scalar_select %p166, %s14, 1
      %s168 = smul.addr %s167, 32
      %s169 = smul.addr %s168, 4
      %s170 = scalar_lea.vmem %s3, %s169
      %v172 = vld [vmem:[%s165] sm:$0xf]
      %v173 = vld [vmem:[%s165 + $0x4] sm:$0xf]
      %v174 = vld [vmem:[%s165 + $0x8] sm:$0x1]
      %v175 = vld [vmem:[%s165 + $0xc] sm:$0xf]
      %v176 = vld [vmem:[%s165 + $0x10] sm:$0xf]
      %v177 = vld [vmem:[%s165 + $0x14] sm:$0x1]
      %v178 = vld [vmem:[%s165 + $0x18] sm:$0xf]
      %v179 = vld [vmem:[%s165 + $0x1c] sm:$0xf]
      %v180 = vld [vmem:[%s165 + $0x20] sm:$0x1]
      %v181 = vld [vmem:[%s165 + $0x24] sm:$0xf]
      %v182 = vld [vmem:[%s165 + $0x28] sm:$0xf]
      %v183 = vld [vmem:[%s165 + $0x2c] sm:$0x1]
      %v184 = vld [vmem:[%s165 + $0x30] sm:$0xf]
      %v185 = vld [vmem:[%s165 + $0x34] sm:$0xf]
      %v186 = vld [vmem:[%s165 + $0x38] sm:$0x1]
      %v187 = vld [vmem:[%s165 + $0x3c] sm:$0xf]
      %v188 = vld [vmem:[%s165 + $0x40] sm:$0xf]
      %v189 = vld [vmem:[%s165 + $0x44] sm:$0x1]
      %v190 = vld [vmem:[%s165 + $0x48] sm:$0xf]
      %v191 = vld [vmem:[%s165 + $0x4c] sm:$0xf]
      %v192 = vld [vmem:[%s165 + $0x50] sm:$0x1]
      %v193 = vld [vmem:[%s165 + $0x54] sm:$0xf]
      %v194 = vld [vmem:[%s165 + $0x58] sm:$0xf]
      %v195 = vld [vmem:[%s165 + $0x5c] sm:$0x1]
      %v196 = vld [vmem:[%s165 + $0x60] sm:$0xf]
      %v197 = vld [vmem:[%s165 + $0x64] sm:$0xf]
      %v198 = vld [vmem:[%s165 + $0x68] sm:$0x1]
      %v199 = vld [vmem:[%s165 + $0x6c] sm:$0xf]
      %v200 = vld [vmem:[%s165 + $0x70] sm:$0xf]
      %v201 = vld [vmem:[%s165 + $0x74] sm:$0x1]
      %v202 = vld [vmem:[%s165 + $0x78] sm:$0xf]
      %v203 = vld [vmem:[%s165 + $0x7c] sm:$0xf]
      %v204 = vld [vmem:[%s165 + $0x80] sm:$0x1]
      %v205 = vld [vmem:[%s165 + $0x84] sm:$0xf]
      %v206 = vld [vmem:[%s165 + $0x88] sm:$0xf]
      %v207 = vld [vmem:[%s165 + $0x8c] sm:$0x1]
      %v208 = vld [vmem:[%s165 + $0x90] sm:$0xf]
      %v209 = vld [vmem:[%s165 + $0x94] sm:$0xf]
      %v210 = vld [vmem:[%s165 + $0x98] sm:$0x1]
      %v211 = vld [vmem:[%s165 + $0x9c] sm:$0xf]
      %v212 = vld [vmem:[%s165 + $0xa0] sm:$0xf]
      %v213 = vld [vmem:[%s165 + $0xa4] sm:$0x1]
      %v214 = vld [vmem:[%s165 + $0xa8] sm:$0xf]
      %v215 = vld [vmem:[%s165 + $0xac] sm:$0xf]
      %v216 = vld [vmem:[%s165 + $0xb0] sm:$0x1]
      %v217 = vld [vmem:[%s165 + $0xb4] sm:$0xf]
      %v218 = vld [vmem:[%s165 + $0xb8] sm:$0xf]
      %v219 = vld [vmem:[%s165 + $0xbc] sm:$0x1]
      %v220 = vld [vmem:[%s165 + $0xc0] sm:$0xf]
      %v221 = vld [vmem:[%s165 + $0xc4] sm:$0xf]
      %v222 = vld [vmem:[%s165 + $0xc8] sm:$0x1]
      %v223 = vld [vmem:[%s165 + $0xcc] sm:$0xf]
      %v224 = vld [vmem:[%s165 + $0xd0] sm:$0xf]
      %v225 = vld [vmem:[%s165 + $0xd4] sm:$0x1]
      %v226 = vld [vmem:[%s1] sm:$0x3]
      %vm227 = vsmask.f32 3328
      %vm228 = vsmask.f32 7440
      %vm229 = vmor %vm227, %vm228
      %v231 = vshrl.u32 %v172, 16
      %v233 = vrot.slane %v231, 4
      %v234 = vshll.u32 %v172, 16
      %v236 = vrot.slane %v234, 5
      %v237 = vor.u32 %v233, %v236
      %v238 = vrot.slane %v237, 4
      %v240 = vshll.u32 %v173, 16
      %v242 = vrot.slane %v240, 5
      %v243 = vsel %vm229, %v238, %v242
      %v244 = vshrl.u32 %v173, 16
      %v246 = vrot.slane %v244, 4
      %v247 = vor.u32 %v246, %v242
      %v248 = vrot.slane %v247, 4
      %v250 = vshll.u32 %v174, 16
      %v252 = vrot.slane %v250, 5
      %v253 = vsel %vm229, %v248, %v252
      %v255 = vshrl.u32 %v175, 16
      %v257 = vrot.slane %v255, 4
      %v258 = vshll.u32 %v175, 16
      %v260 = vrot.slane %v258, 5
      %v261 = vor.u32 %v257, %v260
      %v262 = vrot.slane %v261, 4
      %v264 = vshll.u32 %v176, 16
      %v266 = vrot.slane %v264, 5
      %v267 = vsel %vm229, %v262, %v266
      %v268 = vshrl.u32 %v176, 16
      %v270 = vrot.slane %v268, 4
      %v271 = vor.u32 %v270, %v266
      %v272 = vrot.slane %v271, 4
      %v274 = vshll.u32 %v177, 16
      %v276 = vrot.slane %v274, 5
      %v277 = vsel %vm229, %v272, %v276
      %v279 = vshrl.u32 %v178, 16
      %v281 = vrot.slane %v279, 4
      %v282 = vshll.u32 %v178, 16
      %v284 = vrot.slane %v282, 5
      %v285 = vor.u32 %v281, %v284
      %v286 = vrot.slane %v285, 4
      %v288 = vshll.u32 %v179, 16
      %v290 = vrot.slane %v288, 5
      %v291 = vsel %vm229, %v286, %v290
      %v292 = vshrl.u32 %v179, 16
      %v294 = vrot.slane %v292, 4
      %v295 = vor.u32 %v294, %v290
      %v296 = vrot.slane %v295, 4
      %v298 = vshll.u32 %v180, 16
      %v300 = vrot.slane %v298, 5
      %v301 = vsel %vm229, %v296, %v300
      %v303 = vshrl.u32 %v181, 16
      %v305 = vrot.slane %v303, 4
      %v306 = vshll.u32 %v181, 16
      %v308 = vrot.slane %v306, 5
      %v309 = vor.u32 %v305, %v308
      %v310 = vrot.slane %v309, 4
      %v312 = vshll.u32 %v182, 16
      %v314 = vrot.slane %v312, 5
      %v315 = vsel %vm229, %v310, %v314
      %v316 = vshrl.u32 %v182, 16
      %v318 = vrot.slane %v316, 4
      %v319 = vor.u32 %v318, %v314
      %v320 = vrot.slane %v319, 4
      %v322 = vshll.u32 %v183, 16
      %v324 = vrot.slane %v322, 5
      %v325 = vsel %vm229, %v320, %v324
      %v327 = vshrl.u32 %v184, 16
      %v329 = vrot.slane %v327, 4
      %v330 = vshll.u32 %v184, 16
      %v332 = vrot.slane %v330, 5
      %v333 = vor.u32 %v329, %v332
      %v334 = vrot.slane %v333, 4
      %v336 = vshll.u32 %v185, 16
      %v338 = vrot.slane %v336, 5
      %v339 = vsel %vm229, %v334, %v338
      %v340 = vshrl.u32 %v185, 16
      %v342 = vrot.slane %v340, 4
      %v343 = vor.u32 %v342, %v338
      %v344 = vrot.slane %v343, 4
      %v346 = vshll.u32 %v186, 16
      %v348 = vrot.slane %v346, 5
      %v349 = vsel %vm229, %v344, %v348
      %v351 = vshrl.u32 %v187, 16
      %v353 = vrot.slane %v351, 4
      %v354 = vshll.u32 %v187, 16
      %v356 = vrot.slane %v354, 5
      %v357 = vor.u32 %v353, %v356
      %v358 = vrot.slane %v357, 4
      %v360 = vshll.u32 %v188, 16
      %v362 = vrot.slane %v360, 5
      %v363 = vsel %vm229, %v358, %v362
      %v364 = vshrl.u32 %v188, 16
      %v366 = vrot.slane %v364, 4
      %v367 = vor.u32 %v366, %v362
      %v368 = vrot.slane %v367, 4
      %v370 = vshll.u32 %v189, 16
      %v372 = vrot.slane %v370, 5
      %v373 = vsel %vm229, %v368, %v372
      %v375 = vshrl.u32 %v190, 16
      %v377 = vrot.slane %v375, 4
      %v378 = vshll.u32 %v190, 16
      %v380 = vrot.slane %v378, 5
      %v381 = vor.u32 %v377, %v380
      %v382 = vrot.slane %v381, 4
      %v384 = vshll.u32 %v191, 16
      %v386 = vrot.slane %v384, 5
      %v387 = vsel %vm229, %v382, %v386
      %v388 = vshrl.u32 %v191, 16
      %v390 = vrot.slane %v388, 4
      %v391 = vor.u32 %v390, %v386
      %v392 = vrot.slane %v391, 4
      %v394 = vshll.u32 %v192, 16
      %v396 = vrot.slane %v394, 5
      %v397 = vsel %vm229, %v392, %v396
      %v399 = vshrl.u32 %v193, 16
      %v401 = vrot.slane %v399, 4
      %v402 = vshll.u32 %v193, 16
      %v404 = vrot.slane %v402, 5
      %v405 = vor.u32 %v401, %v404
      %v406 = vrot.slane %v405, 4
      %v408 = vshll.u32 %v194, 16
      %v410 = vrot.slane %v408, 5
      %v411 = vsel %vm229, %v406, %v410
      %v412 = vshrl.u32 %v194, 16
      %v414 = vrot.slane %v412, 4
      %v415 = vor.u32 %v414, %v410
      %v416 = vrot.slane %v415, 4
      %v418 = vshll.u32 %v195, 16
      %v420 = vrot.slane %v418, 5
      %v421 = vsel %vm229, %v416, %v420
      %v423 = vshrl.u32 %v196, 16
      %v425 = vrot.slane %v423, 4
      %v426 = vshll.u32 %v196, 16
      %v428 = vrot.slane %v426, 5
      %v429 = vor.u32 %v425, %v428
      %v430 = vrot.slane %v429, 4
      %v432 = vshll.u32 %v197, 16
      %v434 = vrot.slane %v432, 5
      %v435 = vsel %vm229, %v430, %v434
      %v436 = vshrl.u32 %v197, 16
      %v438 = vrot.slane %v436, 4
      %v439 = vor.u32 %v438, %v434
      %v440 = vrot.slane %v439, 4
      %v442 = vshll.u32 %v198, 16
      %v444 = vrot.slane %v442, 5
      %v445 = vsel %vm229, %v440, %v444
      %v447 = vshrl.u32 %v199, 16
      %v449 = vrot.slane %v447, 4
      %v450 = vshll.u32 %v199, 16
      %v452 = vrot.slane %v450, 5
      %v453 = vor.u32 %v449, %v452
      %v454 = vrot.slane %v453, 4
      %v456 = vshll.u32 %v200, 16
      %v458 = vrot.slane %v456, 5
      %v459 = vsel %vm229, %v454, %v458
      %v460 = vshrl.u32 %v200, 16
      %v462 = vrot.slane %v460, 4
      %v463 = vor.u32 %v462, %v458
      %v464 = vrot.slane %v463, 4
      %v466 = vshll.u32 %v201, 16
      %v468 = vrot.slane %v466, 5
      %v469 = vsel %vm229, %v464, %v468
      %v471 = vshrl.u32 %v202, 16
      %v473 = vrot.slane %v471, 4
      %v474 = vshll.u32 %v202, 16
      %v476 = vrot.slane %v474, 5
      %v477 = vor.u32 %v473, %v476
      %v478 = vrot.slane %v477, 4
      %v480 = vshll.u32 %v203, 16
      %v482 = vrot.slane %v480, 5
      %v483 = vsel %vm229, %v478, %v482
      %v484 = vshrl.u32 %v203, 16
      %v486 = vrot.slane %v484, 4
      %v487 = vor.u32 %v486, %v482
      %v488 = vrot.slane %v487, 4
      %v490 = vshll.u32 %v204, 16
      %v492 = vrot.slane %v490, 5
      %v493 = vsel %vm229, %v488, %v492
      %v495 = vshrl.u32 %v205, 16
      %v497 = vrot.slane %v495, 4
      %v498 = vshll.u32 %v205, 16
      %v500 = vrot.slane %v498, 5
      %v501 = vor.u32 %v497, %v500
      %v502 = vrot.slane %v501, 4
      %v504 = vshll.u32 %v206, 16
      %v506 = vrot.slane %v504, 5
      %v507 = vsel %vm229, %v502, %v506
      %v508 = vshrl.u32 %v206, 16
      %v510 = vrot.slane %v508, 4
      %v511 = vor.u32 %v510, %v506
      %v512 = vrot.slane %v511, 4
      %v514 = vshll.u32 %v207, 16
      %v516 = vrot.slane %v514, 5
      %v517 = vsel %vm229, %v512, %v516
      %v519 = vshrl.u32 %v208, 16
      %v521 = vrot.slane %v519, 4
      %v522 = vshll.u32 %v208, 16
      %v524 = vrot.slane %v522, 5
      %v525 = vor.u32 %v521, %v524
      %v526 = vrot.slane %v525, 4
      %v528 = vshll.u32 %v209, 16
      %v530 = vrot.slane %v528, 5
      %v531 = vsel %vm229, %v526, %v530
      %v532 = vshrl.u32 %v209, 16
      %v534 = vrot.slane %v532, 4
      %v535 = vor.u32 %v534, %v530
      %v536 = vrot.slane %v535, 4
      %v538 = vshll.u32 %v210, 16
      %v540 = vrot.slane %v538, 5
      %v541 = vsel %vm229, %v536, %v540
      %v543 = vshrl.u32 %v211, 16
      %v545 = vrot.slane %v543, 4
      %v546 = vshll.u32 %v211, 16
      %v548 = vrot.slane %v546, 5
      %v549 = vor.u32 %v545, %v548
      %v550 = vrot.slane %v549, 4
      %v552 = vshll.u32 %v212, 16
      %v554 = vrot.slane %v552, 5
      %v555 = vsel %vm229, %v550, %v554
      %v556 = vshrl.u32 %v212, 16
      %v558 = vrot.slane %v556, 4
      %v559 = vor.u32 %v558, %v554
      %v560 = vrot.slane %v559, 4
      %v562 = vshll.u32 %v213, 16
      %v564 = vrot.slane %v562, 5
      %v565 = vsel %vm229, %v560, %v564
      %v567 = vshrl.u32 %v214, 16
      %v569 = vrot.slane %v567, 4
      %v570 = vshll.u32 %v214, 16
      %v572 = vrot.slane %v570, 5
      %v573 = vor.u32 %v569, %v572
      %v574 = vrot.slane %v573, 4
      %v576 = vshll.u32 %v215, 16
      %v578 = vrot.slane %v576, 5
      %v579 = vsel %vm229, %v574, %v578
      %v580 = vshrl.u32 %v215, 16
      %v582 = vrot.slane %v580, 4
      %v583 = vor.u32 %v582, %v578
      %v584 = vrot.slane %v583, 4
      %v586 = vshll.u32 %v216, 16
      %v588 = vrot.slane %v586, 5
      %v589 = vsel %vm229, %v584, %v588
      %v591 = vshrl.u32 %v217, 16
      %v593 = vrot.slane %v591, 4
      %v594 = vshll.u32 %v217, 16
      %v596 = vrot.slane %v594, 5
      %v597 = vor.u32 %v593, %v596
      %v598 = vrot.slane %v597, 4
      %v600 = vshll.u32 %v218, 16
      %v602 = vrot.slane %v600, 5
      %v603 = vsel %vm229, %v598, %v602
      %v604 = vshrl.u32 %v218, 16
      %v606 = vrot.slane %v604, 4
      %v607 = vor.u32 %v606, %v602
      %v608 = vrot.slane %v607, 4
      %v610 = vshll.u32 %v219, 16
      %v612 = vrot.slane %v610, 5
      %v613 = vsel %vm229, %v608, %v612
      %s614 = scalar_lea.vmem %s1, 2
      %v615 = vld [vmem:[%s614] sm:$0x3]
      %v616 = vunpack.c.l.b16 %v243
      %v617 = vunpack.c.l.b16 %v253
      %v618 = vunpack.c.l.b16 %v267
      %v619 = vunpack.c.l.b16 %v277
      %v620 = vunpack.c.l.b16 %v291
      %v621 = vunpack.c.l.b16 %v301
      %v622 = vunpack.c.l.b16 %v315
      %v623 = vunpack.c.l.b16 %v325
      %v624 = vunpack.c.l.b16 %v339
      %v625 = vunpack.c.l.b16 %v349
      %v626 = vunpack.c.l.b16 %v363
      %v627 = vunpack.c.l.b16 %v373
      %v628 = vunpack.c.l.b16 %v387
      %v629 = vunpack.c.l.b16 %v397
      %v630 = vunpack.c.l.b16 %v411
      %v631 = vunpack.c.l.b16 %v421
      %v632 = vunpack.c.l.b16 %v435
      %v633 = vunpack.c.l.b16 %v445
      %v634 = vunpack.c.l.b16 %v459
      %v635 = vunpack.c.l.b16 %v469
      %v636 = vunpack.c.l.b16 %v483
      %v637 = vunpack.c.l.b16 %v493
      %v638 = vunpack.c.l.b16 %v507
      %v639 = vunpack.c.l.b16 %v517
      %v640 = vunpack.c.l.b16 %v531
      %v641 = vunpack.c.l.b16 %v541
      %v642 = vunpack.c.l.b16 %v555
      %v643 = vunpack.c.l.b16 %v565
      %v644 = vunpack.c.l.b16 %v579
      %v645 = vunpack.c.l.b16 %v589
      %v646 = vunpack.c.l.b16 %v603
      %v647 = vunpack.c.l.b16 %v613
      %v648 = vpack.c.b16 %v617, %v616
      %v649 = vpack.c.b16 %v619, %v618
      %v650 = vpack.c.b16 %v621, %v620
      %v651 = vpack.c.b16 %v623, %v622
      %v652 = vpack.c.b16 %v625, %v624
      %v653 = vpack.c.b16 %v627, %v626
      %v654 = vpack.c.b16 %v629, %v628
      %v655 = vpack.c.b16 %v631, %v630
      %v656 = vpack.c.b16 %v633, %v632
      %v657 = vpack.c.b16 %v635, %v634
      %v658 = vpack.c.b16 %v637, %v636
      %v659 = vpack.c.b16 %v639, %v638
      %v660 = vpack.c.b16 %v641, %v640
      %v661 = vpack.c.b16 %v643, %v642
      %v662 = vpack.c.b16 %v645, %v644
      %v663 = vpack.c.b16 %v647, %v646
      %vm664 = vcmask 23552
      %v666 = vsel %vm664, %v648, 0
      %v669 = vsel %vm664, %v649, 0
      %v672 = vsel %vm664, %v650, 0
      %v675 = vsel %vm664, %v651, 0
      %v678 = vsel %vm664, %v652, 0
      %v681 = vsel %vm664, %v653, 0
      %v684 = vsel %vm664, %v654, 0
      %v687 = vsel %vm664, %v655, 0
      %v690 = vsel %vm664, %v656, 0
      %v693 = vsel %vm664, %v657, 0
      %v696 = vsel %vm664, %v658, 0
      %v699 = vsel %vm664, %v659, 0
      %v702 = vsel %vm664, %v660, 0
      %v705 = vsel %vm664, %v661, 0
      %v708 = vsel %vm664, %v662, 0
      %v711 = vsel %vm664, %v663, 0
      %vm713 = vcmask 1040384
      %vm714 = vcmask 1041408
      %v715 = vsel %vm713, 4294967295, 65535
      %v716 = vsel %vm714, %v715, 0
      %v718 = vand.u32 %v615, %v716
      %720 = vmatpush.bf16.msra.mxu0 0
      %721 = vmatpush.bf16.msra.mxu0 0
      %722 = vmatpush.bf16.msra.mxu0 0
      %723 = vmatpush.bf16.msra.mxu0 0
      %724 = vmatpush.bf16.msra.mxu0 0
      %725 = vmatpush.bf16.msra.mxu0 0
      %726 = vmatpush.bf16.msra.mxu0 0
      %727 = vmatpush.bf16.msra.mxu0 %v718
      %728 = vmatmul.bf16.gmra.mxu0 %v666
      %v729 = vpop.f32.mrf.mxu0
      %v730 = vadd.f32 0.0, %v729
      %v731 = vpop.f32.mrf.mxu0
      %v732 = vadd.f32 0.0, %v731
      %733 = vmatmul.bf16.gmra.mxu0 %v669
      %v734 = vpop.f32.mrf.mxu0
      %v735 = vadd.f32 0.0, %v734
      %v736 = vpop.f32.mrf.mxu0
      %v737 = vadd.f32 0.0, %v736
      %738 = vmatmul.bf16.gmra.mxu0 %v672
      %v739 = vpop.f32.mrf.mxu0
      %v740 = vadd.f32 0.0, %v739
      %v741 = vpop.f32.mrf.mxu0
      %v742 = vadd.f32 0.0, %v741
      %743 = vmatmul.bf16.gmra.mxu0 %v675
      %v744 = vpop.f32.mrf.mxu0
      %v745 = vadd.f32 0.0, %v744
      %v746 = vpop.f32.mrf.mxu0
      %v747 = vadd.f32 0.0, %v746
      %748 = vmatmul.bf16.gmra.mxu0 %v678
      %v749 = vpop.f32.mrf.mxu0
      %v750 = vadd.f32 0.0, %v749
      %v751 = vpop.f32.mrf.mxu0
      %v752 = vadd.f32 0.0, %v751
      %753 = vmatmul.bf16.gmra.mxu0 %v681
      %v754 = vpop.f32.mrf.mxu0
      %v755 = vadd.f32 0.0, %v754
      %v756 = vpop.f32.mrf.mxu0
      %v757 = vadd.f32 0.0, %v756
      %758 = vmatmul.bf16.gmra.mxu0 %v684
      %v759 = vpop.f32.mrf.mxu0
      %v760 = vadd.f32 0.0, %v759
      %v761 = vpop.f32.mrf.mxu0
      %v762 = vadd.f32 0.0, %v761
      %763 = vmatmul.bf16.gmra.mxu0 %v687
      %v764 = vpop.f32.mrf.mxu0
      %v765 = vadd.f32 0.0, %v764
      %v766 = vpop.f32.mrf.mxu0
      %v767 = vadd.f32 0.0, %v766
      %768 = vmatmul.bf16.gmra.mxu0 %v690
      %v769 = vpop.f32.mrf.mxu0
      %v770 = vadd.f32 0.0, %v769
      %v771 = vpop.f32.mrf.mxu0
      %v772 = vadd.f32 0.0, %v771
      %773 = vmatmul.bf16.gmra.mxu0 %v693
      %v774 = vpop.f32.mrf.mxu0
      %v775 = vadd.f32 0.0, %v774
      %v776 = vpop.f32.mrf.mxu0
      %v777 = vadd.f32 0.0, %v776
      %778 = vmatmul.bf16.gmra.mxu0 %v696
      %v779 = vpop.f32.mrf.mxu0
      %v780 = vadd.f32 0.0, %v779
      %v781 = vpop.f32.mrf.mxu0
      %v782 = vadd.f32 0.0, %v781
      %783 = vmatmul.bf16.gmra.mxu0 %v699
      %v784 = vpop.f32.mrf.mxu0
      %v785 = vadd.f32 0.0, %v784
      %v786 = vpop.f32.mrf.mxu0
      %v787 = vadd.f32 0.0, %v786
      %788 = vmatmul.bf16.gmra.mxu0 %v702
      %v789 = vpop.f32.mrf.mxu0
      %v790 = vadd.f32 0.0, %v789
      %v791 = vpop.f32.mrf.mxu0
      %v792 = vadd.f32 0.0, %v791
      %793 = vmatmul.bf16.gmra.mxu0 %v705
      %v794 = vpop.f32.mrf.mxu0
      %v795 = vadd.f32 0.0, %v794
      %v796 = vpop.f32.mrf.mxu0
      %v797 = vadd.f32 0.0, %v796
      %798 = vmatmul.bf16.gmra.mxu0 %v708
      %v799 = vpop.f32.mrf.mxu0
      %v800 = vadd.f32 0.0, %v799
      %v801 = vpop.f32.mrf.mxu0
      %v802 = vadd.f32 0.0, %v801
      %803 = vmatmul.bf16.gmra.mxu0 %v711
      %v804 = vpop.f32.mrf.mxu0
      %v805 = vadd.f32 0.0, %v804
      %v806 = vpop.f32.mrf.mxu0
      %v807 = vadd.f32 0.0, %v806
      %808 = vdwg.mxu0
      %v841 = vunpack.c.l.b16 %v172
      %v842 = vunpack.c.l.b16 %v173
      %v843 = vunpack.c.l.b16 %v175
      %v844 = vunpack.c.l.b16 %v176
      %v845 = vunpack.c.l.b16 %v178
      %v846 = vunpack.c.l.b16 %v179
      %v847 = vunpack.c.l.b16 %v181
      %v848 = vunpack.c.l.b16 %v182
      %v849 = vunpack.c.l.b16 %v184
      %v850 = vunpack.c.l.b16 %v185
      %v851 = vunpack.c.l.b16 %v187
      %v852 = vunpack.c.l.b16 %v188
      %v853 = vunpack.c.l.b16 %v190
      %v854 = vunpack.c.l.b16 %v191
      %v855 = vunpack.c.l.b16 %v193
      %v856 = vunpack.c.l.b16 %v194
      %v857 = vunpack.c.l.b16 %v196
      %v858 = vunpack.c.l.b16 %v197
      %v859 = vunpack.c.l.b16 %v199
      %v860 = vunpack.c.l.b16 %v200
      %v861 = vunpack.c.l.b16 %v202
      %v862 = vunpack.c.l.b16 %v203
      %v863 = vunpack.c.l.b16 %v205
      %v864 = vunpack.c.l.b16 %v206
      %v865 = vunpack.c.l.b16 %v208
      %v866 = vunpack.c.l.b16 %v209
      %v867 = vunpack.c.l.b16 %v211
      %v868 = vunpack.c.l.b16 %v212
      %v869 = vunpack.c.l.b16 %v214
      %v870 = vunpack.c.l.b16 %v215
      %v871 = vunpack.c.l.b16 %v217
      %v872 = vunpack.c.l.b16 %v218
      %v873 = vpack.c.b16 %v842, %v841
      %v874 = vpack.c.b16 %v844, %v843
      %v875 = vpack.c.b16 %v846, %v845
      %v876 = vpack.c.b16 %v848, %v847
      %v877 = vpack.c.b16 %v850, %v849
      %v878 = vpack.c.b16 %v852, %v851
      %v879 = vpack.c.b16 %v854, %v853
      %v880 = vpack.c.b16 %v856, %v855
      %v881 = vpack.c.b16 %v858, %v857
      %v882 = vpack.c.b16 %v860, %v859
      %v883 = vpack.c.b16 %v862, %v861
      %v884 = vpack.c.b16 %v864, %v863
      %v885 = vpack.c.b16 %v866, %v865
      %v886 = vpack.c.b16 %v868, %v867
      %v887 = vpack.c.b16 %v870, %v869
      %v888 = vpack.c.b16 %v872, %v871
      %v890 = vsel %vm664, %v873, 0
      %v893 = vsel %vm664, %v874, 0
      %v896 = vsel %vm664, %v875, 0
      %v899 = vsel %vm664, %v876, 0
      %v902 = vsel %vm664, %v877, 0
      %v905 = vsel %vm664, %v878, 0
      %v908 = vsel %vm664, %v879, 0
      %v911 = vsel %vm664, %v880, 0
      %v914 = vsel %vm664, %v881, 0
      %v917 = vsel %vm664, %v882, 0
      %v920 = vsel %vm664, %v883, 0
      %v923 = vsel %vm664, %v884, 0
      %v926 = vsel %vm664, %v885, 0
      %v929 = vsel %vm664, %v886, 0
      %v932 = vsel %vm664, %v887, 0
      %v935 = vsel %vm664, %v888, 0
      %v938 = vand.u32 %v226, %v716
      %940 = vmatpush.bf16.msra.mxu0 0
      %941 = vmatpush.bf16.msra.mxu0 0
      %942 = vmatpush.bf16.msra.mxu0 0
      %943 = vmatpush.bf16.msra.mxu0 0
      %944 = vmatpush.bf16.msra.mxu0 0
      %945 = vmatpush.bf16.msra.mxu0 0
      %946 = vmatpush.bf16.msra.mxu0 0
      %947 = vmatpush.bf16.msra.mxu0 %v938
      %948 = vmatmul.bf16.gmra.mxu0 %v890
      %v949 = vpop.f32.mrf.mxu0
      %v950 = vadd.f32 %v730, %v949
      %v951 = vpop.f32.mrf.mxu0
      %v952 = vadd.f32 %v732, %v951
      %953 = vmatmul.bf16.gmra.mxu0 %v893
      %v954 = vpop.f32.mrf.mxu0
      %v955 = vadd.f32 %v735, %v954
      %v956 = vpop.f32.mrf.mxu0
      %v957 = vadd.f32 %v737, %v956
      %958 = vmatmul.bf16.gmra.mxu0 %v896
      %v959 = vpop.f32.mrf.mxu0
      %v960 = vadd.f32 %v740, %v959
      %v961 = vpop.f32.mrf.mxu0
      %v962 = vadd.f32 %v742, %v961
      %963 = vmatmul.bf16.gmra.mxu0 %v899
      %v964 = vpop.f32.mrf.mxu0
      %v965 = vadd.f32 %v745, %v964
      %v966 = vpop.f32.mrf.mxu0
      %v967 = vadd.f32 %v747, %v966
      %968 = vmatmul.bf16.gmra.mxu0 %v902
      %v969 = vpop.f32.mrf.mxu0
      %v970 = vadd.f32 %v750, %v969
      %v971 = vpop.f32.mrf.mxu0
      %v972 = vadd.f32 %v752, %v971
      %973 = vmatmul.bf16.gmra.mxu0 %v905
      %v974 = vpop.f32.mrf.mxu0
      %v975 = vadd.f32 %v755, %v974
      %v976 = vpop.f32.mrf.mxu0
      %v977 = vadd.f32 %v757, %v976
      %978 = vmatmul.bf16.gmra.mxu0 %v908
      %v979 = vpop.f32.mrf.mxu0
      %v980 = vadd.f32 %v760, %v979
      %v981 = vpop.f32.mrf.mxu0
      %v982 = vadd.f32 %v762, %v981
      %983 = vmatmul.bf16.gmra.mxu0 %v911
      %v984 = vpop.f32.mrf.mxu0
      %v985 = vadd.f32 %v765, %v984
      %v986 = vpop.f32.mrf.mxu0
      %v987 = vadd.f32 %v767, %v986
      %988 = vmatmul.bf16.gmra.mxu0 %v914
      %v989 = vpop.f32.mrf.mxu0
      %v990 = vadd.f32 %v770, %v989
      %v991 = vpop.f32.mrf.mxu0
      %v992 = vadd.f32 %v772, %v991
      %993 = vmatmul.bf16.gmra.mxu0 %v917
      %v994 = vpop.f32.mrf.mxu0
      %v995 = vadd.f32 %v775, %v994
      %v996 = vpop.f32.mrf.mxu0
      %v997 = vadd.f32 %v777, %v996
      %998 = vmatmul.bf16.gmra.mxu0 %v920
      %v999 = vpop.f32.mrf.mxu0
      %v1000 = vadd.f32 %v780, %v999
      %v1001 = vpop.f32.mrf.mxu0
      %v1002 = vadd.f32 %v782, %v1001
      %1003 = vmatmul.bf16.gmra.mxu0 %v923
      %v1004 = vpop.f32.mrf.mxu0
      %v1005 = vadd.f32 %v785, %v1004
      %v1006 = vpop.f32.mrf.mxu0
      %v1007 = vadd.f32 %v787, %v1006
      %1008 = vmatmul.bf16.gmra.mxu0 %v926
      %v1009 = vpop.f32.mrf.mxu0
      %v1010 = vadd.f32 %v790, %v1009
      %v1011 = vpop.f32.mrf.mxu0
      %v1012 = vadd.f32 %v792, %v1011
      %1013 = vmatmul.bf16.gmra.mxu0 %v929
      %v1014 = vpop.f32.mrf.mxu0
      %v1015 = vadd.f32 %v795, %v1014
      %v1016 = vpop.f32.mrf.mxu0
      %v1017 = vadd.f32 %v797, %v1016
      %1018 = vmatmul.bf16.gmra.mxu0 %v932
      %v1019 = vpop.f32.mrf.mxu0
      %v1020 = vadd.f32 %v800, %v1019
      %v1021 = vpop.f32.mrf.mxu0
      %v1022 = vadd.f32 %v802, %v1021
      %1023 = vmatmul.bf16.gmra.mxu0 %v935
      %v1024 = vpop.f32.mrf.mxu0
      %v1025 = vadd.f32 %v805, %v1024
      %v1026 = vpop.f32.mrf.mxu0
      %v1027 = vadd.f32 %v807, %v1026
      %1028 = vdwg.mxu0
      %vm1045 = vcmask 1042432
      %vm1046 = vcmask 1046532
      %vm1047 = vmor %vm1045, %vm1046
      %v1048 = vrot.slane %v172, 5
      %v1049 = vrot.slane %v1048, 4
      %v1050 = vrot.slane %v173, 5
      %v1051 = vsel %vm1047, %v1049, %v1050
      %v1052 = vrot.slane %v1050, 4
      %v1053 = vrot.slane %v174, 5
      %v1054 = vsel %vm1047, %v1052, %v1053
      %v1055 = vrot.slane %v175, 5
      %v1056 = vrot.slane %v1055, 4
      %v1057 = vrot.slane %v176, 5
      %v1058 = vsel %vm1047, %v1056, %v1057
      %v1059 = vrot.slane %v1057, 4
      %v1060 = vrot.slane %v177, 5
      %v1061 = vsel %vm1047, %v1059, %v1060
      %v1062 = vrot.slane %v178, 5
      %v1063 = vrot.slane %v1062, 4
      %v1064 = vrot.slane %v179, 5
      %v1065 = vsel %vm1047, %v1063, %v1064
      %v1066 = vrot.slane %v1064, 4
      %v1067 = vrot.slane %v180, 5
      %v1068 = vsel %vm1047, %v1066, %v1067
      %v1069 = vrot.slane %v181, 5
      %v1070 = vrot.slane %v1069, 4
      %v1071 = vrot.slane %v182, 5
      %v1072 = vsel %vm1047, %v1070, %v1071
      %v1073 = vrot.slane %v1071, 4
      %v1074 = vrot.slane %v183, 5
      %v1075 = vsel %vm1047, %v1073, %v1074
      %v1076 = vrot.slane %v184, 5
      %v1077 = vrot.slane %v1076, 4
      %v1078 = vrot.slane %v185, 5
      %v1079 = vsel %vm1047, %v1077, %v1078
      %v1080 = vrot.slane %v1078, 4
      %v1081 = vrot.slane %v186, 5
      %v1082 = vsel %vm1047, %v1080, %v1081
      %v1083 = vrot.slane %v187, 5
      %v1084 = vrot.slane %v1083, 4
      %v1085 = vrot.slane %v188, 5
      %v1086 = vsel %vm1047, %v1084, %v1085
      %v1087 = vrot.slane %v1085, 4
      %v1088 = vrot.slane %v189, 5
      %v1089 = vsel %vm1047, %v1087, %v1088
      %v1090 = vrot.slane %v190, 5
      %v1091 = vrot.slane %v1090, 4
      %v1092 = vrot.slane %v191, 5
      %v1093 = vsel %vm1047, %v1091, %v1092
      %v1094 = vrot.slane %v1092, 4
      %v1095 = vrot.slane %v192, 5
      %v1096 = vsel %vm1047, %v1094, %v1095
      %v1097 = vrot.slane %v193, 5
      %v1098 = vrot.slane %v1097, 4
      %v1099 = vrot.slane %v194, 5
      %v1100 = vsel %vm1047, %v1098, %v1099
      %v1101 = vrot.slane %v1099, 4
      %v1102 = vrot.slane %v195, 5
      %v1103 = vsel %vm1047, %v1101, %v1102
      %v1104 = vrot.slane %v196, 5
      %v1105 = vrot.slane %v1104, 4
      %v1106 = vrot.slane %v197, 5
      %v1107 = vsel %vm1047, %v1105, %v1106
      %v1108 = vrot.slane %v1106, 4
      %v1109 = vrot.slane %v198, 5
      %v1110 = vsel %vm1047, %v1108, %v1109
      %v1111 = vrot.slane %v199, 5
      %v1112 = vrot.slane %v1111, 4
      %v1113 = vrot.slane %v200, 5
      %v1114 = vsel %vm1047, %v1112, %v1113
      %v1115 = vrot.slane %v1113, 4
      %v1116 = vrot.slane %v201, 5
      %v1117 = vsel %vm1047, %v1115, %v1116
      %v1118 = vrot.slane %v202, 5
      %v1119 = vrot.slane %v1118, 4
      %v1120 = vrot.slane %v203, 5
      %v1121 = vsel %vm1047, %v1119, %v1120
      %v1122 = vrot.slane %v1120, 4
      %v1123 = vrot.slane %v204, 5
      %v1124 = vsel %vm1047, %v1122, %v1123
      %v1125 = vrot.slane %v205, 5
      %v1126 = vrot.slane %v1125, 4
      %v1127 = vrot.slane %v206, 5
      %v1128 = vsel %vm1047, %v1126, %v1127
      %v1129 = vrot.slane %v1127, 4
      %v1130 = vrot.slane %v207, 5
      %v1131 = vsel %vm1047, %v1129, %v1130
      %v1132 = vrot.slane %v208, 5
      %v1133 = vrot.slane %v1132, 4
      %v1134 = vrot.slane %v209, 5
      %v1135 = vsel %vm1047, %v1133, %v1134
      %v1136 = vrot.slane %v1134, 4
      %v1137 = vrot.slane %v210, 5
      %v1138 = vsel %vm1047, %v1136, %v1137
      %v1139 = vrot.slane %v211, 5
      %v1140 = vrot.slane %v1139, 4
      %v1141 = vrot.slane %v212, 5
      %v1142 = vsel %vm1047, %v1140, %v1141
      %v1143 = vrot.slane %v1141, 4
      %v1144 = vrot.slane %v213, 5
      %v1145 = vsel %vm1047, %v1143, %v1144
      %v1146 = vrot.slane %v214, 5
      %v1147 = vrot.slane %v1146, 4
      %v1148 = vrot.slane %v215, 5
      %v1149 = vsel %vm1047, %v1147, %v1148
      %v1150 = vrot.slane %v1148, 4
      %v1151 = vrot.slane %v216, 5
      %v1152 = vsel %vm1047, %v1150, %v1151
      %v1153 = vrot.slane %v217, 5
      %v1154 = vrot.slane %v1153, 4
      %v1155 = vrot.slane %v218, 5
      %v1156 = vsel %vm1047, %v1154, %v1155
      %v1157 = vrot.slane %v1155, 4
      %v1158 = vrot.slane %v219, 5
      %v1159 = vsel %vm1047, %v1157, %v1158
      %s1160 = scalar_lea.vmem %s1, 4
      %v1161 = vld [vmem:[%s1160] sm:$0x3]
      %v1162 = vunpack.c.l.b16 %v1051
      %v1163 = vunpack.c.l.b16 %v1054
      %v1164 = vunpack.c.l.b16 %v1058
      %v1165 = vunpack.c.l.b16 %v1061
      %v1166 = vunpack.c.l.b16 %v1065
      %v1167 = vunpack.c.l.b16 %v1068
      %v1168 = vunpack.c.l.b16 %v1072
      %v1169 = vunpack.c.l.b16 %v1075
      %v1170 = vunpack.c.l.b16 %v1079
      %v1171 = vunpack.c.l.b16 %v1082
      %v1172 = vunpack.c.l.b16 %v1086
      %v1173 = vunpack.c.l.b16 %v1089
      %v1174 = vunpack.c.l.b16 %v1093
      %v1175 = vunpack.c.l.b16 %v1096
      %v1176 = vunpack.c.l.b16 %v1100
      %v1177 = vunpack.c.l.b16 %v1103
      %v1178 = vunpack.c.l.b16 %v1107
      %v1179 = vunpack.c.l.b16 %v1110
      %v1180 = vunpack.c.l.b16 %v1114
      %v1181 = vunpack.c.l.b16 %v1117
      %v1182 = vunpack.c.l.b16 %v1121
      %v1183 = vunpack.c.l.b16 %v1124
      %v1184 = vunpack.c.l.b16 %v1128
      %v1185 = vunpack.c.l.b16 %v1131
      %v1186 = vunpack.c.l.b16 %v1135
      %v1187 = vunpack.c.l.b16 %v1138
      %v1188 = vunpack.c.l.b16 %v1142
      %v1189 = vunpack.c.l.b16 %v1145
      %v1190 = vunpack.c.l.b16 %v1149
      %v1191 = vunpack.c.l.b16 %v1152
      %v1192 = vunpack.c.l.b16 %v1156
      %v1193 = vunpack.c.l.b16 %v1159
      %v1194 = vpack.c.b16 %v1163, %v1162
      %v1195 = vpack.c.b16 %v1165, %v1164
      %v1196 = vpack.c.b16 %v1167, %v1166
      %v1197 = vpack.c.b16 %v1169, %v1168
      %v1198 = vpack.c.b16 %v1171, %v1170
      %v1199 = vpack.c.b16 %v1173, %v1172
      %v1200 = vpack.c.b16 %v1175, %v1174
      %v1201 = vpack.c.b16 %v1177, %v1176
      %v1202 = vpack.c.b16 %v1179, %v1178
      %v1203 = vpack.c.b16 %v1181, %v1180
      %v1204 = vpack.c.b16 %v1183, %v1182
      %v1205 = vpack.c.b16 %v1185, %v1184
      %v1206 = vpack.c.b16 %v1187, %v1186
      %v1207 = vpack.c.b16 %v1189, %v1188
      %v1208 = vpack.c.b16 %v1191, %v1190
      %v1209 = vpack.c.b16 %v1193, %v1192
      %v1211 = vsel %vm664, %v1194, 0
      %v1214 = vsel %vm664, %v1195, 0
      %v1217 = vsel %vm664, %v1196, 0
      %v1220 = vsel %vm664, %v1197, 0
      %v1223 = vsel %vm664, %v1198, 0
      %v1226 = vsel %vm664, %v1199, 0
      %v1229 = vsel %vm664, %v1200, 0
      %v1232 = vsel %vm664, %v1201, 0
      %v1235 = vsel %vm664, %v1202, 0
      %v1238 = vsel %vm664, %v1203, 0
      %v1241 = vsel %vm664, %v1204, 0
      %v1244 = vsel %vm664, %v1205, 0
      %v1247 = vsel %vm664, %v1206, 0
      %v1250 = vsel %vm664, %v1207, 0
      %v1253 = vsel %vm664, %v1208, 0
      %v1256 = vsel %vm664, %v1209, 0
      %v1259 = vand.u32 %v1161, %v716
      %1261 = vmatpush.bf16.msra.mxu0 0
      %1262 = vmatpush.bf16.msra.mxu0 0
      %1263 = vmatpush.bf16.msra.mxu0 0
      %1264 = vmatpush.bf16.msra.mxu0 0
      %1265 = vmatpush.bf16.msra.mxu0 0
      %1266 = vmatpush.bf16.msra.mxu0 0
      %1267 = vmatpush.bf16.msra.mxu0 0
      %1268 = vmatpush.bf16.msra.mxu0 %v1259
      %1269 = vmatmul.bf16.gmra.mxu0 %v1211
      %v1270 = vpop.f32.mrf.mxu0
      %v1271 = vadd.f32 0.0, %v1270
      %v1272 = vpop.f32.mrf.mxu0
      %v1273 = vadd.f32 0.0, %v1272
      %1274 = vmatmul.bf16.gmra.mxu0 %v1214
      %v1275 = vpop.f32.mrf.mxu0
      %v1276 = vadd.f32 0.0, %v1275
      %v1277 = vpop.f32.mrf.mxu0
      %v1278 = vadd.f32 0.0, %v1277
      %1279 = vmatmul.bf16.gmra.mxu0 %v1217
      %v1280 = vpop.f32.mrf.mxu0
      %v1281 = vadd.f32 0.0, %v1280
      %v1282 = vpop.f32.mrf.mxu0
      %v1283 = vadd.f32 0.0, %v1282
      %1284 = vmatmul.bf16.gmra.mxu0 %v1220
      %v1285 = vpop.f32.mrf.mxu0
      %v1286 = vadd.f32 0.0, %v1285
      %v1287 = vpop.f32.mrf.mxu0
      %v1288 = vadd.f32 0.0, %v1287
      %1289 = vmatmul.bf16.gmra.mxu0 %v1223
      %v1290 = vpop.f32.mrf.mxu0
      %v1291 = vadd.f32 0.0, %v1290
      %v1292 = vpop.f32.mrf.mxu0
      %v1293 = vadd.f32 0.0, %v1292
      %1294 = vmatmul.bf16.gmra.mxu0 %v1226
      %v1295 = vpop.f32.mrf.mxu0
      %v1296 = vadd.f32 0.0, %v1295
      %v1297 = vpop.f32.mrf.mxu0
      %v1298 = vadd.f32 0.0, %v1297
      %1299 = vmatmul.bf16.gmra.mxu0 %v1229
      %v1300 = vpop.f32.mrf.mxu0
      %v1301 = vadd.f32 0.0, %v1300
      %v1302 = vpop.f32.mrf.mxu0
      %v1303 = vadd.f32 0.0, %v1302
      %1304 = vmatmul.bf16.gmra.mxu0 %v1232
      %v1305 = vpop.f32.mrf.mxu0
      %v1306 = vadd.f32 0.0, %v1305
      %v1307 = vpop.f32.mrf.mxu0
      %v1308 = vadd.f32 0.0, %v1307
      %1309 = vmatmul.bf16.gmra.mxu0 %v1235
      %v1310 = vpop.f32.mrf.mxu0
      %v1311 = vadd.f32 0.0, %v1310
      %v1312 = vpop.f32.mrf.mxu0
      %v1313 = vadd.f32 0.0, %v1312
      %1314 = vmatmul.bf16.gmra.mxu0 %v1238
      %v1315 = vpop.f32.mrf.mxu0
      %v1316 = vadd.f32 0.0, %v1315
      %v1317 = vpop.f32.mrf.mxu0
      %v1318 = vadd.f32 0.0, %v1317
      %1319 = vmatmul.bf16.gmra.mxu0 %v1241
      %v1320 = vpop.f32.mrf.mxu0
      %v1321 = vadd.f32 0.0, %v1320
      %v1322 = vpop.f32.mrf.mxu0
      %v1323 = vadd.f32 0.0, %v1322
      %1324 = vmatmul.bf16.gmra.mxu0 %v1244
      %v1325 = vpop.f32.mrf.mxu0
      %v1326 = vadd.f32 0.0, %v1325
      %v1327 = vpop.f32.mrf.mxu0
      %v1328 = vadd.f32 0.0, %v1327
      %1329 = vmatmul.bf16.gmra.mxu0 %v1247
      %v1330 = vpop.f32.mrf.mxu0
      %v1331 = vadd.f32 0.0, %v1330
      %v1332 = vpop.f32.mrf.mxu0
      %v1333 = vadd.f32 0.0, %v1332
      %1334 = vmatmul.bf16.gmra.mxu0 %v1250
      %v1335 = vpop.f32.mrf.mxu0
      %v1336 = vadd.f32 0.0, %v1335
      %v1337 = vpop.f32.mrf.mxu0
      %v1338 = vadd.f32 0.0, %v1337
      %1339 = vmatmul.bf16.gmra.mxu0 %v1253
      %v1340 = vpop.f32.mrf.mxu0
      %v1341 = vadd.f32 0.0, %v1340
      %v1342 = vpop.f32.mrf.mxu0
      %v1343 = vadd.f32 0.0, %v1342
      %1344 = vmatmul.bf16.gmra.mxu0 %v1256
      %v1345 = vpop.f32.mrf.mxu0
      %v1346 = vadd.f32 0.0, %v1345
      %v1347 = vpop.f32.mrf.mxu0
      %v1348 = vadd.f32 0.0, %v1347
      %1349 = vdwg.mxu0
      %v1350 = vadd.f32 %v950, %v1271
      %v1351 = vadd.f32 %v952, %v1273
      %v1352 = vadd.f32 %v955, %v1276
      %v1353 = vadd.f32 %v957, %v1278
      %v1354 = vadd.f32 %v960, %v1281
      %v1355 = vadd.f32 %v962, %v1283
      %v1356 = vadd.f32 %v965, %v1286
      %v1357 = vadd.f32 %v967, %v1288
      %v1358 = vadd.f32 %v970, %v1291
      %v1359 = vadd.f32 %v972, %v1293
      %v1360 = vadd.f32 %v975, %v1296
      %v1361 = vadd.f32 %v977, %v1298
      %v1362 = vadd.f32 %v980, %v1301
      %v1363 = vadd.f32 %v982, %v1303
      %v1364 = vadd.f32 %v985, %v1306
      %v1365 = vadd.f32 %v987, %v1308
      %v1366 = vadd.f32 %v990, %v1311
      %v1367 = vadd.f32 %v992, %v1313
      %v1368 = vadd.f32 %v995, %v1316
      %v1369 = vadd.f32 %v997, %v1318
      %v1370 = vadd.f32 %v1000, %v1321
      %v1371 = vadd.f32 %v1002, %v1323
      %v1372 = vadd.f32 %v1005, %v1326
      %v1373 = vadd.f32 %v1007, %v1328
      %v1374 = vadd.f32 %v1010, %v1331
      %v1375 = vadd.f32 %v1012, %v1333
      %v1376 = vadd.f32 %v1015, %v1336
      %v1377 = vadd.f32 %v1017, %v1338
      %v1378 = vadd.f32 %v1020, %v1341
      %v1379 = vadd.f32 %v1022, %v1343
      %v1380 = vadd.f32 %v1025, %v1346
      %v1381 = vadd.f32 %v1027, %v1348
      %s1382 = scalar_lea.vmem %s1, 6
      %v1383 = vld [vmem:[%s1382] sm:$0x3]
      %v1386 = vunpack.c.l.b16 %v220
      %v1387 = vunpack.c.l.b16 %v221
      %v1388 = vpack.c.b16 %v1387, %v1386
      %v1390 = vsel %vm664, %v1388, 0
      %v1393 = vand.u32 %v1383, %v716
      %1395 = vmatpush.bf16.msra.mxu0 0
      %1396 = vmatpush.bf16.msra.mxu0 0
      %1397 = vmatpush.bf16.msra.mxu0 0
      %1398 = vmatpush.bf16.msra.mxu0 0
      %1399 = vmatpush.bf16.msra.mxu0 0
      %1400 = vmatpush.bf16.msra.mxu0 0
      %1401 = vmatpush.bf16.msra.mxu0 0
      %1402 = vmatpush.bf16.msra.mxu0 %v1393
      %1403 = vmatmul.bf16.gmra.mxu0 %v893
      %v1404 = vpop.f32.mrf.mxu0
      %v1405 = vadd.f32 0.0, %v1404
      %v1406 = vpop.f32.mrf.mxu0
      %v1407 = vadd.f32 0.0, %v1406
      %1408 = vmatmul.bf16.gmra.mxu0 %v896
      %v1409 = vpop.f32.mrf.mxu0
      %v1410 = vadd.f32 0.0, %v1409
      %v1411 = vpop.f32.mrf.mxu0
      %v1412 = vadd.f32 0.0, %v1411
      %1413 = vmatmul.bf16.gmra.mxu0 %v899
      %v1414 = vpop.f32.mrf.mxu0
      %v1415 = vadd.f32 0.0, %v1414
      %v1416 = vpop.f32.mrf.mxu0
      %v1417 = vadd.f32 0.0, %v1416
      %1418 = vmatmul.bf16.gmra.mxu0 %v902
      %v1419 = vpop.f32.mrf.mxu0
      %v1420 = vadd.f32 0.0, %v1419
      %v1421 = vpop.f32.mrf.mxu0
      %v1422 = vadd.f32 0.0, %v1421
      %1423 = vmatmul.bf16.gmra.mxu0 %v905
      %v1424 = vpop.f32.mrf.mxu0
      %v1425 = vadd.f32 0.0, %v1424
      %v1426 = vpop.f32.mrf.mxu0
      %v1427 = vadd.f32 0.0, %v1426
      %1428 = vmatmul.bf16.gmra.mxu0 %v908
      %v1429 = vpop.f32.mrf.mxu0
      %v1430 = vadd.f32 0.0, %v1429
      %v1431 = vpop.f32.mrf.mxu0
      %v1432 = vadd.f32 0.0, %v1431
      %1433 = vmatmul.bf16.gmra.mxu0 %v911
      %v1434 = vpop.f32.mrf.mxu0
      %v1435 = vadd.f32 0.0, %v1434
      %v1436 = vpop.f32.mrf.mxu0
      %v1437 = vadd.f32 0.0, %v1436
      %1438 = vmatmul.bf16.gmra.mxu0 %v914
      %v1439 = vpop.f32.mrf.mxu0
      %v1440 = vadd.f32 0.0, %v1439
      %v1441 = vpop.f32.mrf.mxu0
      %v1442 = vadd.f32 0.0, %v1441
      %1443 = vmatmul.bf16.gmra.mxu0 %v917
      %v1444 = vpop.f32.mrf.mxu0
      %v1445 = vadd.f32 0.0, %v1444
      %v1446 = vpop.f32.mrf.mxu0
      %v1447 = vadd.f32 0.0, %v1446
      %1448 = vmatmul.bf16.gmra.mxu0 %v920
      %v1449 = vpop.f32.mrf.mxu0
      %v1450 = vadd.f32 0.0, %v1449
      %v1451 = vpop.f32.mrf.mxu0
      %v1452 = vadd.f32 0.0, %v1451
      %1453 = vmatmul.bf16.gmra.mxu0 %v923
      %v1454 = vpop.f32.mrf.mxu0
      %v1455 = vadd.f32 0.0, %v1454
      %v1456 = vpop.f32.mrf.mxu0
      %v1457 = vadd.f32 0.0, %v1456
      %1458 = vmatmul.bf16.gmra.mxu0 %v926
      %v1459 = vpop.f32.mrf.mxu0
      %v1460 = vadd.f32 0.0, %v1459
      %v1461 = vpop.f32.mrf.mxu0
      %v1462 = vadd.f32 0.0, %v1461
      %1463 = vmatmul.bf16.gmra.mxu0 %v929
      %v1464 = vpop.f32.mrf.mxu0
      %v1465 = vadd.f32 0.0, %v1464
      %v1466 = vpop.f32.mrf.mxu0
      %v1467 = vadd.f32 0.0, %v1466
      %1468 = vmatmul.bf16.gmra.mxu0 %v932
      %v1469 = vpop.f32.mrf.mxu0
      %v1470 = vadd.f32 0.0, %v1469
      %v1471 = vpop.f32.mrf.mxu0
      %v1472 = vadd.f32 0.0, %v1471
      %1473 = vmatmul.bf16.gmra.mxu0 %v935
      %v1474 = vpop.f32.mrf.mxu0
      %v1475 = vadd.f32 0.0, %v1474
      %v1476 = vpop.f32.mrf.mxu0
      %v1477 = vadd.f32 0.0, %v1476
      %1478 = vmatmul.bf16.gmra.mxu0 %v1390
      %v1479 = vpop.f32.mrf.mxu0
      %v1480 = vadd.f32 0.0, %v1479
      %v1481 = vpop.f32.mrf.mxu0
      %v1482 = vadd.f32 0.0, %v1481
      %1483 = vdwg.mxu0
      %v1484 = vadd.f32 %v1350, %v1405
      %v1485 = vadd.f32 %v1351, %v1407
      %v1486 = vadd.f32 %v1352, %v1410
      %v1487 = vadd.f32 %v1353, %v1412
      %v1488 = vadd.f32 %v1354, %v1415
      %v1489 = vadd.f32 %v1355, %v1417
      %v1490 = vadd.f32 %v1356, %v1420
      %v1491 = vadd.f32 %v1357, %v1422
      %v1492 = vadd.f32 %v1358, %v1425
      %v1493 = vadd.f32 %v1359, %v1427
      %v1494 = vadd.f32 %v1360, %v1430
      %v1495 = vadd.f32 %v1361, %v1432
      %v1496 = vadd.f32 %v1362, %v1435
      %v1497 = vadd.f32 %v1363, %v1437
      %v1498 = vadd.f32 %v1364, %v1440
      %v1499 = vadd.f32 %v1365, %v1442
      %v1500 = vadd.f32 %v1366, %v1445
      %v1501 = vadd.f32 %v1367, %v1447
      %v1502 = vadd.f32 %v1368, %v1450
      %v1503 = vadd.f32 %v1369, %v1452
      %v1504 = vadd.f32 %v1370, %v1455
      %v1505 = vadd.f32 %v1371, %v1457
      %v1506 = vadd.f32 %v1372, %v1460
      %v1507 = vadd.f32 %v1373, %v1462
      %v1508 = vadd.f32 %v1374, %v1465
      %v1509 = vadd.f32 %v1375, %v1467
      %v1510 = vadd.f32 %v1376, %v1470
      %v1511 = vadd.f32 %v1377, %v1472
      %v1512 = vadd.f32 %v1378, %v1475
      %v1513 = vadd.f32 %v1379, %v1477
      %v1514 = vadd.f32 %v1380, %v1480
      %v1515 = vadd.f32 %v1381, %v1482
      %v1517 = vshrl.u32 %v220, 16
      %v1519 = vrot.slane %v1517, 4
      %v1520 = vshll.u32 %v220, 16
      %v1522 = vrot.slane %v1520, 5
      %v1523 = vor.u32 %v1519, %v1522
      %v1524 = vrot.slane %v1523, 4
      %v1526 = vshll.u32 %v221, 16
      %v1528 = vrot.slane %v1526, 5
      %v1529 = vsel %vm229, %v1524, %v1528
      %v1530 = vshrl.u32 %v221, 16
      %v1532 = vrot.slane %v1530, 4
      %v1533 = vor.u32 %v1532, %v1528
      %v1534 = vrot.slane %v1533, 4
      %v1536 = vshll.u32 %v222, 16
      %v1538 = vrot.slane %v1536, 5
      %v1539 = vsel %vm229, %v1534, %v1538
      %s1540 = scalar_lea.vmem %s1, 8
      %v1541 = vld [vmem:[%s1540] sm:$0x3]
      %v1542 = vunpack.c.l.b16 %v1529
      %v1543 = vunpack.c.l.b16 %v1539
      %v1544 = vpack.c.b16 %v1543, %v1542
      %v1546 = vsel %vm664, %v1544, 0
      %v1549 = vand.u32 %v1541, %v716
      %1551 = vmatpush.bf16.msra.mxu0 0
      %1552 = vmatpush.bf16.msra.mxu0 0
      %1553 = vmatpush.bf16.msra.mxu0 0
      %1554 = vmatpush.bf16.msra.mxu0 0
      %1555 = vmatpush.bf16.msra.mxu0 0
      %1556 = vmatpush.bf16.msra.mxu0 0
      %1557 = vmatpush.bf16.msra.mxu0 0
      %1558 = vmatpush.bf16.msra.mxu0 %v1549
      %1559 = vmatmul.bf16.gmra.mxu0 %v669
      %v1560 = vpop.f32.mrf.mxu0
      %v1561 = vadd.f32 0.0, %v1560
      %v1562 = vpop.f32.mrf.mxu0
      %v1563 = vadd.f32 0.0, %v1562
      %1564 = vmatmul.bf16.gmra.mxu0 %v672
      %v1565 = vpop.f32.mrf.mxu0
      %v1566 = vadd.f32 0.0, %v1565
      %v1567 = vpop.f32.mrf.mxu0
      %v1568 = vadd.f32 0.0, %v1567
      %1569 = vmatmul.bf16.gmra.mxu0 %v675
      %v1570 = vpop.f32.mrf.mxu0
      %v1571 = vadd.f32 0.0, %v1570
      %v1572 = vpop.f32.mrf.mxu0
      %v1573 = vadd.f32 0.0, %v1572
      %1574 = vmatmul.bf16.gmra.mxu0 %v678
      %v1575 = vpop.f32.mrf.mxu0
      %v1576 = vadd.f32 0.0, %v1575
      %v1577 = vpop.f32.mrf.mxu0
      %v1578 = vadd.f32 0.0, %v1577
      %1579 = vmatmul.bf16.gmra.mxu0 %v681
      %v1580 = vpop.f32.mrf.mxu0
      %v1581 = vadd.f32 0.0, %v1580
      %v1582 = vpop.f32.mrf.mxu0
      %v1583 = vadd.f32 0.0, %v1582
      %1584 = vmatmul.bf16.gmra.mxu0 %v684
      %v1585 = vpop.f32.mrf.mxu0
      %v1586 = vadd.f32 0.0, %v1585
      %v1587 = vpop.f32.mrf.mxu0
      %v1588 = vadd.f32 0.0, %v1587
      %1589 = vmatmul.bf16.gmra.mxu0 %v687
      %v1590 = vpop.f32.mrf.mxu0
      %v1591 = vadd.f32 0.0, %v1590
      %v1592 = vpop.f32.mrf.mxu0
      %v1593 = vadd.f32 0.0, %v1592
      %1594 = vmatmul.bf16.gmra.mxu0 %v690
      %v1595 = vpop.f32.mrf.mxu0
      %v1596 = vadd.f32 0.0, %v1595
      %v1597 = vpop.f32.mrf.mxu0
      %v1598 = vadd.f32 0.0, %v1597
      %1599 = vmatmul.bf16.gmra.mxu0 %v693
      %v1600 = vpop.f32.mrf.mxu0
      %v1601 = vadd.f32 0.0, %v1600
      %v1602 = vpop.f32.mrf.mxu0
      %v1603 = vadd.f32 0.0, %v1602
      %1604 = vmatmul.bf16.gmra.mxu0 %v696
      %v1605 = vpop.f32.mrf.mxu0
      %v1606 = vadd.f32 0.0, %v1605
      %v1607 = vpop.f32.mrf.mxu0
      %v1608 = vadd.f32 0.0, %v1607
      %1609 = vmatmul.bf16.gmra.mxu0 %v699
      %v1610 = vpop.f32.mrf.mxu0
      %v1611 = vadd.f32 0.0, %v1610
      %v1612 = vpop.f32.mrf.mxu0
      %v1613 = vadd.f32 0.0, %v1612
      %1614 = vmatmul.bf16.gmra.mxu0 %v702
      %v1615 = vpop.f32.mrf.mxu0
      %v1616 = vadd.f32 0.0, %v1615
      %v1617 = vpop.f32.mrf.mxu0
      %v1618 = vadd.f32 0.0, %v1617
      %1619 = vmatmul.bf16.gmra.mxu0 %v705
      %v1620 = vpop.f32.mrf.mxu0
      %v1621 = vadd.f32 0.0, %v1620
      %v1622 = vpop.f32.mrf.mxu0
      %v1623 = vadd.f32 0.0, %v1622
      %1624 = vmatmul.bf16.gmra.mxu0 %v708
      %v1625 = vpop.f32.mrf.mxu0
      %v1626 = vadd.f32 0.0, %v1625
      %v1627 = vpop.f32.mrf.mxu0
      %v1628 = vadd.f32 0.0, %v1627
      %1629 = vmatmul.bf16.gmra.mxu0 %v711
      %v1630 = vpop.f32.mrf.mxu0
      %v1631 = vadd.f32 0.0, %v1630
      %v1632 = vpop.f32.mrf.mxu0
      %v1633 = vadd.f32 0.0, %v1632
      %1634 = vmatmul.bf16.gmra.mxu0 %v1546
      %v1635 = vpop.f32.mrf.mxu0
      %v1636 = vadd.f32 0.0, %v1635
      %v1637 = vpop.f32.mrf.mxu0
      %v1638 = vadd.f32 0.0, %v1637
      %1639 = vdwg.mxu0
      %v1640 = vadd.f32 %v1484, %v1561
      %v1641 = vadd.f32 %v1485, %v1563
      %v1642 = vadd.f32 %v1486, %v1566
      %v1643 = vadd.f32 %v1487, %v1568
      %v1644 = vadd.f32 %v1488, %v1571
      %v1645 = vadd.f32 %v1489, %v1573
      %v1646 = vadd.f32 %v1490, %v1576
      %v1647 = vadd.f32 %v1491, %v1578
      %v1648 = vadd.f32 %v1492, %v1581
      %v1649 = vadd.f32 %v1493, %v1583
      %v1650 = vadd.f32 %v1494, %v1586
      %v1651 = vadd.f32 %v1495, %v1588
      %v1652 = vadd.f32 %v1496, %v1591
      %v1653 = vadd.f32 %v1497, %v1593
      %v1654 = vadd.f32 %v1498, %v1596
      %v1655 = vadd.f32 %v1499, %v1598
      %v1656 = vadd.f32 %v1500, %v1601
      %v1657 = vadd.f32 %v1501, %v1603
      %v1658 = vadd.f32 %v1502, %v1606
      %v1659 = vadd.f32 %v1503, %v1608
      %v1660 = vadd.f32 %v1504, %v1611
      %v1661 = vadd.f32 %v1505, %v1613
      %v1662 = vadd.f32 %v1506, %v1616
      %v1663 = vadd.f32 %v1507, %v1618
      %v1664 = vadd.f32 %v1508, %v1621
      %v1665 = vadd.f32 %v1509, %v1623
      %v1666 = vadd.f32 %v1510, %v1626
      %v1667 = vadd.f32 %v1511, %v1628
      %v1668 = vadd.f32 %v1512, %v1631
      %v1669 = vadd.f32 %v1513, %v1633
      %v1670 = vadd.f32 %v1514, %v1636
      %v1671 = vadd.f32 %v1515, %v1638
      %v1673 = vrot.slane %v220, 5
      %v1674 = vrot.slane %v1673, 4
      %v1675 = vrot.slane %v221, 5
      %v1676 = vsel %vm1047, %v1674, %v1675
      %v1677 = vrot.slane %v1675, 4
      %v1678 = vrot.slane %v222, 5
      %v1679 = vsel %vm1047, %v1677, %v1678
      %s1680 = scalar_lea.vmem %s1, 10
      %v1681 = vld [vmem:[%s1680] sm:$0x3]
      %v1682 = vunpack.c.l.b16 %v1676
      %v1683 = vunpack.c.l.b16 %v1679
      %v1684 = vpack.c.b16 %v1683, %v1682
      %v1686 = vsel %vm664, %v1684, 0
      %v1689 = vand.u32 %v1681, %v716
      %1691 = vmatpush.bf16.msra.mxu0 0
      %1692 = vmatpush.bf16.msra.mxu0 0
      %1693 = vmatpush.bf16.msra.mxu0 0
      %1694 = vmatpush.bf16.msra.mxu0 0
      %1695 = vmatpush.bf16.msra.mxu0 0
      %1696 = vmatpush.bf16.msra.mxu0 0
      %1697 = vmatpush.bf16.msra.mxu0 0
      %1698 = vmatpush.bf16.msra.mxu0 %v1689
      %1699 = vmatmul.bf16.gmra.mxu0 %v1214
      %v1700 = vpop.f32.mrf.mxu0
      %v1701 = vadd.f32 0.0, %v1700
      %v1702 = vpop.f32.mrf.mxu0
      %v1703 = vadd.f32 0.0, %v1702
      %1704 = vmatmul.bf16.gmra.mxu0 %v1217
      %v1705 = vpop.f32.mrf.mxu0
      %v1706 = vadd.f32 0.0, %v1705
      %v1707 = vpop.f32.mrf.mxu0
      %v1708 = vadd.f32 0.0, %v1707
      %1709 = vmatmul.bf16.gmra.mxu0 %v1220
      %v1710 = vpop.f32.mrf.mxu0
      %v1711 = vadd.f32 0.0, %v1710
      %v1712 = vpop.f32.mrf.mxu0
      %v1713 = vadd.f32 0.0, %v1712
      %1714 = vmatmul.bf16.gmra.mxu0 %v1223
      %v1715 = vpop.f32.mrf.mxu0
      %v1716 = vadd.f32 0.0, %v1715
      %v1717 = vpop.f32.mrf.mxu0
      %v1718 = vadd.f32 0.0, %v1717
      %1719 = vmatmul.bf16.gmra.mxu0 %v1226
      %v1720 = vpop.f32.mrf.mxu0
      %v1721 = vadd.f32 0.0, %v1720
      %v1722 = vpop.f32.mrf.mxu0
      %v1723 = vadd.f32 0.0, %v1722
      %1724 = vmatmul.bf16.gmra.mxu0 %v1229
      %v1725 = vpop.f32.mrf.mxu0
      %v1726 = vadd.f32 0.0, %v1725
      %v1727 = vpop.f32.mrf.mxu0
      %v1728 = vadd.f32 0.0, %v1727
      %1729 = vmatmul.bf16.gmra.mxu0 %v1232
      %v1730 = vpop.f32.mrf.mxu0
      %v1731 = vadd.f32 0.0, %v1730
      %v1732 = vpop.f32.mrf.mxu0
      %v1733 = vadd.f32 0.0, %v1732
      %1734 = vmatmul.bf16.gmra.mxu0 %v1235
      %v1735 = vpop.f32.mrf.mxu0
      %v1736 = vadd.f32 0.0, %v1735
      %v1737 = vpop.f32.mrf.mxu0
      %v1738 = vadd.f32 0.0, %v1737
      %1739 = vmatmul.bf16.gmra.mxu0 %v1238
      %v1740 = vpop.f32.mrf.mxu0
      %v1741 = vadd.f32 0.0, %v1740
      %v1742 = vpop.f32.mrf.mxu0
      %v1743 = vadd.f32 0.0, %v1742
      %1744 = vmatmul.bf16.gmra.mxu0 %v1241
      %v1745 = vpop.f32.mrf.mxu0
      %v1746 = vadd.f32 0.0, %v1745
      %v1747 = vpop.f32.mrf.mxu0
      %v1748 = vadd.f32 0.0, %v1747
      %1749 = vmatmul.bf16.gmra.mxu0 %v1244
      %v1750 = vpop.f32.mrf.mxu0
      %v1751 = vadd.f32 0.0, %v1750
      %v1752 = vpop.f32.mrf.mxu0
      %v1753 = vadd.f32 0.0, %v1752
      %1754 = vmatmul.bf16.gmra.mxu0 %v1247
      %v1755 = vpop.f32.mrf.mxu0
      %v1756 = vadd.f32 0.0, %v1755
      %v1757 = vpop.f32.mrf.mxu0
      %v1758 = vadd.f32 0.0, %v1757
      %1759 = vmatmul.bf16.gmra.mxu0 %v1250
      %v1760 = vpop.f32.mrf.mxu0
      %v1761 = vadd.f32 0.0, %v1760
      %v1762 = vpop.f32.mrf.mxu0
      %v1763 = vadd.f32 0.0, %v1762
      %1764 = vmatmul.bf16.gmra.mxu0 %v1253
      %v1765 = vpop.f32.mrf.mxu0
      %v1766 = vadd.f32 0.0, %v1765
      %v1767 = vpop.f32.mrf.mxu0
      %v1768 = vadd.f32 0.0, %v1767
      %1769 = vmatmul.bf16.gmra.mxu0 %v1256
      %v1770 = vpop.f32.mrf.mxu0
      %v1771 = vadd.f32 0.0, %v1770
      %v1772 = vpop.f32.mrf.mxu0
      %v1773 = vadd.f32 0.0, %v1772
      %1774 = vmatmul.bf16.gmra.mxu0 %v1686
      %v1775 = vpop.f32.mrf.mxu0
      %v1776 = vadd.f32 0.0, %v1775
      %v1777 = vpop.f32.mrf.mxu0
      %v1778 = vadd.f32 0.0, %v1777
      %1779 = vdwg.mxu0
      %v1780 = vadd.f32 %v1640, %v1701
      %v1781 = vadd.f32 %v1641, %v1703
      %v1782 = vadd.f32 %v1642, %v1706
      %v1783 = vadd.f32 %v1643, %v1708
      %v1784 = vadd.f32 %v1644, %v1711
      %v1785 = vadd.f32 %v1645, %v1713
      %v1786 = vadd.f32 %v1646, %v1716
      %v1787 = vadd.f32 %v1647, %v1718
      %v1788 = vadd.f32 %v1648, %v1721
      %v1789 = vadd.f32 %v1649, %v1723
      %v1790 = vadd.f32 %v1650, %v1726
      %v1791 = vadd.f32 %v1651, %v1728
      %v1792 = vadd.f32 %v1652, %v1731
      %v1793 = vadd.f32 %v1653, %v1733
      %v1794 = vadd.f32 %v1654, %v1736
      %v1795 = vadd.f32 %v1655, %v1738
      %v1796 = vadd.f32 %v1656, %v1741
      %v1797 = vadd.f32 %v1657, %v1743
      %v1798 = vadd.f32 %v1658, %v1746
      %v1799 = vadd.f32 %v1659, %v1748
      %v1800 = vadd.f32 %v1660, %v1751
      %v1801 = vadd.f32 %v1661, %v1753
      %v1802 = vadd.f32 %v1662, %v1756
      %v1803 = vadd.f32 %v1663, %v1758
      %v1804 = vadd.f32 %v1664, %v1761
      %v1805 = vadd.f32 %v1665, %v1763
      %v1806 = vadd.f32 %v1666, %v1766
      %v1807 = vadd.f32 %v1667, %v1768
      %v1808 = vadd.f32 %v1668, %v1771
      %v1809 = vadd.f32 %v1669, %v1773
      %v1810 = vadd.f32 %v1670, %v1776
      %v1811 = vadd.f32 %v1671, %v1778
      %s1812 = scalar_lea.vmem %s1, 12
      %v1813 = vld [vmem:[%s1812] sm:$0x3]
      %v1816 = vunpack.c.l.b16 %v223
      %v1817 = vunpack.c.l.b16 %v224
      %v1818 = vpack.c.b16 %v1817, %v1816
      %v1820 = vsel %vm664, %v1818, 0
      %v1823 = vand.u32 %v1813, %v716
      %1825 = vmatpush.bf16.msra.mxu0 0
      %1826 = vmatpush.bf16.msra.mxu0 0
      %1827 = vmatpush.bf16.msra.mxu0 0
      %1828 = vmatpush.bf16.msra.mxu0 0
      %1829 = vmatpush.bf16.msra.mxu0 0
      %1830 = vmatpush.bf16.msra.mxu0 0
      %1831 = vmatpush.bf16.msra.mxu0 0
      %1832 = vmatpush.bf16.msra.mxu0 %v1823
      %1833 = vmatmul.bf16.gmra.mxu0 %v896
      %v1834 = vpop.f32.mrf.mxu0
      %v1835 = vadd.f32 0.0, %v1834
      %v1836 = vpop.f32.mrf.mxu0
      %v1837 = vadd.f32 0.0, %v1836
      %1838 = vmatmul.bf16.gmra.mxu0 %v899
      %v1839 = vpop.f32.mrf.mxu0
      %v1840 = vadd.f32 0.0, %v1839
      %v1841 = vpop.f32.mrf.mxu0
      %v1842 = vadd.f32 0.0, %v1841
      %1843 = vmatmul.bf16.gmra.mxu0 %v902
      %v1844 = vpop.f32.mrf.mxu0
      %v1845 = vadd.f32 0.0, %v1844
      %v1846 = vpop.f32.mrf.mxu0
      %v1847 = vadd.f32 0.0, %v1846
      %1848 = vmatmul.bf16.gmra.mxu0 %v905
      %v1849 = vpop.f32.mrf.mxu0
      %v1850 = vadd.f32 0.0, %v1849
      %v1851 = vpop.f32.mrf.mxu0
      %v1852 = vadd.f32 0.0, %v1851
      %1853 = vmatmul.bf16.gmra.mxu0 %v908
      %v1854 = vpop.f32.mrf.mxu0
      %v1855 = vadd.f32 0.0, %v1854
      %v1856 = vpop.f32.mrf.mxu0
      %v1857 = vadd.f32 0.0, %v1856
      %1858 = vmatmul.bf16.gmra.mxu0 %v911
      %v1859 = vpop.f32.mrf.mxu0
      %v1860 = vadd.f32 0.0, %v1859
      %v1861 = vpop.f32.mrf.mxu0
      %v1862 = vadd.f32 0.0, %v1861
      %1863 = vmatmul.bf16.gmra.mxu0 %v914
      %v1864 = vpop.f32.mrf.mxu0
      %v1865 = vadd.f32 0.0, %v1864
      %v1866 = vpop.f32.mrf.mxu0
      %v1867 = vadd.f32 0.0, %v1866
      %1868 = vmatmul.bf16.gmra.mxu0 %v917
      %v1869 = vpop.f32.mrf.mxu0
      %v1870 = vadd.f32 0.0, %v1869
      %v1871 = vpop.f32.mrf.mxu0
      %v1872 = vadd.f32 0.0, %v1871
      %1873 = vmatmul.bf16.gmra.mxu0 %v920
      %v1874 = vpop.f32.mrf.mxu0
      %v1875 = vadd.f32 0.0, %v1874
      %v1876 = vpop.f32.mrf.mxu0
      %v1877 = vadd.f32 0.0, %v1876
      %1878 = vmatmul.bf16.gmra.mxu0 %v923
      %v1879 = vpop.f32.mrf.mxu0
      %v1880 = vadd.f32 0.0, %v1879
      %v1881 = vpop.f32.mrf.mxu0
      %v1882 = vadd.f32 0.0, %v1881
      %1883 = vmatmul.bf16.gmra.mxu0 %v926
      %v1884 = vpop.f32.mrf.mxu0
      %v1885 = vadd.f32 0.0, %v1884
      %v1886 = vpop.f32.mrf.mxu0
      %v1887 = vadd.f32 0.0, %v1886
      %1888 = vmatmul.bf16.gmra.mxu0 %v929
      %v1889 = vpop.f32.mrf.mxu0
      %v1890 = vadd.f32 0.0, %v1889
      %v1891 = vpop.f32.mrf.mxu0
      %v1892 = vadd.f32 0.0, %v1891
      %1893 = vmatmul.bf16.gmra.mxu0 %v932
      %v1894 = vpop.f32.mrf.mxu0
      %v1895 = vadd.f32 0.0, %v1894
      %v1896 = vpop.f32.mrf.mxu0
      %v1897 = vadd.f32 0.0, %v1896
      %1898 = vmatmul.bf16.gmra.mxu0 %v935
      %v1899 = vpop.f32.mrf.mxu0
      %v1900 = vadd.f32 0.0, %v1899
      %v1901 = vpop.f32.mrf.mxu0
      %v1902 = vadd.f32 0.0, %v1901
      %1903 = vmatmul.bf16.gmra.mxu0 %v1390
      %v1904 = vpop.f32.mrf.mxu0
      %v1905 = vadd.f32 0.0, %v1904
      %v1906 = vpop.f32.mrf.mxu0
      %v1907 = vadd.f32 0.0, %v1906
      %1908 = vmatmul.bf16.gmra.mxu0 %v1820
      %v1909 = vpop.f32.mrf.mxu0
      %v1910 = vadd.f32 0.0, %v1909
      %v1911 = vpop.f32.mrf.mxu0
      %v1912 = vadd.f32 0.0, %v1911
      %1913 = vdwg.mxu0
      %v1914 = vadd.f32 %v1780, %v1835
      %v1915 = vadd.f32 %v1781, %v1837
      %v1916 = vadd.f32 %v1782, %v1840
      %v1917 = vadd.f32 %v1783, %v1842
      %v1918 = vadd.f32 %v1784, %v1845
      %v1919 = vadd.f32 %v1785, %v1847
      %v1920 = vadd.f32 %v1786, %v1850
      %v1921 = vadd.f32 %v1787, %v1852
      %v1922 = vadd.f32 %v1788, %v1855
      %v1923 = vadd.f32 %v1789, %v1857
      %v1924 = vadd.f32 %v1790, %v1860
      %v1925 = vadd.f32 %v1791, %v1862
      %v1926 = vadd.f32 %v1792, %v1865
      %v1927 = vadd.f32 %v1793, %v1867
      %v1928 = vadd.f32 %v1794, %v1870
      %v1929 = vadd.f32 %v1795, %v1872
      %v1930 = vadd.f32 %v1796, %v1875
      %v1931 = vadd.f32 %v1797, %v1877
      %v1932 = vadd.f32 %v1798, %v1880
      %v1933 = vadd.f32 %v1799, %v1882
      %v1934 = vadd.f32 %v1800, %v1885
      %v1935 = vadd.f32 %v1801, %v1887
      %v1936 = vadd.f32 %v1802, %v1890
      %v1937 = vadd.f32 %v1803, %v1892
      %v1938 = vadd.f32 %v1804, %v1895
      %v1939 = vadd.f32 %v1805, %v1897
      %v1940 = vadd.f32 %v1806, %v1900
      %v1941 = vadd.f32 %v1807, %v1902
      %v1942 = vadd.f32 %v1808, %v1905
      %v1943 = vadd.f32 %v1809, %v1907
      %v1944 = vadd.f32 %v1810, %v1910
      %v1945 = vadd.f32 %v1811, %v1912
      %v1947 = vshrl.u32 %v223, 16
      %v1949 = vrot.slane %v1947, 4
      %v1950 = vshll.u32 %v223, 16
      %v1952 = vrot.slane %v1950, 5
      %v1953 = vor.u32 %v1949, %v1952
      %v1954 = vrot.slane %v1953, 4
      %v1956 = vshll.u32 %v224, 16
      %v1958 = vrot.slane %v1956, 5
      %v1959 = vsel %vm229, %v1954, %v1958
      %v1960 = vshrl.u32 %v224, 16
      %v1962 = vrot.slane %v1960, 4
      %v1963 = vor.u32 %v1962, %v1958
      %v1964 = vrot.slane %v1963, 4
      %v1966 = vshll.u32 %v225, 16
      %v1968 = vrot.slane %v1966, 5
      %v1969 = vsel %vm229, %v1964, %v1968
      %s1970 = scalar_lea.vmem %s1, 14
      %v1971 = vld [vmem:[%s1970] sm:$0x3]
      %v1972 = vunpack.c.l.b16 %v1959
      %v1973 = vunpack.c.l.b16 %v1969
      %v1974 = vpack.c.b16 %v1973, %v1972
      %v1976 = vsel %vm664, %v1974, 0
      %v1979 = vand.u32 %v1971, %v716
      %1981 = vmatpush.bf16.msra.mxu0 0
      %1982 = vmatpush.bf16.msra.mxu0 0
      %1983 = vmatpush.bf16.msra.mxu0 0
      %1984 = vmatpush.bf16.msra.mxu0 0
      %1985 = vmatpush.bf16.msra.mxu0 0
      %1986 = vmatpush.bf16.msra.mxu0 0
      %1987 = vmatpush.bf16.msra.mxu0 0
      %1988 = vmatpush.bf16.msra.mxu0 %v1979
      %1989 = vmatmul.bf16.gmra.mxu0 %v672
      %v1990 = vpop.f32.mrf.mxu0
      %v1991 = vadd.f32 0.0, %v1990
      %v1992 = vpop.f32.mrf.mxu0
      %v1993 = vadd.f32 0.0, %v1992
      %1994 = vmatmul.bf16.gmra.mxu0 %v675
      %v1995 = vpop.f32.mrf.mxu0
      %v1996 = vadd.f32 0.0, %v1995
      %v1997 = vpop.f32.mrf.mxu0
      %v1998 = vadd.f32 0.0, %v1997
      %1999 = vmatmul.bf16.gmra.mxu0 %v678
      %v2000 = vpop.f32.mrf.mxu0
      %v2001 = vadd.f32 0.0, %v2000
      %v2002 = vpop.f32.mrf.mxu0
      %v2003 = vadd.f32 0.0, %v2002
      %2004 = vmatmul.bf16.gmra.mxu0 %v681
      %v2005 = vpop.f32.mrf.mxu0
      %v2006 = vadd.f32 0.0, %v2005
      %v2007 = vpop.f32.mrf.mxu0
      %v2008 = vadd.f32 0.0, %v2007
      %2009 = vmatmul.bf16.gmra.mxu0 %v684
      %v2010 = vpop.f32.mrf.mxu0
      %v2011 = vadd.f32 0.0, %v2010
      %v2012 = vpop.f32.mrf.mxu0
      %v2013 = vadd.f32 0.0, %v2012
      %2014 = vmatmul.bf16.gmra.mxu0 %v687
      %v2015 = vpop.f32.mrf.mxu0
      %v2016 = vadd.f32 0.0, %v2015
      %v2017 = vpop.f32.mrf.mxu0
      %v2018 = vadd.f32 0.0, %v2017
      %2019 = vmatmul.bf16.gmra.mxu0 %v690
      %v2020 = vpop.f32.mrf.mxu0
      %v2021 = vadd.f32 0.0, %v2020
      %v2022 = vpop.f32.mrf.mxu0
      %v2023 = vadd.f32 0.0, %v2022
      %2024 = vmatmul.bf16.gmra.mxu0 %v693
      %v2025 = vpop.f32.mrf.mxu0
      %v2026 = vadd.f32 0.0, %v2025
      %v2027 = vpop.f32.mrf.mxu0
      %v2028 = vadd.f32 0.0, %v2027
      %2029 = vmatmul.bf16.gmra.mxu0 %v696
      %v2030 = vpop.f32.mrf.mxu0
      %v2031 = vadd.f32 0.0, %v2030
      %v2032 = vpop.f32.mrf.mxu0
      %v2033 = vadd.f32 0.0, %v2032
      %2034 = vmatmul.bf16.gmra.mxu0 %v699
      %v2035 = vpop.f32.mrf.mxu0
      %v2036 = vadd.f32 0.0, %v2035
      %v2037 = vpop.f32.mrf.mxu0
      %v2038 = vadd.f32 0.0, %v2037
      %2039 = vmatmul.bf16.gmra.mxu0 %v702
      %v2040 = vpop.f32.mrf.mxu0
      %v2041 = vadd.f32 0.0, %v2040
      %v2042 = vpop.f32.mrf.mxu0
      %v2043 = vadd.f32 0.0, %v2042
      %2044 = vmatmul.bf16.gmra.mxu0 %v705
      %v2045 = vpop.f32.mrf.mxu0
      %v2046 = vadd.f32 0.0, %v2045
      %v2047 = vpop.f32.mrf.mxu0
      %v2048 = vadd.f32 0.0, %v2047
      %2049 = vmatmul.bf16.gmra.mxu0 %v708
      %v2050 = vpop.f32.mrf.mxu0
      %v2051 = vadd.f32 0.0, %v2050
      %v2052 = vpop.f32.mrf.mxu0
      %v2053 = vadd.f32 0.0, %v2052
      %2054 = vmatmul.bf16.gmra.mxu0 %v711
      %v2055 = vpop.f32.mrf.mxu0
      %v2056 = vadd.f32 0.0, %v2055
      %v2057 = vpop.f32.mrf.mxu0
      %v2058 = vadd.f32 0.0, %v2057
      %2059 = vmatmul.bf16.gmra.mxu0 %v1546
      %v2060 = vpop.f32.mrf.mxu0
      %v2061 = vadd.f32 0.0, %v2060
      %v2062 = vpop.f32.mrf.mxu0
      %v2063 = vadd.f32 0.0, %v2062
      %2064 = vmatmul.bf16.gmra.mxu0 %v1976
      %v2065 = vpop.f32.mrf.mxu0
      %v2066 = vadd.f32 0.0, %v2065
      %v2067 = vpop.f32.mrf.mxu0
      %v2068 = vadd.f32 0.0, %v2067
      %2069 = vdwg.mxu0
      %v2070 = vadd.f32 %v1914, %v1991
      %v2071 = vadd.f32 %v1915, %v1993
      %v2072 = vadd.f32 %v1916, %v1996
      %v2073 = vadd.f32 %v1917, %v1998
      %v2074 = vadd.f32 %v1918, %v2001
      %v2075 = vadd.f32 %v1919, %v2003
      %v2076 = vadd.f32 %v1920, %v2006
      %v2077 = vadd.f32 %v1921, %v2008
      %v2078 = vadd.f32 %v1922, %v2011
      %v2079 = vadd.f32 %v1923, %v2013
      %v2080 = vadd.f32 %v1924, %v2016
      %v2081 = vadd.f32 %v1925, %v2018
      %v2082 = vadd.f32 %v1926, %v2021
      %v2083 = vadd.f32 %v1927, %v2023
      %v2084 = vadd.f32 %v1928, %v2026
      %v2085 = vadd.f32 %v1929, %v2028
      %v2086 = vadd.f32 %v1930, %v2031
      %v2087 = vadd.f32 %v1931, %v2033
      %v2088 = vadd.f32 %v1932, %v2036
      %v2089 = vadd.f32 %v1933, %v2038
      %v2090 = vadd.f32 %v1934, %v2041
      %v2091 = vadd.f32 %v1935, %v2043
      %v2092 = vadd.f32 %v1936, %v2046
      %v2093 = vadd.f32 %v1937, %v2048
      %v2094 = vadd.f32 %v1938, %v2051
      %v2095 = vadd.f32 %v1939, %v2053
      %v2096 = vadd.f32 %v1940, %v2056
      %v2097 = vadd.f32 %v1941, %v2058
      %v2098 = vadd.f32 %v1942, %v2061
      %v2099 = vadd.f32 %v1943, %v2063
      %v2100 = vadd.f32 %v1944, %v2066
      %v2101 = vadd.f32 %v1945, %v2068
      %v2103 = vrot.slane %v223, 5
      %v2104 = vrot.slane %v2103, 4
      %v2105 = vrot.slane %v224, 5
      %v2106 = vsel %vm1047, %v2104, %v2105
      %v2107 = vrot.slane %v2105, 4
      %v2108 = vrot.slane %v225, 5
      %v2109 = vsel %vm1047, %v2107, %v2108
      %s2110 = scalar_lea.vmem %s1, 16
      %v2111 = vld [vmem:[%s2110] sm:$0x3]
      %v2112 = vunpack.c.l.b16 %v2106
      %v2113 = vunpack.c.l.b16 %v2109
      %v2114 = vpack.c.b16 %v2113, %v2112
      %v2116 = vsel %vm664, %v2114, 0
      %v2119 = vand.u32 %v2111, %v716
      %2121 = vmatpush.bf16.msra.mxu0 0
      %2122 = vmatpush.bf16.msra.mxu0 0
      %2123 = vmatpush.bf16.msra.mxu0 0
      %2124 = vmatpush.bf16.msra.mxu0 0
      %2125 = vmatpush.bf16.msra.mxu0 0
      %2126 = vmatpush.bf16.msra.mxu0 0
      %2127 = vmatpush.bf16.msra.mxu0 0
      %2128 = vmatpush.bf16.msra.mxu0 %v2119
      %2129 = vmatmul.bf16.gmra.mxu0 %v1217
      %v2130 = vpop.f32.mrf.mxu0
      %v2131 = vadd.f32 0.0, %v2130
      %v2132 = vpop.f32.mrf.mxu0
      %v2133 = vadd.f32 0.0, %v2132
      %2134 = vmatmul.bf16.gmra.mxu0 %v1220
      %v2135 = vpop.f32.mrf.mxu0
      %v2136 = vadd.f32 0.0, %v2135
      %v2137 = vpop.f32.mrf.mxu0
      %v2138 = vadd.f32 0.0, %v2137
      %2139 = vmatmul.bf16.gmra.mxu0 %v1223
      %v2140 = vpop.f32.mrf.mxu0
      %v2141 = vadd.f32 0.0, %v2140
      %v2142 = vpop.f32.mrf.mxu0
      %v2143 = vadd.f32 0.0, %v2142
      %2144 = vmatmul.bf16.gmra.mxu0 %v1226
      %v2145 = vpop.f32.mrf.mxu0
      %v2146 = vadd.f32 0.0, %v2145
      %v2147 = vpop.f32.mrf.mxu0
      %v2148 = vadd.f32 0.0, %v2147
      %2149 = vmatmul.bf16.gmra.mxu0 %v1229
      %v2150 = vpop.f32.mrf.mxu0
      %v2151 = vadd.f32 0.0, %v2150
      %v2152 = vpop.f32.mrf.mxu0
      %v2153 = vadd.f32 0.0, %v2152
      %2154 = vmatmul.bf16.gmra.mxu0 %v1232
      %v2155 = vpop.f32.mrf.mxu0
      %v2156 = vadd.f32 0.0, %v2155
      %v2157 = vpop.f32.mrf.mxu0
      %v2158 = vadd.f32 0.0, %v2157
      %2159 = vmatmul.bf16.gmra.mxu0 %v1235
      %v2160 = vpop.f32.mrf.mxu0
      %v2161 = vadd.f32 0.0, %v2160
      %v2162 = vpop.f32.mrf.mxu0
      %v2163 = vadd.f32 0.0, %v2162
      %2164 = vmatmul.bf16.gmra.mxu0 %v1238
      %v2165 = vpop.f32.mrf.mxu0
      %v2166 = vadd.f32 0.0, %v2165
      %v2167 = vpop.f32.mrf.mxu0
      %v2168 = vadd.f32 0.0, %v2167
      %2169 = vmatmul.bf16.gmra.mxu0 %v1241
      %v2170 = vpop.f32.mrf.mxu0
      %v2171 = vadd.f32 0.0, %v2170
      %v2172 = vpop.f32.mrf.mxu0
      %v2173 = vadd.f32 0.0, %v2172
      %2174 = vmatmul.bf16.gmra.mxu0 %v1244
      %v2175 = vpop.f32.mrf.mxu0
      %v2176 = vadd.f32 0.0, %v2175
      %v2177 = vpop.f32.mrf.mxu0
      %v2178 = vadd.f32 0.0, %v2177
      %2179 = vmatmul.bf16.gmra.mxu0 %v1247
      %v2180 = vpop.f32.mrf.mxu0
      %v2181 = vadd.f32 0.0, %v2180
      %v2182 = vpop.f32.mrf.mxu0
      %v2183 = vadd.f32 0.0, %v2182
      %2184 = vmatmul.bf16.gmra.mxu0 %v1250
      %v2185 = vpop.f32.mrf.mxu0
      %v2186 = vadd.f32 0.0, %v2185
      %v2187 = vpop.f32.mrf.mxu0
      %v2188 = vadd.f32 0.0, %v2187
      %2189 = vmatmul.bf16.gmra.mxu0 %v1253
      %v2190 = vpop.f32.mrf.mxu0
      %v2191 = vadd.f32 0.0, %v2190
      %v2192 = vpop.f32.mrf.mxu0
      %v2193 = vadd.f32 0.0, %v2192
      %2194 = vmatmul.bf16.gmra.mxu0 %v1256
      %v2195 = vpop.f32.mrf.mxu0
      %v2196 = vadd.f32 0.0, %v2195
      %v2197 = vpop.f32.mrf.mxu0
      %v2198 = vadd.f32 0.0, %v2197
      %2199 = vmatmul.bf16.gmra.mxu0 %v1686
      %v2200 = vpop.f32.mrf.mxu0
      %v2201 = vadd.f32 0.0, %v2200
      %v2202 = vpop.f32.mrf.mxu0
      %v2203 = vadd.f32 0.0, %v2202
      %2204 = vmatmul.bf16.gmra.mxu0 %v2116
      %v2205 = vpop.f32.mrf.mxu0
      %v2206 = vadd.f32 0.0, %v2205
      %v2207 = vpop.f32.mrf.mxu0
      %v2208 = vadd.f32 0.0, %v2207
      %2209 = vdwg.mxu0
      %v2210 = vadd.f32 %v2070, %v2131
      %v2211 = vadd.f32 %v2071, %v2133
      %v2212 = vadd.f32 %v2072, %v2136
      %v2213 = vadd.f32 %v2073, %v2138
      %v2214 = vadd.f32 %v2074, %v2141
      %v2215 = vadd.f32 %v2075, %v2143
      %v2216 = vadd.f32 %v2076, %v2146
      %v2217 = vadd.f32 %v2077, %v2148
      %v2218 = vadd.f32 %v2078, %v2151
      %v2219 = vadd.f32 %v2079, %v2153
      %v2220 = vadd.f32 %v2080, %v2156
      %v2221 = vadd.f32 %v2081, %v2158
      %v2222 = vadd.f32 %v2082, %v2161
      %v2223 = vadd.f32 %v2083, %v2163
      %v2224 = vadd.f32 %v2084, %v2166
      %v2225 = vadd.f32 %v2085, %v2168
      %v2226 = vadd.f32 %v2086, %v2171
      %v2227 = vadd.f32 %v2087, %v2173
      %v2228 = vadd.f32 %v2088, %v2176
      %v2229 = vadd.f32 %v2089, %v2178
      %v2230 = vadd.f32 %v2090, %v2181
      %v2231 = vadd.f32 %v2091, %v2183
      %v2232 = vadd.f32 %v2092, %v2186
      %v2233 = vadd.f32 %v2093, %v2188
      %v2234 = vadd.f32 %v2094, %v2191
      %v2235 = vadd.f32 %v2095, %v2193
      %v2236 = vadd.f32 %v2096, %v2196
      %v2237 = vadd.f32 %v2097, %v2198
      %v2238 = vadd.f32 %v2098, %v2201
      %v2239 = vadd.f32 %v2099, %v2203
      %v2240 = vadd.f32 %v2100, %v2206
      %v2241 = vadd.f32 %v2101, %v2208
      %v2242 = vld [vmem:[%s2] sm:$0x1]
      %v2244 = vperm.slane %v2242, 0
      %v2246 = vadd.f32 %v2210, %v2244
      %v2247 = vadd.f32 %v2211, %v2244
      %v2248 = vadd.f32 %v2212, %v2244
      %v2249 = vadd.f32 %v2213, %v2244
      %v2250 = vadd.f32 %v2214, %v2244
      %v2251 = vadd.f32 %v2215, %v2244
      %v2252 = vadd.f32 %v2216, %v2244
      %v2253 = vadd.f32 %v2217, %v2244
      %v2254 = vadd.f32 %v2218, %v2244
      %v2255 = vadd.f32 %v2219, %v2244
      %v2256 = vadd.f32 %v2220, %v2244
      %v2257 = vadd.f32 %v2221, %v2244
      %v2258 = vadd.f32 %v2222, %v2244
      %v2259 = vadd.f32 %v2223, %v2244
      %v2260 = vadd.f32 %v2224, %v2244
      %v2261 = vadd.f32 %v2225, %v2244
      %v2262 = vadd.f32 %v2226, %v2244
      %v2263 = vadd.f32 %v2227, %v2244
      %v2264 = vadd.f32 %v2228, %v2244
      %v2265 = vadd.f32 %v2229, %v2244
      %v2266 = vadd.f32 %v2230, %v2244
      %v2267 = vadd.f32 %v2231, %v2244
      %v2268 = vadd.f32 %v2232, %v2244
      %v2269 = vadd.f32 %v2233, %v2244
      %v2270 = vadd.f32 %v2234, %v2244
      %v2271 = vadd.f32 %v2235, %v2244
      %v2272 = vadd.f32 %v2236, %v2244
      %v2273 = vadd.f32 %v2237, %v2244
      %v2274 = vadd.f32 %v2238, %v2244
      %v2275 = vadd.f32 %v2239, %v2244
      %v2276 = vadd.f32 %v2240, %v2244
      %v2277 = vadd.f32 %v2241, %v2244
      %v2278 = vmax.f32 %v2246, 0.0
      %v2279 = vmax.f32 %v2247, 0.0
      %v2280 = vmax.f32 %v2248, 0.0
      %v2281 = vmax.f32 %v2249, 0.0
      %v2282 = vmax.f32 %v2250, 0.0
      %v2283 = vmax.f32 %v2251, 0.0
      %v2284 = vmax.f32 %v2252, 0.0
      %v2285 = vmax.f32 %v2253, 0.0
      %v2286 = vmax.f32 %v2254, 0.0
      %v2287 = vmax.f32 %v2255, 0.0
      %v2288 = vmax.f32 %v2256, 0.0
      %v2289 = vmax.f32 %v2257, 0.0
      %v2290 = vmax.f32 %v2258, 0.0
      %v2291 = vmax.f32 %v2259, 0.0
      %v2292 = vmax.f32 %v2260, 0.0
      %v2293 = vmax.f32 %v2261, 0.0
      %v2294 = vmax.f32 %v2262, 0.0
      %v2295 = vmax.f32 %v2263, 0.0
      %v2296 = vmax.f32 %v2264, 0.0
      %v2297 = vmax.f32 %v2265, 0.0
      %v2298 = vmax.f32 %v2266, 0.0
      %v2299 = vmax.f32 %v2267, 0.0
      %v2300 = vmax.f32 %v2268, 0.0
      %v2301 = vmax.f32 %v2269, 0.0
      %v2302 = vmax.f32 %v2270, 0.0
      %v2303 = vmax.f32 %v2271, 0.0
      %v2304 = vmax.f32 %v2272, 0.0
      %v2305 = vmax.f32 %v2273, 0.0
      %v2306 = vmax.f32 %v2274, 0.0
      %v2307 = vmax.f32 %v2275, 0.0
      %v2308 = vmax.f32 %v2276, 0.0
      %v2309 = vmax.f32 %v2277, 0.0
      %v2310 = vpack.c.bf16 %v2278, %v2278
      %v2311 = vpack.c.bf16 %v2279, %v2279
      %v2312 = vpack.c.bf16 %v2280, %v2280
      %v2313 = vpack.c.bf16 %v2281, %v2281
      %v2314 = vpack.c.bf16 %v2282, %v2282
      %v2315 = vpack.c.bf16 %v2283, %v2283
      %v2316 = vpack.c.bf16 %v2284, %v2284
      %v2317 = vpack.c.bf16 %v2285, %v2285
      %v2318 = vpack.c.bf16 %v2286, %v2286
      %v2319 = vpack.c.bf16 %v2287, %v2287
      %v2320 = vpack.c.bf16 %v2288, %v2288
      %v2321 = vpack.c.bf16 %v2289, %v2289
      %v2322 = vpack.c.bf16 %v2290, %v2290
      %v2323 = vpack.c.bf16 %v2291, %v2291
      %v2324 = vpack.c.bf16 %v2292, %v2292
      %v2325 = vpack.c.bf16 %v2293, %v2293
      %v2326 = vpack.c.bf16 %v2294, %v2294
      %v2327 = vpack.c.bf16 %v2295, %v2295
      %v2328 = vpack.c.bf16 %v2296, %v2296
      %v2329 = vpack.c.bf16 %v2297, %v2297
      %v2330 = vpack.c.bf16 %v2298, %v2298
      %v2331 = vpack.c.bf16 %v2299, %v2299
      %v2332 = vpack.c.bf16 %v2300, %v2300
      %v2333 = vpack.c.bf16 %v2301, %v2301
      %v2334 = vpack.c.bf16 %v2302, %v2302
      %v2335 = vpack.c.bf16 %v2303, %v2303
      %v2336 = vpack.c.bf16 %v2304, %v2304
      %v2337 = vpack.c.bf16 %v2305, %v2305
      %v2338 = vpack.c.bf16 %v2306, %v2306
      %v2339 = vpack.c.bf16 %v2307, %v2307
      %v2340 = vpack.c.bf16 %v2308, %v2308
      %v2341 = vpack.c.bf16 %v2309, %v2309
      %vm2342 = vcmask 257024
      %2343 = vst.msk [vmem:[%s170] sm:$0xf] %vm2342, %v2310
      %2344 = vst.msk [vmem:[%s170 + $0x4] sm:$0xf] %vm2342, %v2311
      %2345 = vst.msk [vmem:[%s170 + $0x8] sm:$0xf] %vm2342, %v2312
      %2346 = vst.msk [vmem:[%s170 + $0xc] sm:$0xf] %vm2342, %v2313
      %2347 = vst.msk [vmem:[%s170 + $0x10] sm:$0xf] %vm2342, %v2314
      %2348 = vst.msk [vmem:[%s170 + $0x14] sm:$0xf] %vm2342, %v2315
      %2349 = vst.msk [vmem:[%s170 + $0x18] sm:$0xf] %vm2342, %v2316
      %2350 = vst.msk [vmem:[%s170 + $0x1c] sm:$0xf] %vm2342, %v2317
      %2351 = vst.msk [vmem:[%s170 + $0x20] sm:$0xf] %vm2342, %v2318
      %2352 = vst.msk [vmem:[%s170 + $0x24] sm:$0xf] %vm2342, %v2319
      %2353 = vst.msk [vmem:[%s170 + $0x28] sm:$0xf] %vm2342, %v2320
      %2354 = vst.msk [vmem:[%s170 + $0x2c] sm:$0xf] %vm2342, %v2321
      %2355 = vst.msk [vmem:[%s170 + $0x30] sm:$0xf] %vm2342, %v2322
      %2356 = vst.msk [vmem:[%s170 + $0x34] sm:$0xf] %vm2342, %v2323
      %2357 = vst.msk [vmem:[%s170 + $0x38] sm:$0xf] %vm2342, %v2324
      %2358 = vst.msk [vmem:[%s170 + $0x3c] sm:$0xf] %vm2342, %v2325
      %2359 = vst.msk [vmem:[%s170 + $0x40] sm:$0xf] %vm2342, %v2326
      %2360 = vst.msk [vmem:[%s170 + $0x44] sm:$0xf] %vm2342, %v2327
      %2361 = vst.msk [vmem:[%s170 + $0x48] sm:$0xf] %vm2342, %v2328
      %2362 = vst.msk [vmem:[%s170 + $0x4c] sm:$0xf] %vm2342, %v2329
      %2363 = vst.msk [vmem:[%s170 + $0x50] sm:$0xf] %vm2342, %v2330
      %2364 = vst.msk [vmem:[%s170 + $0x54] sm:$0xf] %vm2342, %v2331
      %2365 = vst.msk [vmem:[%s170 + $0x58] sm:$0xf] %vm2342, %v2332
      %2366 = vst.msk [vmem:[%s170 + $0x5c] sm:$0xf] %vm2342, %v2333
      %2367 = vst.msk [vmem:[%s170 + $0x60] sm:$0xf] %vm2342, %v2334
      %2368 = vst.msk [vmem:[%s170 + $0x64] sm:$0xf] %vm2342, %v2335
      %2369 = vst.msk [vmem:[%s170 + $0x68] sm:$0xf] %vm2342, %v2336
      %2370 = vst.msk [vmem:[%s170 + $0x6c] sm:$0xf] %vm2342, %v2337
      %2371 = vst.msk [vmem:[%s170 + $0x70] sm:$0xf] %vm2342, %v2338
      %2372 = vst.msk [vmem:[%s170 + $0x74] sm:$0xf] %vm2342, %v2339
      %2373 = vst.msk [vmem:[%s170 + $0x78] sm:$0xf] %vm2342, %v2340
      %2374 = vst.msk [vmem:[%s170 + $0x7c] sm:$0xf] %vm2342, %v2341
      %p2375 = scmp.lt.s32.totalorder %s14, 1
      %s2376 = scalar_select %p2375, %s14, 1
      %s2377 = smul.addr %s2376, 32
      %s2378 = smul.addr %s2377, 4
      %s2379 = scalar_lea.vmem %s3, %s2378
      // Predicated region
      $region33: #{video_style_transfer_forward.4} parent=31 // pred_check
        %p2380 = pneg %p100
      $region34: #{video_style_transfer_forward.4} parent=31 // pred_check_branch
        %2382 = sbr.rel (%p2380) target = $region36
      $region35: #{video_style_transfer_forward.4} parent=31 // pred_region
        _
      $region36: #{video_style_transfer_forward.4} parent=31 // pred_fallthru
        _
    $region32: #{video_style_transfer_forward.4} parent=5 // pred_fallthru
      _
    %p2383 = scmp.le.s32.totalorder 2, %s9
    // Predicated region
    $region37: #{video_style_transfer_forward.4} parent=5 // pred_check
      %p2384 = pneg %p2383
    $region38: #{video_style_transfer_forward.4} parent=5 // pred_check_branch
      %2386 = sbr.rel (%p2384) target = $region40
    $region39: #{video_style_transfer_forward.4} parent=5 // pred_region
      %s2387 = ssub.s32 %s9, 2
      // Predicated region
      $region41: #{video_style_transfer_forward.4} parent=39 // pred_check
        %p2388 = pneg %p106
      $region42: #{video_style_transfer_forward.4} parent=39 // pred_check_branch
        %2390 = sbr.rel (%p2388) target = $region44
      $region43: #{video_style_transfer_forward.4} parent=39 // pred_region
        %p2391 = scmp.lt.s32.totalorder %s15, 1
        %s2392 = scalar_select %p2391, %s15, 1
        %s2393 = smul.addr %s2392, 32
        %s2394 = smul.addr %s2393, 4
        %s2395 = scalar_lea.vmem %s3, %s2394
      $region44: #{video_style_transfer_forward.4} parent=39 // pred_fallthru
        _
    $region40: #{video_style_transfer_forward.4} parent=5 // pred_fallthru
      _
  $region6: #{video_style_transfer_forward.4} parent=0 // loop_footer
    %s13 = sadd.s32 1, %s9
  $region7: #{video_style_transfer_forward.4} parent=0 // loop_footer_branch
    %8 = sbr.rel target = $region3
  $region8: #{video_style_transfer_forward.4} parent=0 // loop_exit
    _

// kernel: video_style_transfer_forward.7
$region0: #{video_style_transfer_forward.7}
  #allocation0 [shape = 'u32[]', space=smem, size = 0x4, offset = 0x4, fixed_abs, tag = 'smem constant byte address 0x4 - core index']
  #allocation1 [shape = 'u32[72,128]{1,0:T(1,128)}', space=vmem, size = 0x9000, scoped, tag = 'internal scratch']
  %s0 = inlined_call_operand.vmem [shape: bf16[2,18,18,32], index: 0, kind: input, shape index: {}]
  %s1 = inlined_call_operand.vmem [shape: bf16[9,3,32], index: 1, kind: input, shape index: {}]
  %s2 = inlined_call_operand.vmem [shape: f32[3,1], index: 2, kind: input, shape index: {}]
  %s3 = inlined_call_operand.vmem [shape: f32[2,3,256], index: 3, kind: output, shape index: {}]
  %s4 = sld [smem:[#allocation0]]
  $region45: #{video_style_transfer_forward.7} parent=0
    _
  %s6 = ssub.s32 1, %s4
  %s7 = scalar_select 0, %s6, %s4
  loop: start=0, step=1, limit=4
  $region2: #{video_style_transfer_forward.7} parent=0 // loop_pre_header
    _
  $region3: #{video_style_transfer_forward.7} parent=0 // loop_header
    %s9 = sphi 0, %s13
    %p10 = scmp.ge.s32.totalorder %s9, 4
    %s19 = sphi 0, %s21
    %s22 = sphi 0, %s19
    %s23 = sphi 0, %s22
    %s39 = sphi 0, %s23
    %s43 = sphi 0, %s43
    %s45 = sphi 0, %s43
    %s46 = sphi 0, %s45
    %s60 = sphi 0, %s46
    %s64 = sphi 0, %s64
    %s66 = sphi 0, %s64
    %s67 = sphi 0, %s66
    %s81 = sphi 0, %s67
    %s87 = sphi 0, %s89
    %s90 = sphi 0, %s87
    %s91 = sphi 0, %s90
    %s107 = sphi 0, %s91
  $region4: #{video_style_transfer_forward.7} parent=0 // loop_header_branch
    %12 = sbr.rel (%p10) target = $region8
  $region5: #{video_style_transfer_forward.7} parent=0 // loop_body
    %s14 = ssub.s32 %s9, 1
    %s15 = ssub.s32 %s9, 2
    %s16 = sadd.s32 %s9, 1
    %s17 = ssub.s32 %s9, %s16
    %p18 = scmp.eq.s32.totalorder %s17, 0
    %s20 = sadd.s32 %s19, 1
    %s21 = scalar_select %p18, %s19, %s20
    %p24 = pneg %p18
    %p25 = scmp.eq.s32.totalorder %s9, 1
    %p26 = por %p24, %p25
    %p27 = scmp.ne.s32.totalorder %s19, %s22
    %p28 = scmp.eq.s32.totalorder %s9, 0
    %p29 = por %p27, %p28
    %p30 = scmp.ne.s32.totalorder %s19, %s22
    %p31 = scmp.eq.s32.totalorder %s14, 1
    %p32 = por %p30, %p31
    %p33 = scmp.ne.s32.totalorder %s22, %s23
    %p34 = scmp.eq.s32.totalorder %s14, 0
    %p35 = por %p33, %p34
    %p36 = scmp.ne.s32.totalorder %s22, %s23
    %p37 = scmp.eq.s32.totalorder %s15, 1
    %p38 = por %p36, %p37
    %p40 = scmp.ne.s32.totalorder %s23, %s39
    %p41 = scmp.eq.s32.totalorder %s15, 0
    %p42 = por %p40, %p41
    %s44 = sadd.s32 %s43, 1
    %p47 = scmp.eq.s32.totalorder %s9, 1
    %p48 = scmp.ne.s32.totalorder %s43, %s45
    %p49 = scmp.eq.s32.totalorder %s9, 0
    %p50 = por %p48, %p49
    %p51 = scmp.ne.s32.totalorder %s43, %s45
    %p52 = scmp.eq.s32.totalorder %s14, 1
    %p53 = por %p51, %p52
    %p54 = scmp.ne.s32.totalorder %s45, %s46
    %p55 = scmp.eq.s32.totalorder %s14, 0
    %p56 = por %p54, %p55
    %p57 = scmp.ne.s32.totalorder %s45, %s46
    %p58 = scmp.eq.s32.totalorder %s15, 1
    %p59 = por %p57, %p58
    %p61 = scmp.ne.s32.totalorder %s46, %s60
    %p62 = scmp.eq.s32.totalorder %s15, 0
    %p63 = por %p61, %p62
    %s65 = sadd.s32 %s64, 1
    %p68 = scmp.eq.s32.totalorder %s9, 1
    %p69 = scmp.ne.s32.totalorder %s64, %s66
    %p70 = scmp.eq.s32.totalorder %s9, 0
    %p71 = por %p69, %p70
    %p72 = scmp.ne.s32.totalorder %s64, %s66
    %p73 = scmp.eq.s32.totalorder %s14, 1
    %p74 = por %p72, %p73
    %p75 = scmp.ne.s32.totalorder %s66, %s67
    %p76 = scmp.eq.s32.totalorder %s14, 0
    %p77 = por %p75, %p76
    %p78 = scmp.ne.s32.totalorder %s66, %s67
    %p79 = scmp.eq.s32.totalorder %s15, 1
    %p80 = por %p78, %p79
    %p82 = scmp.ne.s32.totalorder %s67, %s81
    %p83 = scmp.eq.s32.totalorder %s15, 0
    %p84 = por %p82, %p83
    %s85 = ssub.s32 %s9, %s16
    %p86 = scmp.eq.s32.totalorder %s85, 0
    %s88 = sadd.s32 %s87, 1
    %s89 = scalar_select %p86, %s87, %s88
    %p92 = pneg %p86
    %p93 = scmp.eq.s32.totalorder %s9, 1
    %p94 = por %p92, %p93
    %p95 = scmp.ne.s32.totalorder %s87, %s90
    %p96 = scmp.eq.s32.totalorder %s9, 0
    %p97 = por %p95, %p96
    %p98 = scmp.ne.s32.totalorder %s87, %s90
    %p99 = scmp.eq.s32.totalorder %s14, 1
    %p100 = por %p98, %p99
    %p101 = scmp.ne.s32.totalorder %s90, %s91
    %p102 = scmp.eq.s32.totalorder %s14, 0
    %p103 = por %p101, %p102
    %p104 = scmp.ne.s32.totalorder %s90, %s91
    %p105 = scmp.eq.s32.totalorder %s15, 1
    %p106 = por %p104, %p105
    %p108 = scmp.ne.s32.totalorder %s91, %s107
    %p109 = scmp.eq.s32.totalorder %s15, 0
    %p110 = por %p108, %p109
    %p111 = scmp.le.s32.totalorder 1, %s9
    %p112 = scmp.lt.s32.totalorder %s9, 3
    %p113 = pnand %p111, %p112
    %p114 = pneg %p113
    // Predicated region
    $region9: #{video_style_transfer_forward.7} parent=5 // pred_check
      _
    $region10: #{video_style_transfer_forward.7} parent=5 // pred_check_branch
      %116 = sbr.rel (%p113) target = $region12
    $region11: #{video_style_transfer_forward.7} parent=5 // pred_region
      %s117 = ssub.s32 %s9, 1
      // Predicated region
      $region13: #{video_style_transfer_forward.7} parent=11 // pred_check
        %p118 = pneg %p56
      $region14: #{video_style_transfer_forward.7} parent=11 // pred_check_branch
        %120 = sbr.rel (%p118) target = $region16
      $region15: #{video_style_transfer_forward.7} parent=11 // pred_region
        _
      $region16: #{video_style_transfer_forward.7} parent=11 // pred_fallthru
        _
      // Predicated region
      $region17: #{video_style_transfer_forward.7} parent=11 // pred_check
        %p121 = pneg %p77
      $region18: #{video_style_transfer_forward.7} parent=11 // pred_check_branch
        %123 = sbr.rel (%p121) target = $region20
      $region19: #{video_style_transfer_forward.7} parent=11 // pred_region
        _
      $region20: #{video_style_transfer_forward.7} parent=11 // pred_fallthru
        _
    $region12: #{video_style_transfer_forward.7} parent=5 // pred_fallthru
      _
    %p124 = scmp.lt.s32.totalorder %s9, 2
    // Predicated region
    $region21: #{video_style_transfer_forward.7} parent=5 // pred_check
      %p125 = pneg %p124
    $region22: #{video_style_transfer_forward.7} parent=5 // pred_check_branch
      %127 = sbr.rel (%p125) target = $region24
    $region23: #{video_style_transfer_forward.7} parent=5 // pred_region
      // Predicated region
      $region25: #{video_style_transfer_forward.7} parent=23 // pred_check
        %p128 = pneg %p29
      $region26: #{video_style_transfer_forward.7} parent=23 // pred_check_branch
        %130 = sbr.rel (%p128) target = $region28
      $region27: #{video_style_transfer_forward.7} parent=23 // pred_region
        %p131 = scmp.lt.s32.totalorder %s9, 1
        %s132 = scalar_select %p131, %s9, 1
        %s133 = smul.addr %s132, 54
        %s134 = smul.addr %s133, 4
        %s135 = scalar_lea.vmem %s0, %s134
      $region28: #{video_style_transfer_forward.7} parent=23 // pred_fallthru
        _
    $region24: #{video_style_transfer_forward.7} parent=5 // pred_fallthru
      _
    %p136 = scmp.le.s32.totalorder 1, %s9
    %p137 = scmp.lt.s32.totalorder %s9, 3
    %p138 = pnand %p136, %p137
    %p139 = pneg %p138
    // Predicated region
    $region29: #{video_style_transfer_forward.7} parent=5 // pred_check
      _
    $region30: #{video_style_transfer_forward.7} parent=5 // pred_check_branch
      %141 = sbr.rel (%p138) target = $region32
    $region31: #{video_style_transfer_forward.7} parent=5 // pred_region
      %s142 = ssub.s32 %s9, 1
      %p143 = scmp.lt.s32.totalorder %s14, 1
      %s144 = scalar_select %p143, %s14, 1
      %s145 = smul.addr %s144, 54
      %s146 = smul.addr %s145, 4
      %s147 = scalar_lea.vmem %s0, %s146
      %p148 = pneg %p35
      %p149 = pneg %p32
      %p150 = pneg %p56
      %p151 = pneg %p53
      %p152 = pneg %p77
      %p153 = pneg %p74
      %p154 = pneg %p103
      %p155 = pneg %p100
      %p156 = scmp.lt.s32.totalorder %s14, 1
      %s157 = scalar_select %p156, %s14, 1
      %s158 = smul.addr %s157, 2
      %s159 = smul.addr %s158, 4
      %s160 = scalar_lea.vmem %s3, %s159
      %p161 = scmp.lt.s32.totalorder %s14, 1
      %s162 = scalar_select %p161, %s14, 1
      %s163 = smul.addr %s162, 54
      %s164 = smul.addr %s163, 4
      %s165 = scalar_lea.vmem %s0, %s164
      %p166 = scmp.lt.s32.totalorder %s14, 1
      %s167 = scalar_select %p166, %s14, 1
      %s168 = smul.addr %s167, 2
      %s169 = smul.addr %s168, 4
      %s170 = scalar_lea.vmem %s3, %s169
      %v171 = vld [vmem:[%s165] sm:$0xf]
      %v172 = vld [vmem:[%s165 + $0x4] sm:$0xf]
      %v173 = vld [vmem:[%s165 + $0x8] sm:$0x1]
      %v174 = vld [vmem:[%s165 + $0xc] sm:$0xf]
      %v175 = vld [vmem:[%s165 + $0x10] sm:$0xf]
      %v176 = vld [vmem:[%s165 + $0x14] sm:$0x1]
      %v177 = vld [vmem:[%s165 + $0x18] sm:$0xf]
      %v178 = vld [vmem:[%s165 + $0x1c] sm:$0xf]
      %v179 = vld [vmem:[%s165 + $0x20] sm:$0x1]
      %v180 = vld [vmem:[%s165 + $0x24] sm:$0xf]
      %v181 = vld [vmem:[%s165 + $0x28] sm:$0xf]
      %v182 = vld [vmem:[%s165 + $0x2c] sm:$0x1]
      %v183 = vld [vmem:[%s165 + $0x30] sm:$0xf]
      %v184 = vld [vmem:[%s165 + $0x34] sm:$0xf]
      %v185 = vld [vmem:[%s165 + $0x38] sm:$0x1]
      %v186 = vld [vmem:[%s165 + $0x3c] sm:$0xf]
      %v187 = vld [vmem:[%s165 + $0x40] sm:$0xf]
      %v188 = vld [vmem:[%s165 + $0x44] sm:$0x1]
      %v189 = vld [vmem:[%s165 + $0x48] sm:$0xf]
      %v190 = vld [vmem:[%s165 + $0x4c] sm:$0xf]
      %v191 = vld [vmem:[%s165 + $0x50] sm:$0x1]
      %v192 = vld [vmem:[%s165 + $0x54] sm:$0xf]
      %v193 = vld [vmem:[%s165 + $0x58] sm:$0xf]
      %v194 = vld [vmem:[%s165 + $0x5c] sm:$0x1]
      %v195 = vld [vmem:[%s165 + $0x60] sm:$0xf]
      %v196 = vld [vmem:[%s165 + $0x64] sm:$0xf]
      %v197 = vld [vmem:[%s165 + $0x68] sm:$0x1]
      %v198 = vld [vmem:[%s165 + $0x6c] sm:$0xf]
      %v199 = vld [vmem:[%s165 + $0x70] sm:$0xf]
      %v200 = vld [vmem:[%s165 + $0x74] sm:$0x1]
      %v201 = vld [vmem:[%s165 + $0x78] sm:$0xf]
      %v202 = vld [vmem:[%s165 + $0x7c] sm:$0xf]
      %v203 = vld [vmem:[%s165 + $0x80] sm:$0x1]
      %v204 = vld [vmem:[%s165 + $0x84] sm:$0xf]
      %v205 = vld [vmem:[%s165 + $0x88] sm:$0xf]
      %v206 = vld [vmem:[%s165 + $0x8c] sm:$0x1]
      %v207 = vld [vmem:[%s165 + $0x90] sm:$0xf]
      %v208 = vld [vmem:[%s165 + $0x94] sm:$0xf]
      %v209 = vld [vmem:[%s165 + $0x98] sm:$0x1]
      %v210 = vld [vmem:[%s165 + $0x9c] sm:$0xf]
      %v211 = vld [vmem:[%s165 + $0xa0] sm:$0xf]
      %v212 = vld [vmem:[%s165 + $0xa4] sm:$0x1]
      %v213 = vld [vmem:[%s165 + $0xa8] sm:$0xf]
      %v214 = vld [vmem:[%s165 + $0xac] sm:$0xf]
      %v215 = vld [vmem:[%s165 + $0xb0] sm:$0x1]
      %v216 = vld [vmem:[%s165 + $0xb4] sm:$0xf]
      %v217 = vld [vmem:[%s165 + $0xb8] sm:$0xf]
      %v218 = vld [vmem:[%s165 + $0xbc] sm:$0x1]
      %v219 = vld [vmem:[%s165 + $0xc0] sm:$0xf]
      %v220 = vld [vmem:[%s165 + $0xc4] sm:$0xf]
      %v221 = vld [vmem:[%s165 + $0xc8] sm:$0x1]
      %v222 = vld [vmem:[%s165 + $0xcc] sm:$0xf]
      %v223 = vld [vmem:[%s165 + $0xd0] sm:$0xf]
      %v224 = vld [vmem:[%s165 + $0xd4] sm:$0x1]
      %v225 = vld [vmem:[%s1] sm:$0x3]
      %vm226 = vsmask.f32 3328
      %vm227 = vsmask.f32 7440
      %vm228 = vmor %vm226, %vm227
      %v230 = vshrl.u32 %v171, 16
      %v232 = vrot.slane %v230, 4
      %v233 = vshll.u32 %v171, 16
      %v235 = vrot.slane %v233, 5
      %v236 = vor.u32 %v232, %v235
      %v237 = vrot.slane %v236, 4
      %v239 = vshll.u32 %v172, 16
      %v241 = vrot.slane %v239, 5
      %v242 = vsel %vm228, %v237, %v241
      %v243 = vshrl.u32 %v172, 16
      %v245 = vrot.slane %v243, 4
      %v246 = vor.u32 %v245, %v241
      %v247 = vrot.slane %v246, 4
      %v249 = vshll.u32 %v173, 16
      %v251 = vrot.slane %v249, 5
      %v252 = vsel %vm228, %v247, %v251
      %v254 = vshrl.u32 %v174, 16
      %v256 = vrot.slane %v254, 4
      %v257 = vshll.u32 %v174, 16
      %v259 = vrot.slane %v257, 5
      %v260 = vor.u32 %v256, %v259
      %v261 = vrot.slane %v260, 4
      %v263 = vshll.u32 %v175, 16
      %v265 = vrot.slane %v263, 5
      %v266 = vsel %vm228, %v261, %v265
      %v267 = vshrl.u32 %v175, 16
      %v269 = vrot.slane %v267, 4
      %v270 = vor.u32 %v269, %v265
      %v271 = vrot.slane %v270, 4
      %v273 = vshll.u32 %v176, 16
      %v275 = vrot.slane %v273, 5
      %v276 = vsel %vm228, %v271, %v275
      %v278 = vshrl.u32 %v177, 16
      %v280 = vrot.slane %v278, 4
      %v281 = vshll.u32 %v177, 16
      %v283 = vrot.slane %v281, 5
      %v284 = vor.u32 %v280, %v283
      %v285 = vrot.slane %v284, 4
      %v287 = vshll.u32 %v178, 16
      %v289 = vrot.slane %v287, 5
      %v290 = vsel %vm228, %v285, %v289
      %v291 = vshrl.u32 %v178, 16
      %v293 = vrot.slane %v291, 4
      %v294 = vor.u32 %v293, %v289
      %v295 = vrot.slane %v294, 4
      %v297 = vshll.u32 %v179, 16
      %v299 = vrot.slane %v297, 5
      %v300 = vsel %vm228, %v295, %v299
      %v302 = vshrl.u32 %v180, 16
      %v304 = vrot.slane %v302, 4
      %v305 = vshll.u32 %v180, 16
      %v307 = vrot.slane %v305, 5
      %v308 = vor.u32 %v304, %v307
      %v309 = vrot.slane %v308, 4
      %v311 = vshll.u32 %v181, 16
      %v313 = vrot.slane %v311, 5
      %v314 = vsel %vm228, %v309, %v313
      %v315 = vshrl.u32 %v181, 16
      %v317 = vrot.slane %v315, 4
      %v318 = vor.u32 %v317, %v313
      %v319 = vrot.slane %v318, 4
      %v321 = vshll.u32 %v182, 16
      %v323 = vrot.slane %v321, 5
      %v324 = vsel %vm228, %v319, %v323
      %v326 = vshrl.u32 %v183, 16
      %v328 = vrot.slane %v326, 4
      %v329 = vshll.u32 %v183, 16
      %v331 = vrot.slane %v329, 5
      %v332 = vor.u32 %v328, %v331
      %v333 = vrot.slane %v332, 4
      %v335 = vshll.u32 %v184, 16
      %v337 = vrot.slane %v335, 5
      %v338 = vsel %vm228, %v333, %v337
      %v339 = vshrl.u32 %v184, 16
      %v341 = vrot.slane %v339, 4
      %v342 = vor.u32 %v341, %v337
      %v343 = vrot.slane %v342, 4
      %v345 = vshll.u32 %v185, 16
      %v347 = vrot.slane %v345, 5
      %v348 = vsel %vm228, %v343, %v347
      %v350 = vshrl.u32 %v186, 16
      %v352 = vrot.slane %v350, 4
      %v353 = vshll.u32 %v186, 16
      %v355 = vrot.slane %v353, 5
      %v356 = vor.u32 %v352, %v355
      %v357 = vrot.slane %v356, 4
      %v359 = vshll.u32 %v187, 16
      %v361 = vrot.slane %v359, 5
      %v362 = vsel %vm228, %v357, %v361
      %v363 = vshrl.u32 %v187, 16
      %v365 = vrot.slane %v363, 4
      %v366 = vor.u32 %v365, %v361
      %v367 = vrot.slane %v366, 4
      %v369 = vshll.u32 %v188, 16
      %v371 = vrot.slane %v369, 5
      %v372 = vsel %vm228, %v367, %v371
      %v374 = vshrl.u32 %v189, 16
      %v376 = vrot.slane %v374, 4
      %v377 = vshll.u32 %v189, 16
      %v379 = vrot.slane %v377, 5
      %v380 = vor.u32 %v376, %v379
      %v381 = vrot.slane %v380, 4
      %v383 = vshll.u32 %v190, 16
      %v385 = vrot.slane %v383, 5
      %v386 = vsel %vm228, %v381, %v385
      %v387 = vshrl.u32 %v190, 16
      %v389 = vrot.slane %v387, 4
      %v390 = vor.u32 %v389, %v385
      %v391 = vrot.slane %v390, 4
      %v393 = vshll.u32 %v191, 16
      %v395 = vrot.slane %v393, 5
      %v396 = vsel %vm228, %v391, %v395
      %v398 = vshrl.u32 %v192, 16
      %v400 = vrot.slane %v398, 4
      %v401 = vshll.u32 %v192, 16
      %v403 = vrot.slane %v401, 5
      %v404 = vor.u32 %v400, %v403
      %v405 = vrot.slane %v404, 4
      %v407 = vshll.u32 %v193, 16
      %v409 = vrot.slane %v407, 5
      %v410 = vsel %vm228, %v405, %v409
      %v411 = vshrl.u32 %v193, 16
      %v413 = vrot.slane %v411, 4
      %v414 = vor.u32 %v413, %v409
      %v415 = vrot.slane %v414, 4
      %v417 = vshll.u32 %v194, 16
      %v419 = vrot.slane %v417, 5
      %v420 = vsel %vm228, %v415, %v419
      %v422 = vshrl.u32 %v195, 16
      %v424 = vrot.slane %v422, 4
      %v425 = vshll.u32 %v195, 16
      %v427 = vrot.slane %v425, 5
      %v428 = vor.u32 %v424, %v427
      %v429 = vrot.slane %v428, 4
      %v431 = vshll.u32 %v196, 16
      %v433 = vrot.slane %v431, 5
      %v434 = vsel %vm228, %v429, %v433
      %v435 = vshrl.u32 %v196, 16
      %v437 = vrot.slane %v435, 4
      %v438 = vor.u32 %v437, %v433
      %v439 = vrot.slane %v438, 4
      %v441 = vshll.u32 %v197, 16
      %v443 = vrot.slane %v441, 5
      %v444 = vsel %vm228, %v439, %v443
      %v446 = vshrl.u32 %v198, 16
      %v448 = vrot.slane %v446, 4
      %v449 = vshll.u32 %v198, 16
      %v451 = vrot.slane %v449, 5
      %v452 = vor.u32 %v448, %v451
      %v453 = vrot.slane %v452, 4
      %v455 = vshll.u32 %v199, 16
      %v457 = vrot.slane %v455, 5
      %v458 = vsel %vm228, %v453, %v457
      %v459 = vshrl.u32 %v199, 16
      %v461 = vrot.slane %v459, 4
      %v462 = vor.u32 %v461, %v457
      %v463 = vrot.slane %v462, 4
      %v465 = vshll.u32 %v200, 16
      %v467 = vrot.slane %v465, 5
      %v468 = vsel %vm228, %v463, %v467
      %v470 = vshrl.u32 %v201, 16
      %v472 = vrot.slane %v470, 4
      %v473 = vshll.u32 %v201, 16
      %v475 = vrot.slane %v473, 5
      %v476 = vor.u32 %v472, %v475
      %v477 = vrot.slane %v476, 4
      %v479 = vshll.u32 %v202, 16
      %v481 = vrot.slane %v479, 5
      %v482 = vsel %vm228, %v477, %v481
      %v483 = vshrl.u32 %v202, 16
      %v485 = vrot.slane %v483, 4
      %v486 = vor.u32 %v485, %v481
      %v487 = vrot.slane %v486, 4
      %v489 = vshll.u32 %v203, 16
      %v491 = vrot.slane %v489, 5
      %v492 = vsel %vm228, %v487, %v491
      %v494 = vshrl.u32 %v204, 16
      %v496 = vrot.slane %v494, 4
      %v497 = vshll.u32 %v204, 16
      %v499 = vrot.slane %v497, 5
      %v500 = vor.u32 %v496, %v499
      %v501 = vrot.slane %v500, 4
      %v503 = vshll.u32 %v205, 16
      %v505 = vrot.slane %v503, 5
      %v506 = vsel %vm228, %v501, %v505
      %v507 = vshrl.u32 %v205, 16
      %v509 = vrot.slane %v507, 4
      %v510 = vor.u32 %v509, %v505
      %v511 = vrot.slane %v510, 4
      %v513 = vshll.u32 %v206, 16
      %v515 = vrot.slane %v513, 5
      %v516 = vsel %vm228, %v511, %v515
      %v518 = vshrl.u32 %v207, 16
      %v520 = vrot.slane %v518, 4
      %v521 = vshll.u32 %v207, 16
      %v523 = vrot.slane %v521, 5
      %v524 = vor.u32 %v520, %v523
      %v525 = vrot.slane %v524, 4
      %v527 = vshll.u32 %v208, 16
      %v529 = vrot.slane %v527, 5
      %v530 = vsel %vm228, %v525, %v529
      %v531 = vshrl.u32 %v208, 16
      %v533 = vrot.slane %v531, 4
      %v534 = vor.u32 %v533, %v529
      %v535 = vrot.slane %v534, 4
      %v537 = vshll.u32 %v209, 16
      %v539 = vrot.slane %v537, 5
      %v540 = vsel %vm228, %v535, %v539
      %v542 = vshrl.u32 %v210, 16
      %v544 = vrot.slane %v542, 4
      %v545 = vshll.u32 %v210, 16
      %v547 = vrot.slane %v545, 5
      %v548 = vor.u32 %v544, %v547
      %v549 = vrot.slane %v548, 4
      %v551 = vshll.u32 %v211, 16
      %v553 = vrot.slane %v551, 5
      %v554 = vsel %vm228, %v549, %v553
      %v555 = vshrl.u32 %v211, 16
      %v557 = vrot.slane %v555, 4
      %v558 = vor.u32 %v557, %v553
      %v559 = vrot.slane %v558, 4
      %v561 = vshll.u32 %v212, 16
      %v563 = vrot.slane %v561, 5
      %v564 = vsel %vm228, %v559, %v563
      %v566 = vshrl.u32 %v213, 16
      %v568 = vrot.slane %v566, 4
      %v569 = vshll.u32 %v213, 16
      %v571 = vrot.slane %v569, 5
      %v572 = vor.u32 %v568, %v571
      %v573 = vrot.slane %v572, 4
      %v575 = vshll.u32 %v214, 16
      %v577 = vrot.slane %v575, 5
      %v578 = vsel %vm228, %v573, %v577
      %v579 = vshrl.u32 %v214, 16
      %v581 = vrot.slane %v579, 4
      %v582 = vor.u32 %v581, %v577
      %v583 = vrot.slane %v582, 4
      %v585 = vshll.u32 %v215, 16
      %v587 = vrot.slane %v585, 5
      %v588 = vsel %vm228, %v583, %v587
      %v590 = vshrl.u32 %v216, 16
      %v592 = vrot.slane %v590, 4
      %v593 = vshll.u32 %v216, 16
      %v595 = vrot.slane %v593, 5
      %v596 = vor.u32 %v592, %v595
      %v597 = vrot.slane %v596, 4
      %v599 = vshll.u32 %v217, 16
      %v601 = vrot.slane %v599, 5
      %v602 = vsel %vm228, %v597, %v601
      %v603 = vshrl.u32 %v217, 16
      %v605 = vrot.slane %v603, 4
      %v606 = vor.u32 %v605, %v601
      %v607 = vrot.slane %v606, 4
      %v609 = vshll.u32 %v218, 16
      %v611 = vrot.slane %v609, 5
      %v612 = vsel %vm228, %v607, %v611
      %s613 = scalar_lea.vmem %s1, 2
      %v614 = vld [vmem:[%s613] sm:$0x3]
      %v615 = vunpack.c.l.b16 %v242
      %v616 = vunpack.c.l.b16 %v252
      %v617 = vunpack.c.l.b16 %v266
      %v618 = vunpack.c.l.b16 %v276
      %v619 = vunpack.c.l.b16 %v290
      %v620 = vunpack.c.l.b16 %v300
      %v621 = vunpack.c.l.b16 %v314
      %v622 = vunpack.c.l.b16 %v324
      %v623 = vunpack.c.l.b16 %v338
      %v624 = vunpack.c.l.b16 %v348
      %v625 = vunpack.c.l.b16 %v362
      %v626 = vunpack.c.l.b16 %v372
      %v627 = vunpack.c.l.b16 %v386
      %v628 = vunpack.c.l.b16 %v396
      %v629 = vunpack.c.l.b16 %v410
      %v630 = vunpack.c.l.b16 %v420
      %v631 = vunpack.c.l.b16 %v434
      %v632 = vunpack.c.l.b16 %v444
      %v633 = vunpack.c.l.b16 %v458
      %v634 = vunpack.c.l.b16 %v468
      %v635 = vunpack.c.l.b16 %v482
      %v636 = vunpack.c.l.b16 %v492
      %v637 = vunpack.c.l.b16 %v506
      %v638 = vunpack.c.l.b16 %v516
      %v639 = vunpack.c.l.b16 %v530
      %v640 = vunpack.c.l.b16 %v540
      %v641 = vunpack.c.l.b16 %v554
      %v642 = vunpack.c.l.b16 %v564
      %v643 = vunpack.c.l.b16 %v578
      %v644 = vunpack.c.l.b16 %v588
      %v645 = vunpack.c.l.b16 %v602
      %v646 = vunpack.c.l.b16 %v612
      %v647 = vpack.c.b16 %v616, %v615
      %v648 = vpack.c.b16 %v618, %v617
      %v649 = vpack.c.b16 %v620, %v619
      %v650 = vpack.c.b16 %v622, %v621
      %v651 = vpack.c.b16 %v624, %v623
      %v652 = vpack.c.b16 %v626, %v625
      %v653 = vpack.c.b16 %v628, %v627
      %v654 = vpack.c.b16 %v630, %v629
      %v655 = vpack.c.b16 %v632, %v631
      %v656 = vpack.c.b16 %v634, %v633
      %v657 = vpack.c.b16 %v636, %v635
      %v658 = vpack.c.b16 %v638, %v637
      %v659 = vpack.c.b16 %v640, %v639
      %v660 = vpack.c.b16 %v642, %v641
      %v661 = vpack.c.b16 %v644, %v643
      %v662 = vpack.c.b16 %v646, %v645
      %vm663 = vcmask 261120
      %v665 = vsel %vm663, %v614, 0
      %v668 = vsel %vm663, %v647, 0
      %v671 = vsel %vm663, %v648, 0
      %v674 = vsel %vm663, %v649, 0
      %v677 = vsel %vm663, %v650, 0
      %v680 = vsel %vm663, %v651, 0
      %v683 = vsel %vm663, %v652, 0
      %v686 = vsel %vm663, %v653, 0
      %v689 = vsel %vm663, %v654, 0
      %v692 = vsel %vm663, %v655, 0
      %v695 = vsel %vm663, %v656, 0
      %v698 = vsel %vm663, %v657, 0
      %v701 = vsel %vm663, %v658, 0
      %v704 = vsel %vm663, %v659, 0
      %v707 = vsel %vm663, %v660, 0
      %v710 = vsel %vm663, %v661, 0
      %v713 = vsel %vm663, %v662, 0
      %715 = vmatpush.bf16.xpose.msra.mxu0 %v689
      %716 = vmatpush.bf16.xpose.msra.mxu0 %v686
      %717 = vmatpush.bf16.xpose.msra.mxu0 %v683
      %718 = vmatpush.bf16.xpose.msra.mxu0 %v680
      %719 = vmatpush.bf16.xpose.msra.mxu0 %v677
      %720 = vmatpush.bf16.xpose.msra.mxu0 %v674
      %721 = vmatpush.bf16.xpose.msra.mxu0 %v671
      %722 = vmatpush.bf16.xpose.msra.mxu0 %v668
      %723 = vmatmul.bf16.gmra.mxu0 %v665
      %v724 = vpop.f32.mrf.mxu0
      %v725 = vadd.f32 0.0, %v724
      %v726 = vpop.f32.mrf.mxu0
      %727 = vdwg.mxu0
      %728 = vmatpush.bf16.xpose.msra.mxu0 %v713
      %729 = vmatpush.bf16.xpose.msra.mxu0 %v710
      %730 = vmatpush.bf16.xpose.msra.mxu0 %v707
      %731 = vmatpush.bf16.xpose.msra.mxu0 %v704
      %732 = vmatpush.bf16.xpose.msra.mxu0 %v701
      %733 = vmatpush.bf16.xpose.msra.mxu0 %v698
      %734 = vmatpush.bf16.xpose.msra.mxu0 %v695
      %735 = vmatpush.bf16.xpose.msra.mxu0 %v692
      %736 = vmatmul.bf16.gmra.mxu0 %v665
      %v737 = vpop.f32.mrf.mxu0
      %v738 = vadd.f32 0.0, %v737
      %v739 = vpop.f32.mrf.mxu0
      %740 = vdwg.mxu0
      %v773 = vunpack.c.l.b16 %v171
      %v774 = vunpack.c.l.b16 %v172
      %v775 = vunpack.c.l.b16 %v174
      %v776 = vunpack.c.l.b16 %v175
      %v777 = vunpack.c.l.b16 %v177
      %v778 = vunpack.c.l.b16 %v178
      %v779 = vunpack.c.l.b16 %v180
      %v780 = vunpack.c.l.b16 %v181
      %v781 = vunpack.c.l.b16 %v183
      %v782 = vunpack.c.l.b16 %v184
      %v783 = vunpack.c.l.b16 %v186
      %v784 = vunpack.c.l.b16 %v187
      %v785 = vunpack.c.l.b16 %v189
      %v786 = vunpack.c.l.b16 %v190
      %v787 = vunpack.c.l.b16 %v192
      %v788 = vunpack.c.l.b16 %v193
      %v789 = vunpack.c.l.b16 %v195
      %v790 = vunpack.c.l.b16 %v196
      %v791 = vunpack.c.l.b16 %v198
      %v792 = vunpack.c.l.b16 %v199
      %v793 = vunpack.c.l.b16 %v201
      %v794 = vunpack.c.l.b16 %v202
      %v795 = vunpack.c.l.b16 %v204
      %v796 = vunpack.c.l.b16 %v205
      %v797 = vunpack.c.l.b16 %v207
      %v798 = vunpack.c.l.b16 %v208
      %v799 = vunpack.c.l.b16 %v210
      %v800 = vunpack.c.l.b16 %v211
      %v801 = vunpack.c.l.b16 %v213
      %v802 = vunpack.c.l.b16 %v214
      %v803 = vunpack.c.l.b16 %v216
      %v804 = vunpack.c.l.b16 %v217
      %v805 = vpack.c.b16 %v774, %v773
      %v806 = vpack.c.b16 %v776, %v775
      %v807 = vpack.c.b16 %v778, %v777
      %v808 = vpack.c.b16 %v780, %v779
      %v809 = vpack.c.b16 %v782, %v781
      %v810 = vpack.c.b16 %v784, %v783
      %v811 = vpack.c.b16 %v786, %v785
      %v812 = vpack.c.b16 %v788, %v787
      %v813 = vpack.c.b16 %v790, %v789
      %v814 = vpack.c.b16 %v792, %v791
      %v815 = vpack.c.b16 %v794, %v793
      %v816 = vpack.c.b16 %v796, %v795
      %v817 = vpack.c.b16 %v798, %v797
      %v818 = vpack.c.b16 %v800, %v799
      %v819 = vpack.c.b16 %v802, %v801
      %v820 = vpack.c.b16 %v804, %v803
      %v822 = vsel %vm663, %v225, 0
      %v825 = vsel %vm663, %v805, 0
      %v828 = vsel %vm663, %v806, 0
      %v831 = vsel %vm663, %v807, 0
      %v834 = vsel %vm663, %v808, 0
      %v837 = vsel %vm663, %v809, 0
      %v840 = vsel %vm663, %v810, 0
      %v843 = vsel %vm663, %v811, 0
      %v846 = vsel %vm663, %v812, 0
      %v849 = vsel %vm663, %v813, 0
      %v852 = vsel %vm663, %v814, 0
      %v855 = vsel %vm663, %v815, 0
      %v858 = vsel %vm663, %v816, 0
      %v861 = vsel %vm663, %v817, 0
      %v864 = vsel %vm663, %v818, 0
      %v867 = vsel %vm663, %v819, 0
      %v870 = vsel %vm663, %v820, 0
      %872 = vmatpush.bf16.xpose.msra.mxu0 %v846
      %873 = vmatpush.bf16.xpose.msra.mxu0 %v843
      %874 = vmatpush.bf16.xpose.msra.mxu0 %v840
      %875 = vmatpush.bf16.xpose.msra.mxu0 %v837
      %876 = vmatpush.bf16.xpose.msra.mxu0 %v834
      %877 = vmatpush.bf16.xpose.msra.mxu0 %v831
      %878 = vmatpush.bf16.xpose.msra.mxu0 %v828
      %879 = vmatpush.bf16.xpose.msra.mxu0 %v825
      %880 = vmatmul.bf16.gmra.mxu0 %v822
      %v881 = vpop.f32.mrf.mxu0
      %v882 = vadd.f32 %v725, %v881
      %v883 = vpop.f32.mrf.mxu0
      %884 = vdwg.mxu0
      %885 = vmatpush.bf16.xpose.msra.mxu0 %v870
      %886 = vmatpush.bf16.xpose.msra.mxu0 %v867
      %887 = vmatpush.bf16.xpose.msra.mxu0 %v864
      %888 = vmatpush.bf16.xpose.msra.mxu0 %v861
      %889 = vmatpush.bf16.xpose.msra.mxu0 %v858
      %890 = vmatpush.bf16.xpose.msra.mxu0 %v855
      %891 = vmatpush.bf16.xpose.msra.mxu0 %v852
      %892 = vmatpush.bf16.xpose.msra.mxu0 %v849
      %893 = vmatmul.bf16.gmra.mxu0 %v822
      %v894 = vpop.f32.mrf.mxu0
      %v895 = vadd.f32 %v738, %v894
      %v896 = vpop.f32.mrf.mxu0
      %897 = vdwg.mxu0
      %vm914 = vcmask 1042432
      %vm915 = vcmask 1046532
      %vm916 = vmor %vm914, %vm915
      %v917 = vrot.slane %v171, 5
      %v918 = vrot.slane %v917, 4
      %v919 = vrot.slane %v172, 5
      %v920 = vsel %vm916, %v918, %v919
      %v921 = vrot.slane %v919, 4
      %v922 = vrot.slane %v173, 5
      %v923 = vsel %vm916, %v921, %v922
      %v924 = vrot.slane %v174, 5
      %v925 = vrot.slane %v924, 4
      %v926 = vrot.slane %v175, 5
      %v927 = vsel %vm916, %v925, %v926
      %v928 = vrot.slane %v926, 4
      %v929 = vrot.slane %v176, 5
      %v930 = vsel %vm916, %v928, %v929
      %v931 = vrot.slane %v177, 5
      %v932 = vrot.slane %v931, 4
      %v933 = vrot.slane %v178, 5
      %v934 = vsel %vm916, %v932, %v933
      %v935 = vrot.slane %v933, 4
      %v936 = vrot.slane %v179, 5
      %v937 = vsel %vm916, %v935, %v936
      %v938 = vrot.slane %v180, 5
      %v939 = vrot.slane %v938, 4
      %v940 = vrot.slane %v181, 5
      %v941 = vsel %vm916, %v939, %v940
      %v942 = vrot.slane %v940, 4
      %v943 = vrot.slane %v182, 5
      %v944 = vsel %vm916, %v942, %v943
      %v945 = vrot.slane %v183, 5
      %v946 = vrot.slane %v945, 4
      %v947 = vrot.slane %v184, 5
      %v948 = vsel %vm916, %v946, %v947
      %v949 = vrot.slane %v947, 4
      %v950 = vrot.slane %v185, 5
      %v951 = vsel %vm916, %v949, %v950
      %v952 = vrot.slane %v186, 5
      %v953 = vrot.slane %v952, 4
      %v954 = vrot.slane %v187, 5
      %v955 = vsel %vm916, %v953, %v954
      %v956 = vrot.slane %v954, 4
      %v957 = vrot.slane %v188, 5
      %v958 = vsel %vm916, %v956, %v957
      %v959 = vrot.slane %v189, 5
      %v960 = vrot.slane %v959, 4
      %v961 = vrot.slane %v190, 5
      %v962 = vsel %vm916, %v960, %v961
      %v963 = vrot.slane %v961, 4
      %v964 = vrot.slane %v191, 5
      %v965 = vsel %vm916, %v963, %v964
      %v966 = vrot.slane %v192, 5
      %v967 = vrot.slane %v966, 4
      %v968 = vrot.slane %v193, 5
      %v969 = vsel %vm916, %v967, %v968
      %v970 = vrot.slane %v968, 4
      %v971 = vrot.slane %v194, 5
      %v972 = vsel %vm916, %v970, %v971
      %v973 = vrot.slane %v195, 5
      %v974 = vrot.slane %v973, 4
      %v975 = vrot.slane %v196, 5
      %v976 = vsel %vm916, %v974, %v975
      %v977 = vrot.slane %v975, 4
      %v978 = vrot.slane %v197, 5
      %v979 = vsel %vm916, %v977, %v978
      %v980 = vrot.slane %v198, 5
      %v981 = vrot.slane %v980, 4
      %v982 = vrot.slane %v199, 5
      %v983 = vsel %vm916, %v981, %v982
      %v984 = vrot.slane %v982, 4
      %v985 = vrot.slane %v200, 5
      %v986 = vsel %vm916, %v984, %v985
      %v987 = vrot.slane %v201, 5
      %v988 = vrot.slane %v987, 4
      %v989 = vrot.slane %v202, 5
      %v990 = vsel %vm916, %v988, %v989
      %v991 = vrot.slane %v989, 4
      %v992 = vrot.slane %v203, 5
      %v993 = vsel %vm916, %v991, %v992
      %v994 = vrot.slane %v204, 5
      %v995 = vrot.slane %v994, 4
      %v996 = vrot.slane %v205, 5
      %v997 = vsel %vm916, %v995, %v996
      %v998 = vrot.slane %v996, 4
      %v999 = vrot.slane %v206, 5
      %v1000 = vsel %vm916, %v998, %v999
      %v1001 = vrot.slane %v207, 5
      %v1002 = vrot.slane %v1001, 4
      %v1003 = vrot.slane %v208, 5
      %v1004 = vsel %vm916, %v1002, %v1003
      %v1005 = vrot.slane %v1003, 4
      %v1006 = vrot.slane %v209, 5
      %v1007 = vsel %vm916, %v1005, %v1006
      %v1008 = vrot.slane %v210, 5
      %v1009 = vrot.slane %v1008, 4
      %v1010 = vrot.slane %v211, 5
      %v1011 = vsel %vm916, %v1009, %v1010
      %v1012 = vrot.slane %v1010, 4
      %v1013 = vrot.slane %v212, 5
      %v1014 = vsel %vm916, %v1012, %v1013
      %v1015 = vrot.slane %v213, 5
      %v1016 = vrot.slane %v1015, 4
      %v1017 = vrot.slane %v214, 5
      %v1018 = vsel %vm916, %v1016, %v1017
      %v1019 = vrot.slane %v1017, 4
      %v1020 = vrot.slane %v215, 5
      %v1021 = vsel %vm916, %v1019, %v1020
      %v1022 = vrot.slane %v216, 5
      %v1023 = vrot.slane %v1022, 4
      %v1024 = vrot.slane %v217, 5
      %v1025 = vsel %vm916, %v1023, %v1024
      %v1026 = vrot.slane %v1024, 4
      %v1027 = vrot.slane %v218, 5
      %v1028 = vsel %vm916, %v1026, %v1027
      %s1029 = scalar_lea.vmem %s1, 4
      %v1030 = vld [vmem:[%s1029] sm:$0x3]
      %v1031 = vunpack.c.l.b16 %v920
      %v1032 = vunpack.c.l.b16 %v923
      %v1033 = vunpack.c.l.b16 %v927
      %v1034 = vunpack.c.l.b16 %v930
      %v1035 = vunpack.c.l.b16 %v934
      %v1036 = vunpack.c.l.b16 %v937
      %v1037 = vunpack.c.l.b16 %v941
      %v1038 = vunpack.c.l.b16 %v944
      %v1039 = vunpack.c.l.b16 %v948
      %v1040 = vunpack.c.l.b16 %v951
      %v1041 = vunpack.c.l.b16 %v955
      %v1042 = vunpack.c.l.b16 %v958
      %v1043 = vunpack.c.l.b16 %v962
      %v1044 = vunpack.c.l.b16 %v965
      %v1045 = vunpack.c.l.b16 %v969
      %v1046 = vunpack.c.l.b16 %v972
      %v1047 = vunpack.c.l.b16 %v976
      %v1048 = vunpack.c.l.b16 %v979
      %v1049 = vunpack.c.l.b16 %v983
      %v1050 = vunpack.c.l.b16 %v986
      %v1051 = vunpack.c.l.b16 %v990
      %v1052 = vunpack.c.l.b16 %v993
      %v1053 = vunpack.c.l.b16 %v997
      %v1054 = vunpack.c.l.b16 %v1000
      %v1055 = vunpack.c.l.b16 %v1004
      %v1056 = vunpack.c.l.b16 %v1007
      %v1057 = vunpack.c.l.b16 %v1011
      %v1058 = vunpack.c.l.b16 %v1014
      %v1059 = vunpack.c.l.b16 %v1018
      %v1060 = vunpack.c.l.b16 %v1021
      %v1061 = vunpack.c.l.b16 %v1025
      %v1062 = vunpack.c.l.b16 %v1028
      %v1063 = vpack.c.b16 %v1032, %v1031
      %v1064 = vpack.c.b16 %v1034, %v1033
      %v1065 = vpack.c.b16 %v1036, %v1035
      %v1066 = vpack.c.b16 %v1038, %v1037
      %v1067 = vpack.c.b16 %v1040, %v1039
      %v1068 = vpack.c.b16 %v1042, %v1041
      %v1069 = vpack.c.b16 %v1044, %v1043
      %v1070 = vpack.c.b16 %v1046, %v1045
      %v1071 = vpack.c.b16 %v1048, %v1047
      %v1072 = vpack.c.b16 %v1050, %v1049
      %v1073 = vpack.c.b16 %v1052, %v1051
      %v1074 = vpack.c.b16 %v1054, %v1053
      %v1075 = vpack.c.b16 %v1056, %v1055
      %v1076 = vpack.c.b16 %v1058, %v1057
      %v1077 = vpack.c.b16 %v1060, %v1059
      %v1078 = vpack.c.b16 %v1062, %v1061
      %v1080 = vsel %vm663, %v1030, 0
      %v1083 = vsel %vm663, %v1063, 0
      %v1086 = vsel %vm663, %v1064, 0
      %v1089 = vsel %vm663, %v1065, 0
      %v1092 = vsel %vm663, %v1066, 0
      %v1095 = vsel %vm663, %v1067, 0
      %v1098 = vsel %vm663, %v1068, 0
      %v1101 = vsel %vm663, %v1069, 0
      %v1104 = vsel %vm663, %v1070, 0
      %v1107 = vsel %vm663, %v1071, 0
      %v1110 = vsel %vm663, %v1072, 0
      %v1113 = vsel %vm663, %v1073, 0
      %v1116 = vsel %vm663, %v1074, 0
      %v1119 = vsel %vm663, %v1075, 0
      %v1122 = vsel %vm663, %v1076, 0
      %v1125 = vsel %vm663, %v1077, 0
      %v1128 = vsel %vm663, %v1078, 0
      %1130 = vmatpush.bf16.xpose.msra.mxu0 %v1104
      %1131 = vmatpush.bf16.xpose.msra.mxu0 %v1101
      %1132 = vmatpush.bf16.xpose.msra.mxu0 %v1098
      %1133 = vmatpush.bf16.xpose.msra.mxu0 %v1095
      %1134 = vmatpush.bf16.xpose.msra.mxu0 %v1092
      %1135 = vmatpush.bf16.xpose.msra.mxu0 %v1089
      %1136 = vmatpush.bf16.xpose.msra.mxu0 %v1086
      %1137 = vmatpush.bf16.xpose.msra.mxu0 %v1083
      %1138 = vmatmul.bf16.gmra.mxu0 %v1080
      %v1139 = vpop.f32.mrf.mxu0
      %v1140 = vadd.f32 0.0, %v1139
      %v1141 = vpop.f32.mrf.mxu0
      %1142 = vdwg.mxu0
      %1143 = vmatpush.bf16.xpose.msra.mxu0 %v1128
      %1144 = vmatpush.bf16.xpose.msra.mxu0 %v1125
      %1145 = vmatpush.bf16.xpose.msra.mxu0 %v1122
      %1146 = vmatpush.bf16.xpose.msra.mxu0 %v1119
      %1147 = vmatpush.bf16.xpose.msra.mxu0 %v1116
      %1148 = vmatpush.bf16.xpose.msra.mxu0 %v1113
      %1149 = vmatpush.bf16.xpose.msra.mxu0 %v1110
      %1150 = vmatpush.bf16.xpose.msra.mxu0 %v1107
      %1151 = vmatmul.bf16.gmra.mxu0 %v1080
      %v1152 = vpop.f32.mrf.mxu0
      %v1153 = vadd.f32 0.0, %v1152
      %v1154 = vpop.f32.mrf.mxu0
      %1155 = vdwg.mxu0
      %v1156 = vadd.f32 %v882, %v1140
      %v1157 = vadd.f32 %v895, %v1153
      %s1158 = scalar_lea.vmem %s1, 6
      %v1159 = vld [vmem:[%s1158] sm:$0x3]
      %v1162 = vunpack.c.l.b16 %v219
      %v1163 = vunpack.c.l.b16 %v220
      %v1164 = vpack.c.b16 %v1163, %v1162
      %v1166 = vsel %vm663, %v1159, 0
      %v1169 = vsel %vm663, %v1164, 0
      %1171 = vmatpush.bf16.xpose.msra.mxu0 %v849
      %1172 = vmatpush.bf16.xpose.msra.mxu0 %v846
      %1173 = vmatpush.bf16.xpose.msra.mxu0 %v843
      %1174 = vmatpush.bf16.xpose.msra.mxu0 %v840
      %1175 = vmatpush.bf16.xpose.msra.mxu0 %v837
      %1176 = vmatpush.bf16.xpose.msra.mxu0 %v834
      %1177 = vmatpush.bf16.xpose.msra.mxu0 %v831
      %1178 = vmatpush.bf16.xpose.msra.mxu0 %v828
      %1179 = vmatmul.bf16.gmra.mxu0 %v1166
      %v1180 = vpop.f32.mrf.mxu0
      %v1181 = vadd.f32 0.0, %v1180
      %v1182 = vpop.f32.mrf.mxu0
      %1183 = vdwg.mxu0
      %1184 = vmatpush.bf16.xpose.msra.mxu0 %v1169
      %1185 = vmatpush.bf16.xpose.msra.mxu0 %v870
      %1186 = vmatpush.bf16.xpose.msra.mxu0 %v867
      %1187 = vmatpush.bf16.xpose.msra.mxu0 %v864
      %1188 = vmatpush.bf16.xpose.msra.mxu0 %v861
      %1189 = vmatpush.bf16.xpose.msra.mxu0 %v858
      %1190 = vmatpush.bf16.xpose.msra.mxu0 %v855
      %1191 = vmatpush.bf16.xpose.msra.mxu0 %v852
      %1192 = vmatmul.bf16.gmra.mxu0 %v1166
      %v1193 = vpop.f32.mrf.mxu0
      %v1194 = vadd.f32 0.0, %v1193
      %v1195 = vpop.f32.mrf.mxu0
      %1196 = vdwg.mxu0
      %v1197 = vadd.f32 %v1156, %v1181
      %v1198 = vadd.f32 %v1157, %v1194
      %v1200 = vshrl.u32 %v219, 16
      %v1202 = vrot.slane %v1200, 4
      %v1203 = vshll.u32 %v219, 16
      %v1205 = vrot.slane %v1203, 5
      %v1206 = vor.u32 %v1202, %v1205
      %v1207 = vrot.slane %v1206, 4
      %v1209 = vshll.u32 %v220, 16
      %v1211 = vrot.slane %v1209, 5
      %v1212 = vsel %vm228, %v1207, %v1211
      %v1213 = vshrl.u32 %v220, 16
      %v1215 = vrot.slane %v1213, 4
      %v1216 = vor.u32 %v1215, %v1211
      %v1217 = vrot.slane %v1216, 4
      %v1219 = vshll.u32 %v221, 16
      %v1221 = vrot.slane %v1219, 5
      %v1222 = vsel %vm228, %v1217, %v1221
      %s1223 = scalar_lea.vmem %s1, 8
      %v1224 = vld [vmem:[%s1223] sm:$0x3]
      %v1225 = vunpack.c.l.b16 %v1212
      %v1226 = vunpack.c.l.b16 %v1222
      %v1227 = vpack.c.b16 %v1226, %v1225
      %v1229 = vsel %vm663, %v1224, 0
      %v1232 = vsel %vm663, %v1227, 0
      %1234 = vmatpush.bf16.xpose.msra.mxu0 %v692
      %1235 = vmatpush.bf16.xpose.msra.mxu0 %v689
      %1236 = vmatpush.bf16.xpose.msra.mxu0 %v686
      %1237 = vmatpush.bf16.xpose.msra.mxu0 %v683
      %1238 = vmatpush.bf16.xpose.msra.mxu0 %v680
      %1239 = vmatpush.bf16.xpose.msra.mxu0 %v677
      %1240 = vmatpush.bf16.xpose.msra.mxu0 %v674
      %1241 = vmatpush.bf16.xpose.msra.mxu0 %v671
      %1242 = vmatmul.bf16.gmra.mxu0 %v1229
      %v1243 = vpop.f32.mrf.mxu0
      %v1244 = vadd.f32 0.0, %v1243
      %v1245 = vpop.f32.mrf.mxu0
      %1246 = vdwg.mxu0
      %1247 = vmatpush.bf16.xpose.msra.mxu0 %v1232
      %1248 = vmatpush.bf16.xpose.msra.mxu0 %v713
      %1249 = vmatpush.bf16.xpose.msra.mxu0 %v710
      %1250 = vmatpush.bf16.xpose.msra.mxu0 %v707
      %1251 = vmatpush.bf16.xpose.msra.mxu0 %v704
      %1252 = vmatpush.bf16.xpose.msra.mxu0 %v701
      %1253 = vmatpush.bf16.xpose.msra.mxu0 %v698
      %1254 = vmatpush.bf16.xpose.msra.mxu0 %v695
      %1255 = vmatmul.bf16.gmra.mxu0 %v1229
      %v1256 = vpop.f32.mrf.mxu0
      %v1257 = vadd.f32 0.0, %v1256
      %v1258 = vpop.f32.mrf.mxu0
      %1259 = vdwg.mxu0
      %v1260 = vadd.f32 %v1197, %v1244
      %v1261 = vadd.f32 %v1198, %v1257
      %v1263 = vrot.slane %v219, 5
      %v1264 = vrot.slane %v1263, 4
      %v1265 = vrot.slane %v220, 5
      %v1266 = vsel %vm916, %v1264, %v1265
      %v1267 = vrot.slane %v1265, 4
      %v1268 = vrot.slane %v221, 5
      %v1269 = vsel %vm916, %v1267, %v1268
      %s1270 = scalar_lea.vmem %s1, 10
      %v1271 = vld [vmem:[%s1270] sm:$0x3]
      %v1272 = vunpack.c.l.b16 %v1266
      %v1273 = vunpack.c.l.b16 %v1269
      %v1274 = vpack.c.b16 %v1273, %v1272
      %v1276 = vsel %vm663, %v1271, 0
      %v1279 = vsel %vm663, %v1274, 0
      %1281 = vmatpush.bf16.xpose.msra.mxu0 %v1107
      %1282 = vmatpush.bf16.xpose.msra.mxu0 %v1104
      %1283 = vmatpush.bf16.xpose.msra.mxu0 %v1101
      %1284 = vmatpush.bf16.xpose.msra.mxu0 %v1098
      %1285 = vmatpush.bf16.xpose.msra.mxu0 %v1095
      %1286 = vmatpush.bf16.xpose.msra.mxu0 %v1092
      %1287 = vmatpush.bf16.xpose.msra.mxu0 %v1089
      %1288 = vmatpush.bf16.xpose.msra.mxu0 %v1086
      %1289 = vmatmul.bf16.gmra.mxu0 %v1276
      %v1290 = vpop.f32.mrf.mxu0
      %v1291 = vadd.f32 0.0, %v1290
      %v1292 = vpop.f32.mrf.mxu0
      %1293 = vdwg.mxu0
      %1294 = vmatpush.bf16.xpose.msra.mxu0 %v1279
      %1295 = vmatpush.bf16.xpose.msra.mxu0 %v1128
      %1296 = vmatpush.bf16.xpose.msra.mxu0 %v1125
      %1297 = vmatpush.bf16.xpose.msra.mxu0 %v1122
      %1298 = vmatpush.bf16.xpose.msra.mxu0 %v1119
      %1299 = vmatpush.bf16.xpose.msra.mxu0 %v1116
      %1300 = vmatpush.bf16.xpose.msra.mxu0 %v1113
      %1301 = vmatpush.bf16.xpose.msra.mxu0 %v1110
      %1302 = vmatmul.bf16.gmra.mxu0 %v1276
      %v1303 = vpop.f32.mrf.mxu0
      %v1304 = vadd.f32 0.0, %v1303
      %v1305 = vpop.f32.mrf.mxu0
      %1306 = vdwg.mxu0
      %v1307 = vadd.f32 %v1260, %v1291
      %v1308 = vadd.f32 %v1261, %v1304
      %s1309 = scalar_lea.vmem %s1, 12
      %v1310 = vld [vmem:[%s1309] sm:$0x3]
      %v1313 = vunpack.c.l.b16 %v222
      %v1314 = vunpack.c.l.b16 %v223
      %v1315 = vpack.c.b16 %v1314, %v1313
      %v1317 = vsel %vm663, %v1310, 0
      %v1320 = vsel %vm663, %v1315, 0
      %1322 = vmatpush.bf16.xpose.msra.mxu0 %v852
      %1323 = vmatpush.bf16.xpose.msra.mxu0 %v849
      %1324 = vmatpush.bf16.xpose.msra.mxu0 %v846
      %1325 = vmatpush.bf16.xpose.msra.mxu0 %v843
      %1326 = vmatpush.bf16.xpose.msra.mxu0 %v840
      %1327 = vmatpush.bf16.xpose.msra.mxu0 %v837
      %1328 = vmatpush.bf16.xpose.msra.mxu0 %v834
      %1329 = vmatpush.bf16.xpose.msra.mxu0 %v831
      %1330 = vmatmul.bf16.gmra.mxu0 %v1317
      %v1331 = vpop.f32.mrf.mxu0
      %v1332 = vadd.f32 0.0, %v1331
      %v1333 = vpop.f32.mrf.mxu0
      %1334 = vdwg.mxu0
      %1335 = vmatpush.bf16.xpose.msra.mxu0 %v1320
      %1336 = vmatpush.bf16.xpose.msra.mxu0 %v1169
      %1337 = vmatpush.bf16.xpose.msra.mxu0 %v870
      %1338 = vmatpush.bf16.xpose.msra.mxu0 %v867
      %1339 = vmatpush.bf16.xpose.msra.mxu0 %v864
      %1340 = vmatpush.bf16.xpose.msra.mxu0 %v861
      %1341 = vmatpush.bf16.xpose.msra.mxu0 %v858
      %1342 = vmatpush.bf16.xpose.msra.mxu0 %v855
      %1343 = vmatmul.bf16.gmra.mxu0 %v1317
      %v1344 = vpop.f32.mrf.mxu0
      %v1345 = vadd.f32 0.0, %v1344
      %v1346 = vpop.f32.mrf.mxu0
      %1347 = vdwg.mxu0
      %v1348 = vadd.f32 %v1307, %v1332
      %v1349 = vadd.f32 %v1308, %v1345
      %v1351 = vshrl.u32 %v222, 16
      %v1353 = vrot.slane %v1351, 4
      %v1354 = vshll.u32 %v222, 16
      %v1356 = vrot.slane %v1354, 5
      %v1357 = vor.u32 %v1353, %v1356
      %v1358 = vrot.slane %v1357, 4
      %v1360 = vshll.u32 %v223, 16
      %v1362 = vrot.slane %v1360, 5
      %v1363 = vsel %vm228, %v1358, %v1362
      %v1364 = vshrl.u32 %v223, 16
      %v1366 = vrot.slane %v1364, 4
      %v1367 = vor.u32 %v1366, %v1362
      %v1368 = vrot.slane %v1367, 4
      %v1370 = vshll.u32 %v224, 16
      %v1372 = vrot.slane %v1370, 5
      %v1373 = vsel %vm228, %v1368, %v1372
      %s1374 = scalar_lea.vmem %s1, 14
      %v1375 = vld [vmem:[%s1374] sm:$0x3]
      %v1376 = vunpack.c.l.b16 %v1363
      %v1377 = vunpack.c.l.b16 %v1373
      %v1378 = vpack.c.b16 %v1377, %v1376
      %v1380 = vsel %vm663, %v1375, 0
      %v1383 = vsel %vm663, %v1378, 0
      %1385 = vmatpush.bf16.xpose.msra.mxu0 %v695
      %1386 = vmatpush.bf16.xpose.msra.mxu0 %v692
      %1387 = vmatpush.bf16.xpose.msra.mxu0 %v689
      %1388 = vmatpush.bf16.xpose.msra.mxu0 %v686
      %1389 = vmatpush.bf16.xpose.msra.mxu0 %v683
      %1390 = vmatpush.bf16.xpose.msra.mxu0 %v680
      %1391 = vmatpush.bf16.xpose.msra.mxu0 %v677
      %1392 = vmatpush.bf16.xpose.msra.mxu0 %v674
      %1393 = vmatmul.bf16.gmra.mxu0 %v1380
      %v1394 = vpop.f32.mrf.mxu0
      %v1395 = vadd.f32 0.0, %v1394
      %v1396 = vpop.f32.mrf.mxu0
      %1397 = vdwg.mxu0
      %1398 = vmatpush.bf16.xpose.msra.mxu0 %v1383
      %1399 = vmatpush.bf16.xpose.msra.mxu0 %v1232
      %1400 = vmatpush.bf16.xpose.msra.mxu0 %v713
      %1401 = vmatpush.bf16.xpose.msra.mxu0 %v710
      %1402 = vmatpush.bf16.xpose.msra.mxu0 %v707
      %1403 = vmatpush.bf16.xpose.msra.mxu0 %v704
      %1404 = vmatpush.bf16.xpose.msra.mxu0 %v701
      %1405 = vmatpush.bf16.xpose.msra.mxu0 %v698
      %1406 = vmatmul.bf16.gmra.mxu0 %v1380
      %v1407 = vpop.f32.mrf.mxu0
      %v1408 = vadd.f32 0.0, %v1407
      %v1409 = vpop.f32.mrf.mxu0
      %1410 = vdwg.mxu0
      %v1411 = vadd.f32 %v1348, %v1395
      %v1412 = vadd.f32 %v1349, %v1408
      %v1414 = vrot.slane %v222, 5
      %v1415 = vrot.slane %v1414, 4
      %v1416 = vrot.slane %v223, 5
      %v1417 = vsel %vm916, %v1415, %v1416
      %v1418 = vrot.slane %v1416, 4
      %v1419 = vrot.slane %v224, 5
      %v1420 = vsel %vm916, %v1418, %v1419
      %s1421 = scalar_lea.vmem %s1, 16
      %v1422 = vld [vmem:[%s1421] sm:$0x3]
      %v1423 = vunpack.c.l.b16 %v1417
      %v1424 = vunpack.c.l.b16 %v1420
      %v1425 = vpack.c.b16 %v1424, %v1423
      %v1427 = vsel %vm663, %v1422, 0
      %v1430 = vsel %vm663, %v1425, 0
      %1432 = vmatpush.bf16.xpose.msra.mxu0 %v1110
      %1433 = vmatpush.bf16.xpose.msra.mxu0 %v1107
      %1434 = vmatpush.bf16.xpose.msra.mxu0 %v1104
      %1435 = vmatpush.bf16.xpose.msra.mxu0 %v1101
      %1436 = vmatpush.bf16.xpose.msra.mxu0 %v1098
      %1437 = vmatpush.bf16.xpose.msra.mxu0 %v1095
      %1438 = vmatpush.bf16.xpose.msra.mxu0 %v1092
      %1439 = vmatpush.bf16.xpose.msra.mxu0 %v1089
      %1440 = vmatmul.bf16.gmra.mxu0 %v1427
      %v1441 = vpop.f32.mrf.mxu0
      %v1442 = vadd.f32 0.0, %v1441
      %v1443 = vpop.f32.mrf.mxu0
      %1444 = vdwg.mxu0
      %1445 = vmatpush.bf16.xpose.msra.mxu0 %v1430
      %1446 = vmatpush.bf16.xpose.msra.mxu0 %v1279
      %1447 = vmatpush.bf16.xpose.msra.mxu0 %v1128
      %1448 = vmatpush.bf16.xpose.msra.mxu0 %v1125
      %1449 = vmatpush.bf16.xpose.msra.mxu0 %v1122
      %1450 = vmatpush.bf16.xpose.msra.mxu0 %v1119
      %1451 = vmatpush.bf16.xpose.msra.mxu0 %v1116
      %1452 = vmatpush.bf16.xpose.msra.mxu0 %v1113
      %1453 = vmatmul.bf16.gmra.mxu0 %v1427
      %v1454 = vpop.f32.mrf.mxu0
      %v1455 = vadd.f32 0.0, %v1454
      %v1456 = vpop.f32.mrf.mxu0
      %1457 = vdwg.mxu0
      %v1458 = vadd.f32 %v1411, %v1442
      %v1459 = vadd.f32 %v1412, %v1455
      %v1460 = vld [vmem:[%s2] sm:$0x7]
      %1462 = vset.pattern.permute.xlu0 0
      %1463 = vperm.xlu0 %1462, %v1460
      %v1464 = vpop.permute.xlu0 %1463
      %v1466 = vadd.f32 %v1458, %v1464
      %v1467 = vadd.f32 %v1459, %v1464
      %v1470 = vrot.slane %v1467, 4
      %vm1471 = vcmask 1043456
      %v1472 = vsel %vm1471, %v1466, %v1470
      %1474 = vst [vmem:[%s170] sm:$0x77] %v1472
      %p1475 = scmp.lt.s32.totalorder %s14, 1
      %s1476 = scalar_select %p1475, %s14, 1
      %s1477 = smul.addr %s1476, 2
      %s1478 = smul.addr %s1477, 4
      %s1479 = scalar_lea.vmem %s3, %s1478
      // Predicated region
      $region33: #{video_style_transfer_forward.7} parent=31 // pred_check
        %p1480 = pneg %p100
      $region34: #{video_style_transfer_forward.7} parent=31 // pred_check_branch
        %1482 = sbr.rel (%p1480) target = $region36
      $region35: #{video_style_transfer_forward.7} parent=31 // pred_region
        _
      $region36: #{video_style_transfer_forward.7} parent=31 // pred_fallthru
        _
    $region32: #{video_style_transfer_forward.7} parent=5 // pred_fallthru
      _
    %p1483 = scmp.le.s32.totalorder 2, %s9
    // Predicated region
    $region37: #{video_style_transfer_forward.7} parent=5 // pred_check
      %p1484 = pneg %p1483
    $region38: #{video_style_transfer_forward.7} parent=5 // pred_check_branch
      %1486 = sbr.rel (%p1484) target = $region40
    $region39: #{video_style_transfer_forward.7} parent=5 // pred_region
      %s1487 = ssub.s32 %s9, 2
      // Predicated region
      $region41: #{video_style_transfer_forward.7} parent=39 // pred_check
        %p1488 = pneg %p106
      $region42: #{video_style_transfer_forward.7} parent=39 // pred_check_branch
        %1490 = sbr.rel (%p1488) target = $region44
      $region43: #{video_style_transfer_forward.7} parent=39 // pred_region
        %p1491 = scmp.lt.s32.totalorder %s15, 1
        %s1492 = scalar_select %p1491, %s15, 1
        %s1493 = smul.addr %s1492, 2
        %s1494 = smul.addr %s1493, 4
        %s1495 = scalar_lea.vmem %s3, %s1494
      $region44: #{video_style_transfer_forward.7} parent=39 // pred_fallthru
        _
    $region40: #{video_style_transfer_forward.7} parent=5 // pred_fallthru
      _
  $region6: #{video_style_transfer_forward.7} parent=0 // loop_footer
    %s13 = sadd.s32 1, %s9
  $region7: #{video_style_transfer_forward.7} parent=0 // loop_footer_branch
    %8 = sbr.rel target = $region3
  $region8: #{video_style_transfer_forward.7} parent=0 // loop_exit
    _

</llo_original>
